<compile_context>
chip_gen: v6e
topology: v6e:2x2x1
jax: 0.10.0
libtpu: 0.0.40
codegen_flags: <defaults>
</compile_context>

<pallas_src>
import jax
import jax.numpy as jnp
from jax.experimental import pallas as pl
from jax.experimental.pallas import tpu as pltpu


def _mul_conv1x1_kernel(x_ref, s_ref, w_ref, o_ref):
    # x_ref: [Cin, HW]      f32   (activation, natural NCHW view)
    # s_ref: [Cin, 1]       f32   (per-channel scale, lane-broadcast)
    # w_ref: [Cout_blk,Cin] bf16  (conv weight, natural [Cout, Cin] layout)
    # o_ref: [Cout_blk, HW] f32
    xs = (x_ref[...] * s_ref[...]).astype(jnp.bfloat16)
    o_ref[...] = jnp.dot(
        w_ref[...], xs, preferred_element_type=jnp.float32
    ).astype(o_ref.dtype)


def prepare_conv_weight(weight_oi):
    """One-time model-init prep: Conv2d weight [Cout, Cin] (or [Cout, Cin, 1, 1]) -> bf16.

    Do this once when loading the model so the per-call path carries no extra
    cast/transpose traffic. Precision note: operands are rounded to bf16 for the
    MXU; the 2304-deep reduction is accumulated in f32.
    """
    w = weight_oi.reshape(weight_oi.shape[0], -1)
    return w.astype(jnp.bfloat16)


def mul_conv1x1(x_nchw, scale_nc11, w_bf16, *, cout_blocks=1):
    """x_nchw: [1, Cin, H, W] f32, scale_nc11: [1, Cin, 1, 1] f32, w_bf16: [Cout, Cin] bf16.

    cout_blocks: explicit per-target config (keep 1 on v5e/v6e; >1 only if a
    verified 2-TensorCore split on v7x is worth the extra grid steps / duplicated X DMA).
    """
    n, cin, h, w = x_nchw.shape
    cout = w_bf16.shape[0]
    assert n == 1 and w_bf16.shape[1] == cin
    hw = h * w

    assert cout % cout_blocks == 0
    cout_blk = cout // cout_blocks
    if cout_blocks > 1:
        assert cout_blk % 8 == 0, "Cout block must be sublane-aligned"

    # Pure views, no data movement.
    x_mat = x_nchw.reshape(cin, hw)      # [Cin, HW]
    s_mat = scale_nc11.reshape(cin, 1)   # [Cin, 1]

    flops = 2 * hw * cin * cout
    bytes_accessed = (x_mat.size * 4 + s_mat.size * 4
                      + w_bf16.size * 2 + hw * cout * 4)

    out = pl.pallas_call(
        _mul_conv1x1_kernel,
        out_shape=jax.ShapeDtypeStruct((cout, hw), x_nchw.dtype),
        grid=(cout_blocks,),
        in_specs=[
            pl.BlockSpec((cin, hw), lambda j: (0, 0)),        # X (resident)
            pl.BlockSpec((cin, 1), lambda j: (0, 0)),         # scale column (resident)
            pl.BlockSpec((cout_blk, cin), lambda j: (j, 0)),  # W tile
        ],
        out_specs=pl.BlockSpec((cout_blk, hw), lambda j: (j, 0)),
        compiler_params=pltpu.CompilerParams(
            dimension_semantics=("parallel",)),
        cost_estimate=pl.CostEstimate(
            flops=flops, transcendentals=0, bytes_accessed=bytes_accessed),
    )(x_mat, s_mat, w_bf16)

    # [Cout, HW] -> [1, Cout, H, W] is a pure view.
    return out.reshape(1, cout, h, w)


if __name__ == "__main__":
    # Shapes implied by the module: x641 [1,2304,7,7], x646 [1,2304,1,1],
    # Conv2d(2304 -> 384, 1x1, no bias).
    CIN, COUT, H, W = 2304, 384, 7, 7

    key = jax.random.PRNGKey(0)
    k1, k2, k3 = jax.random.split(key, 3)
    x641 = jax.random.normal(k1, (1, CIN, H, W), dtype=jnp.float32)
    x646 = jax.random.normal(k2, (1, CIN, 1, 1), dtype=jnp.float32)
    weight = (jax.random.normal(k3, (COUT, CIN), dtype=jnp.float32)
              * (1.0 / jnp.sqrt(CIN)))

    # One-time model-init prep (hoisted out of the per-call path).
    w_bf16 = jax.block_until_ready(prepare_conv_weight(weight))

    fwd = jax.jit(mul_conv1x1, static_argnames=("cout_blocks",))
    out = jax.block_until_ready(fwd(x641, x646, w_bf16))
    assert out.shape == (1, COUT, H, W)

    # Reference 1: same bf16 operand rounding the kernel applies (f32 accumulation) -> tight.
    xs = x646 * x641
    xs_bf = xs.astype(jnp.bfloat16).astype(jnp.float32)
    w_bf = weight.astype(jnp.bfloat16).astype(jnp.float32)
    ref_bf = jnp.einsum("oc,nchw->nohw", w_bf, xs_bf)
    assert jnp.allclose(out, ref_bf, atol=5e-3, rtol=5e-3), "mismatch vs bf16-rounded reference"

    # Reference 2: full-f32 PyTorch-equivalent conv -> loose (bf16 operand rounding only).
    ref_f32 = jnp.einsum("oc,nchw->nohw", weight, xs)
    assert jnp.allclose(out, ref_f32, atol=1e-1, rtol=1e-1), "mismatch vs f32 reference"

    print("KERNEL_OK")
</pallas_src>

<mosaic_0001>
module attributes {stable_mosaic.version = 11 : i64} {
  func.func @_mul_conv1x1_kernel(%arg0: i32, %arg1: memref<2304x49xf32, #tpu.memory_space<vmem>>, %arg2: memref<2304x1xf32, #tpu.memory_space<vmem>>, %arg3: memref<384x2304xbf16, #tpu.memory_space<vmem>>, %arg4: memref<384x49xf32, #tpu.memory_space<vmem>>) attributes {dimension_semantics = [#tpu.dimension_semantics<parallel>], iteration_bounds = array<i64: 1>, scalar_prefetch = 0 : i64, scratch_operands = 0 : i64, tpu.core_type = #tpu.core_type<tc>, window_params = [{pipeline_mode = #tpu.pipeline_mode<synchronous>, transform_indices = @transform_0, window_bounds = array<i64: 2304, 49>}, {pipeline_mode = #tpu.pipeline_mode<synchronous>, transform_indices = @transform_1, window_bounds = array<i64: 2304, 1>}, {transform_indices = @transform_2, window_bounds = array<i64: 384, 2304>}, {transform_indices = @transform_3, window_bounds = array<i64: 384, 49>}]} {
    %c0 = arith.constant 0 : index
    %c0_0 = arith.constant 0 : index
    %0 = vector.load %arg1[%c0, %c0_0] : memref<2304x49xf32, #tpu.memory_space<vmem>>, vector<2304x49xf32>
    %c0_1 = arith.constant 0 : index
    %c0_2 = arith.constant 0 : index
    %1 = vector.load %arg2[%c0_1, %c0_2] : memref<2304x1xf32, #tpu.memory_space<vmem>>, vector<2304x1xf32>
    %2 = vector.broadcast %1 : vector<2304x1xf32> to vector<2304x49xf32>
    %3 = arith.mulf %0, %2 : vector<2304x49xf32>
    %4 = arith.truncf %3 : vector<2304x49xf32> to vector<2304x49xbf16>
    %c0_3 = arith.constant 0 : index
    %c0_4 = arith.constant 0 : index
    %5 = vector.load %arg3[%c0_3, %c0_4] : memref<384x2304xbf16, #tpu.memory_space<vmem>>, vector<384x2304xbf16>
    %cst = arith.constant dense<0.000000e+00> : vector<384x49xf32>
    %6 = tpu.matmul %5, %4, %cst {dimension_numbers = #tpu.dot_dimension_numbers<[1], [0], [0], [1], [0, 0, 1, 1], [], []>} : vector<384x2304xbf16>, vector<2304x49xbf16>, vector<384x49xf32> -> vector<384x49xf32>
    %c0_5 = arith.constant 0 : index
    %c0_6 = arith.constant 0 : index
    %7 = vector.load %arg4[%c0_5, %c0_6] : memref<384x49xf32, #tpu.memory_space<vmem>>, vector<384x49xf32>
    tpu.vector_store %arg4[%c0_5, %c0_6], %6 {strides = array<i32>} : memref<384x49xf32, #tpu.memory_space<vmem>>, vector<384x49xf32>,
    return
  }
  func.func @transform_0(%arg0: i32) -> (i32, i32) {
    %c0_i32 = arith.constant 0 : i32
    %c0_i32_0 = arith.constant 0 : i32
    %c0_i32_1 = arith.constant 0 : i32
    return %c0_i32, %c0_i32_0 : i32, i32
  }
  func.func @transform_1(%arg0: i32) -> (i32, i32) {
    %c0_i32 = arith.constant 0 : i32
    %c0_i32_0 = arith.constant 0 : i32
    %c0_i32_1 = arith.constant 0 : i32
    return %c0_i32, %c0_i32_0 : i32, i32
  }
  func.func @transform_2(%arg0: i32) -> (i32, i32) {
    %c0_i32 = arith.constant 0 : i32
    %c0_i32_0 = arith.constant 0 : i32
    return %arg0, %c0_i32 : i32, i32
  }
  func.func @transform_3(%arg0: i32) -> (i32, i32) {
    %c0_i32 = arith.constant 0 : i32
    %c0_i32_0 = arith.constant 0 : i32
    return %arg0, %c0_i32 : i32, i32
  }
}

</mosaic_0001>

<llo_original>
// kernel: mul_conv1x1.1
$region0: #{mul_conv1x1.1}
  #allocation0 [shape = 'u32[]', space=smem, size = 0x4, offset = 0x4, fixed_abs, tag = 'smem constant byte address 0x4 - core index']
  #allocation1 [shape = 'u32[144,128]{1,0:T(1,128)}', space=vmem, size = 0x12000, scoped, tag = 'internal scratch']
  %s0 = inlined_call_operand.vmem [shape: f32[2304,49], index: 0, kind: input, shape index: {}]
  %s1 = inlined_call_operand.vmem [shape: f32[2304,1], index: 1, kind: input, shape index: {}]
  %s2 = inlined_call_operand.vmem [shape: bf16[384,2304], index: 2, kind: input, shape index: {}]
  %s3 = inlined_call_operand.vmem [shape: f32[384,49], index: 3, kind: output, shape index: {}]
  %s4 = sld [smem:[#allocation0]]
  $region22: #{mul_conv1x1.1} parent=0
    _
  %s6 = ssub.s32 1, %s4
  %s7 = scalar_select 0, %s6, %s4
  // Predicated region
  $region2: #{mul_conv1x1.1} parent=0 // pred_check
    _
  $region3: #{mul_conv1x1.1} parent=0 // pred_check_branch
    %9 = sbr.rel (0) target = $region5
  $region4: #{mul_conv1x1.1} parent=0 // pred_region
    _
  $region5: #{mul_conv1x1.1} parent=0 // pred_fallthru
    _
  // Predicated region
  $region6: #{mul_conv1x1.1} parent=0 // pred_check
    _
  $region7: #{mul_conv1x1.1} parent=0 // pred_check_branch
    %11 = sbr.rel (0) target = $region9
  $region8: #{mul_conv1x1.1} parent=0 // pred_region
    _
  $region9: #{mul_conv1x1.1} parent=0 // pred_fallthru
    _
  // Predicated region
  $region10: #{mul_conv1x1.1} parent=0 // pred_check
    _
  $region11: #{mul_conv1x1.1} parent=0 // pred_check_branch
    %13 = sbr.rel (0) target = $region13
  $region12: #{mul_conv1x1.1} parent=0 // pred_region
    _
  $region13: #{mul_conv1x1.1} parent=0 // pred_fallthru
    _
  %v15 = vld [vmem:[%s0] sm:$0xff]
  %v16 = vld [vmem:[%s0 + $0x8] sm:$0xff]
  %v17 = vld [vmem:[%s0 + $0x10] sm:$0xff]
  %v18 = vld [vmem:[%s0 + $0x18] sm:$0xff]
  %v19 = vld [vmem:[%s0 + $0x20] sm:$0xff]
  %v20 = vld [vmem:[%s0 + $0x28] sm:$0xff]
  %v21 = vld [vmem:[%s0 + $0x30] sm:$0xff]
  %v22 = vld [vmem:[%s0 + $0x38] sm:$0xff]
  %v23 = vld [vmem:[%s0 + $0x40] sm:$0xff]
  %v24 = vld [vmem:[%s0 + $0x48] sm:$0xff]
  %v25 = vld [vmem:[%s0 + $0x50] sm:$0xff]
  %v26 = vld [vmem:[%s0 + $0x58] sm:$0xff]
  %v27 = vld [vmem:[%s0 + $0x60] sm:$0xff]
  %v28 = vld [vmem:[%s0 + $0x68] sm:$0xff]
  %v29 = vld [vmem:[%s0 + $0x70] sm:$0xff]
  %v30 = vld [vmem:[%s0 + $0x78] sm:$0xff]
  %v31 = vld [vmem:[%s0 + $0x80] sm:$0xff]
  %v32 = vld [vmem:[%s0 + $0x88] sm:$0xff]
  %v33 = vld [vmem:[%s0 + $0x90] sm:$0xff]
  %v34 = vld [vmem:[%s0 + $0x98] sm:$0xff]
  %v35 = vld [vmem:[%s0 + $0xa0] sm:$0xff]
  %v36 = vld [vmem:[%s0 + $0xa8] sm:$0xff]
  %v37 = vld [vmem:[%s0 + $0xb0] sm:$0xff]
  %v38 = vld [vmem:[%s0 + $0xb8] sm:$0xff]
  %v39 = vld [vmem:[%s0 + $0xc0] sm:$0xff]
  %v40 = vld [vmem:[%s0 + $0xc8] sm:$0xff]
  %v41 = vld [vmem:[%s0 + $0xd0] sm:$0xff]
  %v42 = vld [vmem:[%s0 + $0xd8] sm:$0xff]
  %v43 = vld [vmem:[%s0 + $0xe0] sm:$0xff]
  %v44 = vld [vmem:[%s0 + $0xe8] sm:$0xff]
  %v45 = vld [vmem:[%s0 + $0xf0] sm:$0xff]
  %v46 = vld [vmem:[%s0 + $0xf8] sm:$0xff]
  %v47 = vld [vmem:[%s0 + $0x100] sm:$0xff]
  %v48 = vld [vmem:[%s0 + $0x108] sm:$0xff]
  %v49 = vld [vmem:[%s0 + $0x110] sm:$0xff]
  %v50 = vld [vmem:[%s0 + $0x118] sm:$0xff]
  %v51 = vld [vmem:[%s0 + $0x120] sm:$0xff]
  %v52 = vld [vmem:[%s0 + $0x128] sm:$0xff]
  %v53 = vld [vmem:[%s0 + $0x130] sm:$0xff]
  %v54 = vld [vmem:[%s0 + $0x138] sm:$0xff]
  %v55 = vld [vmem:[%s0 + $0x140] sm:$0xff]
  %v56 = vld [vmem:[%s0 + $0x148] sm:$0xff]
  %v57 = vld [vmem:[%s0 + $0x150] sm:$0xff]
  %v58 = vld [vmem:[%s0 + $0x158] sm:$0xff]
  %v59 = vld [vmem:[%s0 + $0x160] sm:$0xff]
  %v60 = vld [vmem:[%s0 + $0x168] sm:$0xff]
  %v61 = vld [vmem:[%s0 + $0x170] sm:$0xff]
  %v62 = vld [vmem:[%s0 + $0x178] sm:$0xff]
  %v63 = vld [vmem:[%s0 + $0x180] sm:$0xff]
  %v64 = vld [vmem:[%s0 + $0x188] sm:$0xff]
  %v65 = vld [vmem:[%s0 + $0x190] sm:$0xff]
  %v66 = vld [vmem:[%s0 + $0x198] sm:$0xff]
  %v67 = vld [vmem:[%s0 + $0x1a0] sm:$0xff]
  %v68 = vld [vmem:[%s0 + $0x1a8] sm:$0xff]
  %v69 = vld [vmem:[%s0 + $0x1b0] sm:$0xff]
  %v70 = vld [vmem:[%s0 + $0x1b8] sm:$0xff]
  %v71 = vld [vmem:[%s0 + $0x1c0] sm:$0xff]
  %v72 = vld [vmem:[%s0 + $0x1c8] sm:$0xff]
  %v73 = vld [vmem:[%s0 + $0x1d0] sm:$0xff]
  %v74 = vld [vmem:[%s0 + $0x1d8] sm:$0xff]
  %v75 = vld [vmem:[%s0 + $0x1e0] sm:$0xff]
  %v76 = vld [vmem:[%s0 + $0x1e8] sm:$0xff]
  %v77 = vld [vmem:[%s0 + $0x1f0] sm:$0xff]
  %v78 = vld [vmem:[%s0 + $0x1f8] sm:$0xff]
  %v79 = vld [vmem:[%s0 + $0x200] sm:$0xff]
  %v80 = vld [vmem:[%s0 + $0x208] sm:$0xff]
  %v81 = vld [vmem:[%s0 + $0x210] sm:$0xff]
  %v82 = vld [vmem:[%s0 + $0x218] sm:$0xff]
  %v83 = vld [vmem:[%s0 + $0x220] sm:$0xff]
  %v84 = vld [vmem:[%s0 + $0x228] sm:$0xff]
  %v85 = vld [vmem:[%s0 + $0x230] sm:$0xff]
  %v86 = vld [vmem:[%s0 + $0x238] sm:$0xff]
  %v87 = vld [vmem:[%s0 + $0x240] sm:$0xff]
  %v88 = vld [vmem:[%s0 + $0x248] sm:$0xff]
  %v89 = vld [vmem:[%s0 + $0x250] sm:$0xff]
  %v90 = vld [vmem:[%s0 + $0x258] sm:$0xff]
  %v91 = vld [vmem:[%s0 + $0x260] sm:$0xff]
  %v92 = vld [vmem:[%s0 + $0x268] sm:$0xff]
  %v93 = vld [vmem:[%s0 + $0x270] sm:$0xff]
  %v94 = vld [vmem:[%s0 + $0x278] sm:$0xff]
  %v95 = vld [vmem:[%s0 + $0x280] sm:$0xff]
  %v96 = vld [vmem:[%s0 + $0x288] sm:$0xff]
  %v97 = vld [vmem:[%s0 + $0x290] sm:$0xff]
  %v98 = vld [vmem:[%s0 + $0x298] sm:$0xff]
  %v99 = vld [vmem:[%s0 + $0x2a0] sm:$0xff]
  %v100 = vld [vmem:[%s0 + $0x2a8] sm:$0xff]
  %v101 = vld [vmem:[%s0 + $0x2b0] sm:$0xff]
  %v102 = vld [vmem:[%s0 + $0x2b8] sm:$0xff]
  %v103 = vld [vmem:[%s0 + $0x2c0] sm:$0xff]
  %v104 = vld [vmem:[%s0 + $0x2c8] sm:$0xff]
  %v105 = vld [vmem:[%s0 + $0x2d0] sm:$0xff]
  %v106 = vld [vmem:[%s0 + $0x2d8] sm:$0xff]
  %v107 = vld [vmem:[%s0 + $0x2e0] sm:$0xff]
  %v108 = vld [vmem:[%s0 + $0x2e8] sm:$0xff]
  %v109 = vld [vmem:[%s0 + $0x2f0] sm:$0xff]
  %v110 = vld [vmem:[%s0 + $0x2f8] sm:$0xff]
  %v111 = vld [vmem:[%s0 + $0x300] sm:$0xff]
  %v112 = vld [vmem:[%s0 + $0x308] sm:$0xff]
  %v113 = vld [vmem:[%s0 + $0x310] sm:$0xff]
  %v114 = vld [vmem:[%s0 + $0x318] sm:$0xff]
  %v115 = vld [vmem:[%s0 + $0x320] sm:$0xff]
  %v116 = vld [vmem:[%s0 + $0x328] sm:$0xff]
  %v117 = vld [vmem:[%s0 + $0x330] sm:$0xff]
  %v118 = vld [vmem:[%s0 + $0x338] sm:$0xff]
  %v119 = vld [vmem:[%s0 + $0x340] sm:$0xff]
  %v120 = vld [vmem:[%s0 + $0x348] sm:$0xff]
  %v121 = vld [vmem:[%s0 + $0x350] sm:$0xff]
  %v122 = vld [vmem:[%s0 + $0x358] sm:$0xff]
  %v123 = vld [vmem:[%s0 + $0x360] sm:$0xff]
  %v124 = vld [vmem:[%s0 + $0x368] sm:$0xff]
  %v125 = vld [vmem:[%s0 + $0x370] sm:$0xff]
  %v126 = vld [vmem:[%s0 + $0x378] sm:$0xff]
  %v127 = vld [vmem:[%s0 + $0x380] sm:$0xff]
  %v128 = vld [vmem:[%s0 + $0x388] sm:$0xff]
  %v129 = vld [vmem:[%s0 + $0x390] sm:$0xff]
  %v130 = vld [vmem:[%s0 + $0x398] sm:$0xff]
  %v131 = vld [vmem:[%s0 + $0x3a0] sm:$0xff]
  %v132 = vld [vmem:[%s0 + $0x3a8] sm:$0xff]
  %v133 = vld [vmem:[%s0 + $0x3b0] sm:$0xff]
  %v134 = vld [vmem:[%s0 + $0x3b8] sm:$0xff]
  %v135 = vld [vmem:[%s0 + $0x3c0] sm:$0xff]
  %v136 = vld [vmem:[%s0 + $0x3c8] sm:$0xff]
  %v137 = vld [vmem:[%s0 + $0x3d0] sm:$0xff]
  %v138 = vld [vmem:[%s0 + $0x3d8] sm:$0xff]
  %v139 = vld [vmem:[%s0 + $0x3e0] sm:$0xff]
  %v140 = vld [vmem:[%s0 + $0x3e8] sm:$0xff]
  %v141 = vld [vmem:[%s0 + $0x3f0] sm:$0xff]
  %v142 = vld [vmem:[%s0 + $0x3f8] sm:$0xff]
  %v143 = vld [vmem:[%s0 + $0x400] sm:$0xff]
  %v144 = vld [vmem:[%s0 + $0x408] sm:$0xff]
  %v145 = vld [vmem:[%s0 + $0x410] sm:$0xff]
  %v146 = vld [vmem:[%s0 + $0x418] sm:$0xff]
  %v147 = vld [vmem:[%s0 + $0x420] sm:$0xff]
  %v148 = vld [vmem:[%s0 + $0x428] sm:$0xff]
  %v149 = vld [vmem:[%s0 + $0x430] sm:$0xff]
  %v150 = vld [vmem:[%s0 + $0x438] sm:$0xff]
  %v151 = vld [vmem:[%s0 + $0x440] sm:$0xff]
  %v152 = vld [vmem:[%s0 + $0x448] sm:$0xff]
  %v153 = vld [vmem:[%s0 + $0x450] sm:$0xff]
  %v154 = vld [vmem:[%s0 + $0x458] sm:$0xff]
  %v155 = vld [vmem:[%s0 + $0x460] sm:$0xff]
  %v156 = vld [vmem:[%s0 + $0x468] sm:$0xff]
  %v157 = vld [vmem:[%s0 + $0x470] sm:$0xff]
  %v158 = vld [vmem:[%s0 + $0x478] sm:$0xff]
  %v159 = vld [vmem:[%s0 + $0x480] sm:$0xff]
  %v160 = vld [vmem:[%s0 + $0x488] sm:$0xff]
  %v161 = vld [vmem:[%s0 + $0x490] sm:$0xff]
  %v162 = vld [vmem:[%s0 + $0x498] sm:$0xff]
  %v163 = vld [vmem:[%s0 + $0x4a0] sm:$0xff]
  %v164 = vld [vmem:[%s0 + $0x4a8] sm:$0xff]
  %v165 = vld [vmem:[%s0 + $0x4b0] sm:$0xff]
  %v166 = vld [vmem:[%s0 + $0x4b8] sm:$0xff]
  %v167 = vld [vmem:[%s0 + $0x4c0] sm:$0xff]
  %v168 = vld [vmem:[%s0 + $0x4c8] sm:$0xff]
  %v169 = vld [vmem:[%s0 + $0x4d0] sm:$0xff]
  %v170 = vld [vmem:[%s0 + $0x4d8] sm:$0xff]
  %v171 = vld [vmem:[%s0 + $0x4e0] sm:$0xff]
  %v172 = vld [vmem:[%s0 + $0x4e8] sm:$0xff]
  %v173 = vld [vmem:[%s0 + $0x4f0] sm:$0xff]
  %v174 = vld [vmem:[%s0 + $0x4f8] sm:$0xff]
  %v175 = vld [vmem:[%s0 + $0x500] sm:$0xff]
  %v176 = vld [vmem:[%s0 + $0x508] sm:$0xff]
  %v177 = vld [vmem:[%s0 + $0x510] sm:$0xff]
  %v178 = vld [vmem:[%s0 + $0x518] sm:$0xff]
  %v179 = vld [vmem:[%s0 + $0x520] sm:$0xff]
  %v180 = vld [vmem:[%s0 + $0x528] sm:$0xff]
  %v181 = vld [vmem:[%s0 + $0x530] sm:$0xff]
  %v182 = vld [vmem:[%s0 + $0x538] sm:$0xff]
  %v183 = vld [vmem:[%s0 + $0x540] sm:$0xff]
  %v184 = vld [vmem:[%s0 + $0x548] sm:$0xff]
  %v185 = vld [vmem:[%s0 + $0x550] sm:$0xff]
  %v186 = vld [vmem:[%s0 + $0x558] sm:$0xff]
  %v187 = vld [vmem:[%s0 + $0x560] sm:$0xff]
  %v188 = vld [vmem:[%s0 + $0x568] sm:$0xff]
  %v189 = vld [vmem:[%s0 + $0x570] sm:$0xff]
  %v190 = vld [vmem:[%s0 + $0x578] sm:$0xff]
  %v191 = vld [vmem:[%s0 + $0x580] sm:$0xff]
  %v192 = vld [vmem:[%s0 + $0x588] sm:$0xff]
  %v193 = vld [vmem:[%s0 + $0x590] sm:$0xff]
  %v194 = vld [vmem:[%s0 + $0x598] sm:$0xff]
  %v195 = vld [vmem:[%s0 + $0x5a0] sm:$0xff]
  %v196 = vld [vmem:[%s0 + $0x5a8] sm:$0xff]
  %v197 = vld [vmem:[%s0 + $0x5b0] sm:$0xff]
  %v198 = vld [vmem:[%s0 + $0x5b8] sm:$0xff]
  %v199 = vld [vmem:[%s0 + $0x5c0] sm:$0xff]
  %v200 = vld [vmem:[%s0 + $0x5c8] sm:$0xff]
  %v201 = vld [vmem:[%s0 + $0x5d0] sm:$0xff]
  %v202 = vld [vmem:[%s0 + $0x5d8] sm:$0xff]
  %v203 = vld [vmem:[%s0 + $0x5e0] sm:$0xff]
  %v204 = vld [vmem:[%s0 + $0x5e8] sm:$0xff]
  %v205 = vld [vmem:[%s0 + $0x5f0] sm:$0xff]
  %v206 = vld [vmem:[%s0 + $0x5f8] sm:$0xff]
  %v207 = vld [vmem:[%s0 + $0x600] sm:$0xff]
  %v208 = vld [vmem:[%s0 + $0x608] sm:$0xff]
  %v209 = vld [vmem:[%s0 + $0x610] sm:$0xff]
  %v210 = vld [vmem:[%s0 + $0x618] sm:$0xff]
  %v211 = vld [vmem:[%s0 + $0x620] sm:$0xff]
  %v212 = vld [vmem:[%s0 + $0x628] sm:$0xff]
  %v213 = vld [vmem:[%s0 + $0x630] sm:$0xff]
  %v214 = vld [vmem:[%s0 + $0x638] sm:$0xff]
  %v215 = vld [vmem:[%s0 + $0x640] sm:$0xff]
  %v216 = vld [vmem:[%s0 + $0x648] sm:$0xff]
  %v217 = vld [vmem:[%s0 + $0x650] sm:$0xff]
  %v218 = vld [vmem:[%s0 + $0x658] sm:$0xff]
  %v219 = vld [vmem:[%s0 + $0x660] sm:$0xff]
  %v220 = vld [vmem:[%s0 + $0x668] sm:$0xff]
  %v221 = vld [vmem:[%s0 + $0x670] sm:$0xff]
  %v222 = vld [vmem:[%s0 + $0x678] sm:$0xff]
  %v223 = vld [vmem:[%s0 + $0x680] sm:$0xff]
  %v224 = vld [vmem:[%s0 + $0x688] sm:$0xff]
  %v225 = vld [vmem:[%s0 + $0x690] sm:$0xff]
  %v226 = vld [vmem:[%s0 + $0x698] sm:$0xff]
  %v227 = vld [vmem:[%s0 + $0x6a0] sm:$0xff]
  %v228 = vld [vmem:[%s0 + $0x6a8] sm:$0xff]
  %v229 = vld [vmem:[%s0 + $0x6b0] sm:$0xff]
  %v230 = vld [vmem:[%s0 + $0x6b8] sm:$0xff]
  %v231 = vld [vmem:[%s0 + $0x6c0] sm:$0xff]
  %v232 = vld [vmem:[%s0 + $0x6c8] sm:$0xff]
  %v233 = vld [vmem:[%s0 + $0x6d0] sm:$0xff]
  %v234 = vld [vmem:[%s0 + $0x6d8] sm:$0xff]
  %v235 = vld [vmem:[%s0 + $0x6e0] sm:$0xff]
  %v236 = vld [vmem:[%s0 + $0x6e8] sm:$0xff]
  %v237 = vld [vmem:[%s0 + $0x6f0] sm:$0xff]
  %v238 = vld [vmem:[%s0 + $0x6f8] sm:$0xff]
  %v239 = vld [vmem:[%s0 + $0x700] sm:$0xff]
  %v240 = vld [vmem:[%s0 + $0x708] sm:$0xff]
  %v241 = vld [vmem:[%s0 + $0x710] sm:$0xff]
  %v242 = vld [vmem:[%s0 + $0x718] sm:$0xff]
  %v243 = vld [vmem:[%s0 + $0x720] sm:$0xff]
  %v244 = vld [vmem:[%s0 + $0x728] sm:$0xff]
  %v245 = vld [vmem:[%s0 + $0x730] sm:$0xff]
  %v246 = vld [vmem:[%s0 + $0x738] sm:$0xff]
  %v247 = vld [vmem:[%s0 + $0x740] sm:$0xff]
  %v248 = vld [vmem:[%s0 + $0x748] sm:$0xff]
  %v249 = vld [vmem:[%s0 + $0x750] sm:$0xff]
  %v250 = vld [vmem:[%s0 + $0x758] sm:$0xff]
  %v251 = vld [vmem:[%s0 + $0x760] sm:$0xff]
  %v252 = vld [vmem:[%s0 + $0x768] sm:$0xff]
  %v253 = vld [vmem:[%s0 + $0x770] sm:$0xff]
  %v254 = vld [vmem:[%s0 + $0x778] sm:$0xff]
  %v255 = vld [vmem:[%s0 + $0x780] sm:$0xff]
  %v256 = vld [vmem:[%s0 + $0x788] sm:$0xff]
  %v257 = vld [vmem:[%s0 + $0x790] sm:$0xff]
  %v258 = vld [vmem:[%s0 + $0x798] sm:$0xff]
  %v259 = vld [vmem:[%s0 + $0x7a0] sm:$0xff]
  %v260 = vld [vmem:[%s0 + $0x7a8] sm:$0xff]
  %v261 = vld [vmem:[%s0 + $0x7b0] sm:$0xff]
  %v262 = vld [vmem:[%s0 + $0x7b8] sm:$0xff]
  %v263 = vld [vmem:[%s0 + $0x7c0] sm:$0xff]
  %v264 = vld [vmem:[%s0 + $0x7c8] sm:$0xff]
  %v265 = vld [vmem:[%s0 + $0x7d0] sm:$0xff]
  %v266 = vld [vmem:[%s0 + $0x7d8] sm:$0xff]
  %v267 = vld [vmem:[%s0 + $0x7e0] sm:$0xff]
  %v268 = vld [vmem:[%s0 + $0x7e8] sm:$0xff]
  %v269 = vld [vmem:[%s0 + $0x7f0] sm:$0xff]
  %v270 = vld [vmem:[%s0 + $0x7f8] sm:$0xff]
  %v271 = vld [vmem:[%s0 + $0x800] sm:$0xff]
  %v272 = vld [vmem:[%s0 + $0x808] sm:$0xff]
  %v273 = vld [vmem:[%s0 + $0x810] sm:$0xff]
  %v274 = vld [vmem:[%s0 + $0x818] sm:$0xff]
  %v275 = vld [vmem:[%s0 + $0x820] sm:$0xff]
  %v276 = vld [vmem:[%s0 + $0x828] sm:$0xff]
  %v277 = vld [vmem:[%s0 + $0x830] sm:$0xff]
  %v278 = vld [vmem:[%s0 + $0x838] sm:$0xff]
  %v279 = vld [vmem:[%s0 + $0x840] sm:$0xff]
  %v280 = vld [vmem:[%s0 + $0x848] sm:$0xff]
  %v281 = vld [vmem:[%s0 + $0x850] sm:$0xff]
  %v282 = vld [vmem:[%s0 + $0x858] sm:$0xff]
  %v283 = vld [vmem:[%s0 + $0x860] sm:$0xff]
  %v284 = vld [vmem:[%s0 + $0x868] sm:$0xff]
  %v285 = vld [vmem:[%s0 + $0x870] sm:$0xff]
  %v286 = vld [vmem:[%s0 + $0x878] sm:$0xff]
  %v287 = vld [vmem:[%s0 + $0x880] sm:$0xff]
  %v288 = vld [vmem:[%s0 + $0x888] sm:$0xff]
  %v289 = vld [vmem:[%s0 + $0x890] sm:$0xff]
  %v290 = vld [vmem:[%s0 + $0x898] sm:$0xff]
  %v291 = vld [vmem:[%s0 + $0x8a0] sm:$0xff]
  %v292 = vld [vmem:[%s0 + $0x8a8] sm:$0xff]
  %v293 = vld [vmem:[%s0 + $0x8b0] sm:$0xff]
  %v294 = vld [vmem:[%s0 + $0x8b8] sm:$0xff]
  %v295 = vld [vmem:[%s0 + $0x8c0] sm:$0xff]
  %v296 = vld [vmem:[%s0 + $0x8c8] sm:$0xff]
  %v297 = vld [vmem:[%s0 + $0x8d0] sm:$0xff]
  %v298 = vld [vmem:[%s0 + $0x8d8] sm:$0xff]
  %v299 = vld [vmem:[%s0 + $0x8e0] sm:$0xff]
  %v300 = vld [vmem:[%s0 + $0x8e8] sm:$0xff]
  %v301 = vld [vmem:[%s0 + $0x8f0] sm:$0xff]
  %v302 = vld [vmem:[%s0 + $0x8f8] sm:$0xff]
  %v303 = vld [vmem:[%s1] sm:$0xff]
  %v304 = vld [vmem:[%s1 + $0x8] sm:$0xff]
  %v305 = vld [vmem:[%s1 + $0x10] sm:$0xff]
  %v306 = vld [vmem:[%s1 + $0x18] sm:$0xff]
  %v307 = vld [vmem:[%s1 + $0x20] sm:$0xff]
  %v308 = vld [vmem:[%s1 + $0x28] sm:$0xff]
  %v309 = vld [vmem:[%s1 + $0x30] sm:$0xff]
  %v310 = vld [vmem:[%s1 + $0x38] sm:$0xff]
  %v311 = vld [vmem:[%s1 + $0x40] sm:$0xff]
  %v312 = vld [vmem:[%s1 + $0x48] sm:$0xff]
  %v313 = vld [vmem:[%s1 + $0x50] sm:$0xff]
  %v314 = vld [vmem:[%s1 + $0x58] sm:$0xff]
  %v315 = vld [vmem:[%s1 + $0x60] sm:$0xff]
  %v316 = vld [vmem:[%s1 + $0x68] sm:$0xff]
  %v317 = vld [vmem:[%s1 + $0x70] sm:$0xff]
  %v318 = vld [vmem:[%s1 + $0x78] sm:$0xff]
  %v319 = vld [vmem:[%s1 + $0x80] sm:$0xff]
  %v320 = vld [vmem:[%s1 + $0x88] sm:$0xff]
  %v321 = vld [vmem:[%s1 + $0x90] sm:$0xff]
  %v322 = vld [vmem:[%s1 + $0x98] sm:$0xff]
  %v323 = vld [vmem:[%s1 + $0xa0] sm:$0xff]
  %v324 = vld [vmem:[%s1 + $0xa8] sm:$0xff]
  %v325 = vld [vmem:[%s1 + $0xb0] sm:$0xff]
  %v326 = vld [vmem:[%s1 + $0xb8] sm:$0xff]
  %v327 = vld [vmem:[%s1 + $0xc0] sm:$0xff]
  %v328 = vld [vmem:[%s1 + $0xc8] sm:$0xff]
  %v329 = vld [vmem:[%s1 + $0xd0] sm:$0xff]
  %v330 = vld [vmem:[%s1 + $0xd8] sm:$0xff]
  %v331 = vld [vmem:[%s1 + $0xe0] sm:$0xff]
  %v332 = vld [vmem:[%s1 + $0xe8] sm:$0xff]
  %v333 = vld [vmem:[%s1 + $0xf0] sm:$0xff]
  %v334 = vld [vmem:[%s1 + $0xf8] sm:$0xff]
  %v335 = vld [vmem:[%s1 + $0x100] sm:$0xff]
  %v336 = vld [vmem:[%s1 + $0x108] sm:$0xff]
  %v337 = vld [vmem:[%s1 + $0x110] sm:$0xff]
  %v338 = vld [vmem:[%s1 + $0x118] sm:$0xff]
  %v339 = vld [vmem:[%s1 + $0x120] sm:$0xff]
  %v340 = vld [vmem:[%s1 + $0x128] sm:$0xff]
  %v341 = vld [vmem:[%s1 + $0x130] sm:$0xff]
  %v342 = vld [vmem:[%s1 + $0x138] sm:$0xff]
  %v343 = vld [vmem:[%s1 + $0x140] sm:$0xff]
  %v344 = vld [vmem:[%s1 + $0x148] sm:$0xff]
  %v345 = vld [vmem:[%s1 + $0x150] sm:$0xff]
  %v346 = vld [vmem:[%s1 + $0x158] sm:$0xff]
  %v347 = vld [vmem:[%s1 + $0x160] sm:$0xff]
  %v348 = vld [vmem:[%s1 + $0x168] sm:$0xff]
  %v349 = vld [vmem:[%s1 + $0x170] sm:$0xff]
  %v350 = vld [vmem:[%s1 + $0x178] sm:$0xff]
  %v351 = vld [vmem:[%s1 + $0x180] sm:$0xff]
  %v352 = vld [vmem:[%s1 + $0x188] sm:$0xff]
  %v353 = vld [vmem:[%s1 + $0x190] sm:$0xff]
  %v354 = vld [vmem:[%s1 + $0x198] sm:$0xff]
  %v355 = vld [vmem:[%s1 + $0x1a0] sm:$0xff]
  %v356 = vld [vmem:[%s1 + $0x1a8] sm:$0xff]
  %v357 = vld [vmem:[%s1 + $0x1b0] sm:$0xff]
  %v358 = vld [vmem:[%s1 + $0x1b8] sm:$0xff]
  %v359 = vld [vmem:[%s1 + $0x1c0] sm:$0xff]
  %v360 = vld [vmem:[%s1 + $0x1c8] sm:$0xff]
  %v361 = vld [vmem:[%s1 + $0x1d0] sm:$0xff]
  %v362 = vld [vmem:[%s1 + $0x1d8] sm:$0xff]
  %v363 = vld [vmem:[%s1 + $0x1e0] sm:$0xff]
  %v364 = vld [vmem:[%s1 + $0x1e8] sm:$0xff]
  %v365 = vld [vmem:[%s1 + $0x1f0] sm:$0xff]
  %v366 = vld [vmem:[%s1 + $0x1f8] sm:$0xff]
  %v367 = vld [vmem:[%s1 + $0x200] sm:$0xff]
  %v368 = vld [vmem:[%s1 + $0x208] sm:$0xff]
  %v369 = vld [vmem:[%s1 + $0x210] sm:$0xff]
  %v370 = vld [vmem:[%s1 + $0x218] sm:$0xff]
  %v371 = vld [vmem:[%s1 + $0x220] sm:$0xff]
  %v372 = vld [vmem:[%s1 + $0x228] sm:$0xff]
  %v373 = vld [vmem:[%s1 + $0x230] sm:$0xff]
  %v374 = vld [vmem:[%s1 + $0x238] sm:$0xff]
  %v375 = vld [vmem:[%s1 + $0x240] sm:$0xff]
  %v376 = vld [vmem:[%s1 + $0x248] sm:$0xff]
  %v377 = vld [vmem:[%s1 + $0x250] sm:$0xff]
  %v378 = vld [vmem:[%s1 + $0x258] sm:$0xff]
  %v379 = vld [vmem:[%s1 + $0x260] sm:$0xff]
  %v380 = vld [vmem:[%s1 + $0x268] sm:$0xff]
  %v381 = vld [vmem:[%s1 + $0x270] sm:$0xff]
  %v382 = vld [vmem:[%s1 + $0x278] sm:$0xff]
  %v383 = vld [vmem:[%s1 + $0x280] sm:$0xff]
  %v384 = vld [vmem:[%s1 + $0x288] sm:$0xff]
  %v385 = vld [vmem:[%s1 + $0x290] sm:$0xff]
  %v386 = vld [vmem:[%s1 + $0x298] sm:$0xff]
  %v387 = vld [vmem:[%s1 + $0x2a0] sm:$0xff]
  %v388 = vld [vmem:[%s1 + $0x2a8] sm:$0xff]
  %v389 = vld [vmem:[%s1 + $0x2b0] sm:$0xff]
  %v390 = vld [vmem:[%s1 + $0x2b8] sm:$0xff]
  %v391 = vld [vmem:[%s1 + $0x2c0] sm:$0xff]
  %v392 = vld [vmem:[%s1 + $0x2c8] sm:$0xff]
  %v393 = vld [vmem:[%s1 + $0x2d0] sm:$0xff]
  %v394 = vld [vmem:[%s1 + $0x2d8] sm:$0xff]
  %v395 = vld [vmem:[%s1 + $0x2e0] sm:$0xff]
  %v396 = vld [vmem:[%s1 + $0x2e8] sm:$0xff]
  %v397 = vld [vmem:[%s1 + $0x2f0] sm:$0xff]
  %v398 = vld [vmem:[%s1 + $0x2f8] sm:$0xff]
  %v399 = vld [vmem:[%s1 + $0x300] sm:$0xff]
  %v400 = vld [vmem:[%s1 + $0x308] sm:$0xff]
  %v401 = vld [vmem:[%s1 + $0x310] sm:$0xff]
  %v402 = vld [vmem:[%s1 + $0x318] sm:$0xff]
  %v403 = vld [vmem:[%s1 + $0x320] sm:$0xff]
  %v404 = vld [vmem:[%s1 + $0x328] sm:$0xff]
  %v405 = vld [vmem:[%s1 + $0x330] sm:$0xff]
  %v406 = vld [vmem:[%s1 + $0x338] sm:$0xff]
  %v407 = vld [vmem:[%s1 + $0x340] sm:$0xff]
  %v408 = vld [vmem:[%s1 + $0x348] sm:$0xff]
  %v409 = vld [vmem:[%s1 + $0x350] sm:$0xff]
  %v410 = vld [vmem:[%s1 + $0x358] sm:$0xff]
  %v411 = vld [vmem:[%s1 + $0x360] sm:$0xff]
  %v412 = vld [vmem:[%s1 + $0x368] sm:$0xff]
  %v413 = vld [vmem:[%s1 + $0x370] sm:$0xff]
  %v414 = vld [vmem:[%s1 + $0x378] sm:$0xff]
  %v415 = vld [vmem:[%s1 + $0x380] sm:$0xff]
  %v416 = vld [vmem:[%s1 + $0x388] sm:$0xff]
  %v417 = vld [vmem:[%s1 + $0x390] sm:$0xff]
  %v418 = vld [vmem:[%s1 + $0x398] sm:$0xff]
  %v419 = vld [vmem:[%s1 + $0x3a0] sm:$0xff]
  %v420 = vld [vmem:[%s1 + $0x3a8] sm:$0xff]
  %v421 = vld [vmem:[%s1 + $0x3b0] sm:$0xff]
  %v422 = vld [vmem:[%s1 + $0x3b8] sm:$0xff]
  %v423 = vld [vmem:[%s1 + $0x3c0] sm:$0xff]
  %v424 = vld [vmem:[%s1 + $0x3c8] sm:$0xff]
  %v425 = vld [vmem:[%s1 + $0x3d0] sm:$0xff]
  %v426 = vld [vmem:[%s1 + $0x3d8] sm:$0xff]
  %v427 = vld [vmem:[%s1 + $0x3e0] sm:$0xff]
  %v428 = vld [vmem:[%s1 + $0x3e8] sm:$0xff]
  %v429 = vld [vmem:[%s1 + $0x3f0] sm:$0xff]
  %v430 = vld [vmem:[%s1 + $0x3f8] sm:$0xff]
  %v431 = vld [vmem:[%s1 + $0x400] sm:$0xff]
  %v432 = vld [vmem:[%s1 + $0x408] sm:$0xff]
  %v433 = vld [vmem:[%s1 + $0x410] sm:$0xff]
  %v434 = vld [vmem:[%s1 + $0x418] sm:$0xff]
  %v435 = vld [vmem:[%s1 + $0x420] sm:$0xff]
  %v436 = vld [vmem:[%s1 + $0x428] sm:$0xff]
  %v437 = vld [vmem:[%s1 + $0x430] sm:$0xff]
  %v438 = vld [vmem:[%s1 + $0x438] sm:$0xff]
  %v439 = vld [vmem:[%s1 + $0x440] sm:$0xff]
  %v440 = vld [vmem:[%s1 + $0x448] sm:$0xff]
  %v441 = vld [vmem:[%s1 + $0x450] sm:$0xff]
  %v442 = vld [vmem:[%s1 + $0x458] sm:$0xff]
  %v443 = vld [vmem:[%s1 + $0x460] sm:$0xff]
  %v444 = vld [vmem:[%s1 + $0x468] sm:$0xff]
  %v445 = vld [vmem:[%s1 + $0x470] sm:$0xff]
  %v446 = vld [vmem:[%s1 + $0x478] sm:$0xff]
  %v447 = vld [vmem:[%s1 + $0x480] sm:$0xff]
  %v448 = vld [vmem:[%s1 + $0x488] sm:$0xff]
  %v449 = vld [vmem:[%s1 + $0x490] sm:$0xff]
  %v450 = vld [vmem:[%s1 + $0x498] sm:$0xff]
  %v451 = vld [vmem:[%s1 + $0x4a0] sm:$0xff]
  %v452 = vld [vmem:[%s1 + $0x4a8] sm:$0xff]
  %v453 = vld [vmem:[%s1 + $0x4b0] sm:$0xff]
  %v454 = vld [vmem:[%s1 + $0x4b8] sm:$0xff]
  %v455 = vld [vmem:[%s1 + $0x4c0] sm:$0xff]
  %v456 = vld [vmem:[%s1 + $0x4c8] sm:$0xff]
  %v457 = vld [vmem:[%s1 + $0x4d0] sm:$0xff]
  %v458 = vld [vmem:[%s1 + $0x4d8] sm:$0xff]
  %v459 = vld [vmem:[%s1 + $0x4e0] sm:$0xff]
  %v460 = vld [vmem:[%s1 + $0x4e8] sm:$0xff]
  %v461 = vld [vmem:[%s1 + $0x4f0] sm:$0xff]
  %v462 = vld [vmem:[%s1 + $0x4f8] sm:$0xff]
  %v463 = vld [vmem:[%s1 + $0x500] sm:$0xff]
  %v464 = vld [vmem:[%s1 + $0x508] sm:$0xff]
  %v465 = vld [vmem:[%s1 + $0x510] sm:$0xff]
  %v466 = vld [vmem:[%s1 + $0x518] sm:$0xff]
  %v467 = vld [vmem:[%s1 + $0x520] sm:$0xff]
  %v468 = vld [vmem:[%s1 + $0x528] sm:$0xff]
  %v469 = vld [vmem:[%s1 + $0x530] sm:$0xff]
  %v470 = vld [vmem:[%s1 + $0x538] sm:$0xff]
  %v471 = vld [vmem:[%s1 + $0x540] sm:$0xff]
  %v472 = vld [vmem:[%s1 + $0x548] sm:$0xff]
  %v473 = vld [vmem:[%s1 + $0x550] sm:$0xff]
  %v474 = vld [vmem:[%s1 + $0x558] sm:$0xff]
  %v475 = vld [vmem:[%s1 + $0x560] sm:$0xff]
  %v476 = vld [vmem:[%s1 + $0x568] sm:$0xff]
  %v477 = vld [vmem:[%s1 + $0x570] sm:$0xff]
  %v478 = vld [vmem:[%s1 + $0x578] sm:$0xff]
  %v479 = vld [vmem:[%s1 + $0x580] sm:$0xff]
  %v480 = vld [vmem:[%s1 + $0x588] sm:$0xff]
  %v481 = vld [vmem:[%s1 + $0x590] sm:$0xff]
  %v482 = vld [vmem:[%s1 + $0x598] sm:$0xff]
  %v483 = vld [vmem:[%s1 + $0x5a0] sm:$0xff]
  %v484 = vld [vmem:[%s1 + $0x5a8] sm:$0xff]
  %v485 = vld [vmem:[%s1 + $0x5b0] sm:$0xff]
  %v486 = vld [vmem:[%s1 + $0x5b8] sm:$0xff]
  %v487 = vld [vmem:[%s1 + $0x5c0] sm:$0xff]
  %v488 = vld [vmem:[%s1 + $0x5c8] sm:$0xff]
  %v489 = vld [vmem:[%s1 + $0x5d0] sm:$0xff]
  %v490 = vld [vmem:[%s1 + $0x5d8] sm:$0xff]
  %v491 = vld [vmem:[%s1 + $0x5e0] sm:$0xff]
  %v492 = vld [vmem:[%s1 + $0x5e8] sm:$0xff]
  %v493 = vld [vmem:[%s1 + $0x5f0] sm:$0xff]
  %v494 = vld [vmem:[%s1 + $0x5f8] sm:$0xff]
  %v495 = vld [vmem:[%s1 + $0x600] sm:$0xff]
  %v496 = vld [vmem:[%s1 + $0x608] sm:$0xff]
  %v497 = vld [vmem:[%s1 + $0x610] sm:$0xff]
  %v498 = vld [vmem:[%s1 + $0x618] sm:$0xff]
  %v499 = vld [vmem:[%s1 + $0x620] sm:$0xff]
  %v500 = vld [vmem:[%s1 + $0x628] sm:$0xff]
  %v501 = vld [vmem:[%s1 + $0x630] sm:$0xff]
  %v502 = vld [vmem:[%s1 + $0x638] sm:$0xff]
  %v503 = vld [vmem:[%s1 + $0x640] sm:$0xff]
  %v504 = vld [vmem:[%s1 + $0x648] sm:$0xff]
  %v505 = vld [vmem:[%s1 + $0x650] sm:$0xff]
  %v506 = vld [vmem:[%s1 + $0x658] sm:$0xff]
  %v507 = vld [vmem:[%s1 + $0x660] sm:$0xff]
  %v508 = vld [vmem:[%s1 + $0x668] sm:$0xff]
  %v509 = vld [vmem:[%s1 + $0x670] sm:$0xff]
  %v510 = vld [vmem:[%s1 + $0x678] sm:$0xff]
  %v511 = vld [vmem:[%s1 + $0x680] sm:$0xff]
  %v512 = vld [vmem:[%s1 + $0x688] sm:$0xff]
  %v513 = vld [vmem:[%s1 + $0x690] sm:$0xff]
  %v514 = vld [vmem:[%s1 + $0x698] sm:$0xff]
  %v515 = vld [vmem:[%s1 + $0x6a0] sm:$0xff]
  %v516 = vld [vmem:[%s1 + $0x6a8] sm:$0xff]
  %v517 = vld [vmem:[%s1 + $0x6b0] sm:$0xff]
  %v518 = vld [vmem:[%s1 + $0x6b8] sm:$0xff]
  %v519 = vld [vmem:[%s1 + $0x6c0] sm:$0xff]
  %v520 = vld [vmem:[%s1 + $0x6c8] sm:$0xff]
  %v521 = vld [vmem:[%s1 + $0x6d0] sm:$0xff]
  %v522 = vld [vmem:[%s1 + $0x6d8] sm:$0xff]
  %v523 = vld [vmem:[%s1 + $0x6e0] sm:$0xff]
  %v524 = vld [vmem:[%s1 + $0x6e8] sm:$0xff]
  %v525 = vld [vmem:[%s1 + $0x6f0] sm:$0xff]
  %v526 = vld [vmem:[%s1 + $0x6f8] sm:$0xff]
  %v527 = vld [vmem:[%s1 + $0x700] sm:$0xff]
  %v528 = vld [vmem:[%s1 + $0x708] sm:$0xff]
  %v529 = vld [vmem:[%s1 + $0x710] sm:$0xff]
  %v530 = vld [vmem:[%s1 + $0x718] sm:$0xff]
  %v531 = vld [vmem:[%s1 + $0x720] sm:$0xff]
  %v532 = vld [vmem:[%s1 + $0x728] sm:$0xff]
  %v533 = vld [vmem:[%s1 + $0x730] sm:$0xff]
  %v534 = vld [vmem:[%s1 + $0x738] sm:$0xff]
  %v535 = vld [vmem:[%s1 + $0x740] sm:$0xff]
  %v536 = vld [vmem:[%s1 + $0x748] sm:$0xff]
  %v537 = vld [vmem:[%s1 + $0x750] sm:$0xff]
  %v538 = vld [vmem:[%s1 + $0x758] sm:$0xff]
  %v539 = vld [vmem:[%s1 + $0x760] sm:$0xff]
  %v540 = vld [vmem:[%s1 + $0x768] sm:$0xff]
  %v541 = vld [vmem:[%s1 + $0x770] sm:$0xff]
  %v542 = vld [vmem:[%s1 + $0x778] sm:$0xff]
  %v543 = vld [vmem:[%s1 + $0x780] sm:$0xff]
  %v544 = vld [vmem:[%s1 + $0x788] sm:$0xff]
  %v545 = vld [vmem:[%s1 + $0x790] sm:$0xff]
  %v546 = vld [vmem:[%s1 + $0x798] sm:$0xff]
  %v547 = vld [vmem:[%s1 + $0x7a0] sm:$0xff]
  %v548 = vld [vmem:[%s1 + $0x7a8] sm:$0xff]
  %v549 = vld [vmem:[%s1 + $0x7b0] sm:$0xff]
  %v550 = vld [vmem:[%s1 + $0x7b8] sm:$0xff]
  %v551 = vld [vmem:[%s1 + $0x7c0] sm:$0xff]
  %v552 = vld [vmem:[%s1 + $0x7c8] sm:$0xff]
  %v553 = vld [vmem:[%s1 + $0x7d0] sm:$0xff]
  %v554 = vld [vmem:[%s1 + $0x7d8] sm:$0xff]
  %v555 = vld [vmem:[%s1 + $0x7e0] sm:$0xff]
  %v556 = vld [vmem:[%s1 + $0x7e8] sm:$0xff]
  %v557 = vld [vmem:[%s1 + $0x7f0] sm:$0xff]
  %v558 = vld [vmem:[%s1 + $0x7f8] sm:$0xff]
  %v559 = vld [vmem:[%s1 + $0x800] sm:$0xff]
  %v560 = vld [vmem:[%s1 + $0x808] sm:$0xff]
  %v561 = vld [vmem:[%s1 + $0x810] sm:$0xff]
  %v562 = vld [vmem:[%s1 + $0x818] sm:$0xff]
  %v563 = vld [vmem:[%s1 + $0x820] sm:$0xff]
  %v564 = vld [vmem:[%s1 + $0x828] sm:$0xff]
  %v565 = vld [vmem:[%s1 + $0x830] sm:$0xff]
  %v566 = vld [vmem:[%s1 + $0x838] sm:$0xff]
  %v567 = vld [vmem:[%s1 + $0x840] sm:$0xff]
  %v568 = vld [vmem:[%s1 + $0x848] sm:$0xff]
  %v569 = vld [vmem:[%s1 + $0x850] sm:$0xff]
  %v570 = vld [vmem:[%s1 + $0x858] sm:$0xff]
  %v571 = vld [vmem:[%s1 + $0x860] sm:$0xff]
  %v572 = vld [vmem:[%s1 + $0x868] sm:$0xff]
  %v573 = vld [vmem:[%s1 + $0x870] sm:$0xff]
  %v574 = vld [vmem:[%s1 + $0x878] sm:$0xff]
  %v575 = vld [vmem:[%s1 + $0x880] sm:$0xff]
  %v576 = vld [vmem:[%s1 + $0x888] sm:$0xff]
  %v577 = vld [vmem:[%s1 + $0x890] sm:$0xff]
  %v578 = vld [vmem:[%s1 + $0x898] sm:$0xff]
  %v579 = vld [vmem:[%s1 + $0x8a0] sm:$0xff]
  %v580 = vld [vmem:[%s1 + $0x8a8] sm:$0xff]
  %v581 = vld [vmem:[%s1 + $0x8b0] sm:$0xff]
  %v582 = vld [vmem:[%s1 + $0x8b8] sm:$0xff]
  %v583 = vld [vmem:[%s1 + $0x8c0] sm:$0xff]
  %v584 = vld [vmem:[%s1 + $0x8c8] sm:$0xff]
  %v585 = vld [vmem:[%s1 + $0x8d0] sm:$0xff]
  %v586 = vld [vmem:[%s1 + $0x8d8] sm:$0xff]
  %v587 = vld [vmem:[%s1 + $0x8e0] sm:$0xff]
  %v588 = vld [vmem:[%s1 + $0x8e8] sm:$0xff]
  %v589 = vld [vmem:[%s1 + $0x8f0] sm:$0xff]
  %v590 = vld [vmem:[%s1 + $0x8f8] sm:$0xff]
  %592 = vset.pattern.permute.xlu0 0
  %593 = vperm.xlu0 %592, %v303
  %v594 = vpop.permute.xlu0 %593
  %597 = vset.pattern.permute.xlu0 0
  %598 = vperm.xlu0 %597, %v304
  %v599 = vpop.permute.xlu0 %598
  %602 = vset.pattern.permute.xlu0 0
  %603 = vperm.xlu0 %602, %v305
  %v604 = vpop.permute.xlu0 %603
  %607 = vset.pattern.permute.xlu0 0
  %608 = vperm.xlu0 %607, %v306
  %v609 = vpop.permute.xlu0 %608
  %612 = vset.pattern.permute.xlu0 0
  %613 = vperm.xlu0 %612, %v307
  %v614 = vpop.permute.xlu0 %613
  %617 = vset.pattern.permute.xlu0 0
  %618 = vperm.xlu0 %617, %v308
  %v619 = vpop.permute.xlu0 %618
  %622 = vset.pattern.permute.xlu0 0
  %623 = vperm.xlu0 %622, %v309
  %v624 = vpop.permute.xlu0 %623
  %627 = vset.pattern.permute.xlu0 0
  %628 = vperm.xlu0 %627, %v310
  %v629 = vpop.permute.xlu0 %628
  %632 = vset.pattern.permute.xlu0 0
  %633 = vperm.xlu0 %632, %v311
  %v634 = vpop.permute.xlu0 %633
  %637 = vset.pattern.permute.xlu0 0
  %638 = vperm.xlu0 %637, %v312
  %v639 = vpop.permute.xlu0 %638
  %642 = vset.pattern.permute.xlu0 0
  %643 = vperm.xlu0 %642, %v313
  %v644 = vpop.permute.xlu0 %643
  %647 = vset.pattern.permute.xlu0 0
  %648 = vperm.xlu0 %647, %v314
  %v649 = vpop.permute.xlu0 %648
  %652 = vset.pattern.permute.xlu0 0
  %653 = vperm.xlu0 %652, %v315
  %v654 = vpop.permute.xlu0 %653
  %657 = vset.pattern.permute.xlu0 0
  %658 = vperm.xlu0 %657, %v316
  %v659 = vpop.permute.xlu0 %658
  %662 = vset.pattern.permute.xlu0 0
  %663 = vperm.xlu0 %662, %v317
  %v664 = vpop.permute.xlu0 %663
  %667 = vset.pattern.permute.xlu0 0
  %668 = vperm.xlu0 %667, %v318
  %v669 = vpop.permute.xlu0 %668
  %672 = vset.pattern.permute.xlu0 0
  %673 = vperm.xlu0 %672, %v319
  %v674 = vpop.permute.xlu0 %673
  %677 = vset.pattern.permute.xlu0 0
  %678 = vperm.xlu0 %677, %v320
  %v679 = vpop.permute.xlu0 %678
  %682 = vset.pattern.permute.xlu0 0
  %683 = vperm.xlu0 %682, %v321
  %v684 = vpop.permute.xlu0 %683
  %687 = vset.pattern.permute.xlu0 0
  %688 = vperm.xlu0 %687, %v322
  %v689 = vpop.permute.xlu0 %688
  %692 = vset.pattern.permute.xlu0 0
  %693 = vperm.xlu0 %692, %v323
  %v694 = vpop.permute.xlu0 %693
  %697 = vset.pattern.permute.xlu0 0
  %698 = vperm.xlu0 %697, %v324
  %v699 = vpop.permute.xlu0 %698
  %702 = vset.pattern.permute.xlu0 0
  %703 = vperm.xlu0 %702, %v325
  %v704 = vpop.permute.xlu0 %703
  %707 = vset.pattern.permute.xlu0 0
  %708 = vperm.xlu0 %707, %v326
  %v709 = vpop.permute.xlu0 %708
  %712 = vset.pattern.permute.xlu0 0
  %713 = vperm.xlu0 %712, %v327
  %v714 = vpop.permute.xlu0 %713
  %717 = vset.pattern.permute.xlu0 0
  %718 = vperm.xlu0 %717, %v328
  %v719 = vpop.permute.xlu0 %718
  %722 = vset.pattern.permute.xlu0 0
  %723 = vperm.xlu0 %722, %v329
  %v724 = vpop.permute.xlu0 %723
  %727 = vset.pattern.permute.xlu0 0
  %728 = vperm.xlu0 %727, %v330
  %v729 = vpop.permute.xlu0 %728
  %732 = vset.pattern.permute.xlu0 0
  %733 = vperm.xlu0 %732, %v331
  %v734 = vpop.permute.xlu0 %733
  %737 = vset.pattern.permute.xlu0 0
  %738 = vperm.xlu0 %737, %v332
  %v739 = vpop.permute.xlu0 %738
  %742 = vset.pattern.permute.xlu0 0
  %743 = vperm.xlu0 %742, %v333
  %v744 = vpop.permute.xlu0 %743
  %747 = vset.pattern.permute.xlu0 0
  %748 = vperm.xlu0 %747, %v334
  %v749 = vpop.permute.xlu0 %748
  %752 = vset.pattern.permute.xlu0 0
  %753 = vperm.xlu0 %752, %v335
  %v754 = vpop.permute.xlu0 %753
  %757 = vset.pattern.permute.xlu0 0
  %758 = vperm.xlu0 %757, %v336
  %v759 = vpop.permute.xlu0 %758
  %762 = vset.pattern.permute.xlu0 0
  %763 = vperm.xlu0 %762, %v337
  %v764 = vpop.permute.xlu0 %763
  %767 = vset.pattern.permute.xlu0 0
  %768 = vperm.xlu0 %767, %v338
  %v769 = vpop.permute.xlu0 %768
  %772 = vset.pattern.permute.xlu0 0
  %773 = vperm.xlu0 %772, %v339
  %v774 = vpop.permute.xlu0 %773
  %777 = vset.pattern.permute.xlu0 0
  %778 = vperm.xlu0 %777, %v340
  %v779 = vpop.permute.xlu0 %778
  %782 = vset.pattern.permute.xlu0 0
  %783 = vperm.xlu0 %782, %v341
  %v784 = vpop.permute.xlu0 %783
  %787 = vset.pattern.permute.xlu0 0
  %788 = vperm.xlu0 %787, %v342
  %v789 = vpop.permute.xlu0 %788
  %792 = vset.pattern.permute.xlu0 0
  %793 = vperm.xlu0 %792, %v343
  %v794 = vpop.permute.xlu0 %793
  %797 = vset.pattern.permute.xlu0 0
  %798 = vperm.xlu0 %797, %v344
  %v799 = vpop.permute.xlu0 %798
  %802 = vset.pattern.permute.xlu0 0
  %803 = vperm.xlu0 %802, %v345
  %v804 = vpop.permute.xlu0 %803
  %807 = vset.pattern.permute.xlu0 0
  %808 = vperm.xlu0 %807, %v346
  %v809 = vpop.permute.xlu0 %808
  %812 = vset.pattern.permute.xlu0 0
  %813 = vperm.xlu0 %812, %v347
  %v814 = vpop.permute.xlu0 %813
  %817 = vset.pattern.permute.xlu0 0
  %818 = vperm.xlu0 %817, %v348
  %v819 = vpop.permute.xlu0 %818
  %822 = vset.pattern.permute.xlu0 0
  %823 = vperm.xlu0 %822, %v349
  %v824 = vpop.permute.xlu0 %823
  %827 = vset.pattern.permute.xlu0 0
  %828 = vperm.xlu0 %827, %v350
  %v829 = vpop.permute.xlu0 %828
  %832 = vset.pattern.permute.xlu0 0
  %833 = vperm.xlu0 %832, %v351
  %v834 = vpop.permute.xlu0 %833
  %837 = vset.pattern.permute.xlu0 0
  %838 = vperm.xlu0 %837, %v352
  %v839 = vpop.permute.xlu0 %838
  %842 = vset.pattern.permute.xlu0 0
  %843 = vperm.xlu0 %842, %v353
  %v844 = vpop.permute.xlu0 %843
  %847 = vset.pattern.permute.xlu0 0
  %848 = vperm.xlu0 %847, %v354
  %v849 = vpop.permute.xlu0 %848
  %852 = vset.pattern.permute.xlu0 0
  %853 = vperm.xlu0 %852, %v355
  %v854 = vpop.permute.xlu0 %853
  %857 = vset.pattern.permute.xlu0 0
  %858 = vperm.xlu0 %857, %v356
  %v859 = vpop.permute.xlu0 %858
  %862 = vset.pattern.permute.xlu0 0
  %863 = vperm.xlu0 %862, %v357
  %v864 = vpop.permute.xlu0 %863
  %867 = vset.pattern.permute.xlu0 0
  %868 = vperm.xlu0 %867, %v358
  %v869 = vpop.permute.xlu0 %868
  %872 = vset.pattern.permute.xlu0 0
  %873 = vperm.xlu0 %872, %v359
  %v874 = vpop.permute.xlu0 %873
  %877 = vset.pattern.permute.xlu0 0
  %878 = vperm.xlu0 %877, %v360
  %v879 = vpop.permute.xlu0 %878
  %882 = vset.pattern.permute.xlu0 0
  %883 = vperm.xlu0 %882, %v361
  %v884 = vpop.permute.xlu0 %883
  %887 = vset.pattern.permute.xlu0 0
  %888 = vperm.xlu0 %887, %v362
  %v889 = vpop.permute.xlu0 %888
  %892 = vset.pattern.permute.xlu0 0
  %893 = vperm.xlu0 %892, %v363
  %v894 = vpop.permute.xlu0 %893
  %897 = vset.pattern.permute.xlu0 0
  %898 = vperm.xlu0 %897, %v364
  %v899 = vpop.permute.xlu0 %898
  %902 = vset.pattern.permute.xlu0 0
  %903 = vperm.xlu0 %902, %v365
  %v904 = vpop.permute.xlu0 %903
  %907 = vset.pattern.permute.xlu0 0
  %908 = vperm.xlu0 %907, %v366
  %v909 = vpop.permute.xlu0 %908
  %912 = vset.pattern.permute.xlu0 0
  %913 = vperm.xlu0 %912, %v367
  %v914 = vpop.permute.xlu0 %913
  %917 = vset.pattern.permute.xlu0 0
  %918 = vperm.xlu0 %917, %v368
  %v919 = vpop.permute.xlu0 %918
  %922 = vset.pattern.permute.xlu0 0
  %923 = vperm.xlu0 %922, %v369
  %v924 = vpop.permute.xlu0 %923
  %927 = vset.pattern.permute.xlu0 0
  %928 = vperm.xlu0 %927, %v370
  %v929 = vpop.permute.xlu0 %928
  %932 = vset.pattern.permute.xlu0 0
  %933 = vperm.xlu0 %932, %v371
  %v934 = vpop.permute.xlu0 %933
  %937 = vset.pattern.permute.xlu0 0
  %938 = vperm.xlu0 %937, %v372
  %v939 = vpop.permute.xlu0 %938
  %942 = vset.pattern.permute.xlu0 0
  %943 = vperm.xlu0 %942, %v373
  %v944 = vpop.permute.xlu0 %943
  %947 = vset.pattern.permute.xlu0 0
  %948 = vperm.xlu0 %947, %v374
  %v949 = vpop.permute.xlu0 %948
  %952 = vset.pattern.permute.xlu0 0
  %953 = vperm.xlu0 %952, %v375
  %v954 = vpop.permute.xlu0 %953
  %957 = vset.pattern.permute.xlu0 0
  %958 = vperm.xlu0 %957, %v376
  %v959 = vpop.permute.xlu0 %958
  %962 = vset.pattern.permute.xlu0 0
  %963 = vperm.xlu0 %962, %v377
  %v964 = vpop.permute.xlu0 %963
  %967 = vset.pattern.permute.xlu0 0
  %968 = vperm.xlu0 %967, %v378
  %v969 = vpop.permute.xlu0 %968
  %972 = vset.pattern.permute.xlu0 0
  %973 = vperm.xlu0 %972, %v379
  %v974 = vpop.permute.xlu0 %973
  %977 = vset.pattern.permute.xlu0 0
  %978 = vperm.xlu0 %977, %v380
  %v979 = vpop.permute.xlu0 %978
  %982 = vset.pattern.permute.xlu0 0
  %983 = vperm.xlu0 %982, %v381
  %v984 = vpop.permute.xlu0 %983
  %987 = vset.pattern.permute.xlu0 0
  %988 = vperm.xlu0 %987, %v382
  %v989 = vpop.permute.xlu0 %988
  %992 = vset.pattern.permute.xlu0 0
  %993 = vperm.xlu0 %992, %v383
  %v994 = vpop.permute.xlu0 %993
  %997 = vset.pattern.permute.xlu0 0
  %998 = vperm.xlu0 %997, %v384
  %v999 = vpop.permute.xlu0 %998
  %1002 = vset.pattern.permute.xlu0 0
  %1003 = vperm.xlu0 %1002, %v385
  %v1004 = vpop.permute.xlu0 %1003
  %1007 = vset.pattern.permute.xlu0 0
  %1008 = vperm.xlu0 %1007, %v386
  %v1009 = vpop.permute.xlu0 %1008
  %1012 = vset.pattern.permute.xlu0 0
  %1013 = vperm.xlu0 %1012, %v387
  %v1014 = vpop.permute.xlu0 %1013
  %1017 = vset.pattern.permute.xlu0 0
  %1018 = vperm.xlu0 %1017, %v388
  %v1019 = vpop.permute.xlu0 %1018
  %1022 = vset.pattern.permute.xlu0 0
  %1023 = vperm.xlu0 %1022, %v389
  %v1024 = vpop.permute.xlu0 %1023
  %1027 = vset.pattern.permute.xlu0 0
  %1028 = vperm.xlu0 %1027, %v390
  %v1029 = vpop.permute.xlu0 %1028
  %1032 = vset.pattern.permute.xlu0 0
  %1033 = vperm.xlu0 %1032, %v391
  %v1034 = vpop.permute.xlu0 %1033
  %1037 = vset.pattern.permute.xlu0 0
  %1038 = vperm.xlu0 %1037, %v392
  %v1039 = vpop.permute.xlu0 %1038
  %1042 = vset.pattern.permute.xlu0 0
  %1043 = vperm.xlu0 %1042, %v393
  %v1044 = vpop.permute.xlu0 %1043
  %1047 = vset.pattern.permute.xlu0 0
  %1048 = vperm.xlu0 %1047, %v394
  %v1049 = vpop.permute.xlu0 %1048
  %1052 = vset.pattern.permute.xlu0 0
  %1053 = vperm.xlu0 %1052, %v395
  %v1054 = vpop.permute.xlu0 %1053
  %1057 = vset.pattern.permute.xlu0 0
  %1058 = vperm.xlu0 %1057, %v396
  %v1059 = vpop.permute.xlu0 %1058
  %1062 = vset.pattern.permute.xlu0 0
  %1063 = vperm.xlu0 %1062, %v397
  %v1064 = vpop.permute.xlu0 %1063
  %1067 = vset.pattern.permute.xlu0 0
  %1068 = vperm.xlu0 %1067, %v398
  %v1069 = vpop.permute.xlu0 %1068
  %1072 = vset.pattern.permute.xlu0 0
  %1073 = vperm.xlu0 %1072, %v399
  %v1074 = vpop.permute.xlu0 %1073
  %1077 = vset.pattern.permute.xlu0 0
  %1078 = vperm.xlu0 %1077, %v400
  %v1079 = vpop.permute.xlu0 %1078
  %1082 = vset.pattern.permute.xlu0 0
  %1083 = vperm.xlu0 %1082, %v401
  %v1084 = vpop.permute.xlu0 %1083
  %1087 = vset.pattern.permute.xlu0 0
  %1088 = vperm.xlu0 %1087, %v402
  %v1089 = vpop.permute.xlu0 %1088
  %1092 = vset.pattern.permute.xlu0 0
  %1093 = vperm.xlu0 %1092, %v403
  %v1094 = vpop.permute.xlu0 %1093
  %1097 = vset.pattern.permute.xlu0 0
  %1098 = vperm.xlu0 %1097, %v404
  %v1099 = vpop.permute.xlu0 %1098
  %1102 = vset.pattern.permute.xlu0 0
  %1103 = vperm.xlu0 %1102, %v405
  %v1104 = vpop.permute.xlu0 %1103
  %1107 = vset.pattern.permute.xlu0 0
  %1108 = vperm.xlu0 %1107, %v406
  %v1109 = vpop.permute.xlu0 %1108
  %1112 = vset.pattern.permute.xlu0 0
  %1113 = vperm.xlu0 %1112, %v407
  %v1114 = vpop.permute.xlu0 %1113
  %1117 = vset.pattern.permute.xlu0 0
  %1118 = vperm.xlu0 %1117, %v408
  %v1119 = vpop.permute.xlu0 %1118
  %1122 = vset.pattern.permute.xlu0 0
  %1123 = vperm.xlu0 %1122, %v409
  %v1124 = vpop.permute.xlu0 %1123
  %1127 = vset.pattern.permute.xlu0 0
  %1128 = vperm.xlu0 %1127, %v410
  %v1129 = vpop.permute.xlu0 %1128
  %1132 = vset.pattern.permute.xlu0 0
  %1133 = vperm.xlu0 %1132, %v411
  %v1134 = vpop.permute.xlu0 %1133
  %1137 = vset.pattern.permute.xlu0 0
  %1138 = vperm.xlu0 %1137, %v412
  %v1139 = vpop.permute.xlu0 %1138
  %1142 = vset.pattern.permute.xlu0 0
  %1143 = vperm.xlu0 %1142, %v413
  %v1144 = vpop.permute.xlu0 %1143
  %1147 = vset.pattern.permute.xlu0 0
  %1148 = vperm.xlu0 %1147, %v414
  %v1149 = vpop.permute.xlu0 %1148
  %1152 = vset.pattern.permute.xlu0 0
  %1153 = vperm.xlu0 %1152, %v415
  %v1154 = vpop.permute.xlu0 %1153
  %1157 = vset.pattern.permute.xlu0 0
  %1158 = vperm.xlu0 %1157, %v416
  %v1159 = vpop.permute.xlu0 %1158
  %1162 = vset.pattern.permute.xlu0 0
  %1163 = vperm.xlu0 %1162, %v417
  %v1164 = vpop.permute.xlu0 %1163
  %1167 = vset.pattern.permute.xlu0 0
  %1168 = vperm.xlu0 %1167, %v418
  %v1169 = vpop.permute.xlu0 %1168
  %1172 = vset.pattern.permute.xlu0 0
  %1173 = vperm.xlu0 %1172, %v419
  %v1174 = vpop.permute.xlu0 %1173
  %1177 = vset.pattern.permute.xlu0 0
  %1178 = vperm.xlu0 %1177, %v420
  %v1179 = vpop.permute.xlu0 %1178
  %1182 = vset.pattern.permute.xlu0 0
  %1183 = vperm.xlu0 %1182, %v421
  %v1184 = vpop.permute.xlu0 %1183
  %1187 = vset.pattern.permute.xlu0 0
  %1188 = vperm.xlu0 %1187, %v422
  %v1189 = vpop.permute.xlu0 %1188
  %1192 = vset.pattern.permute.xlu0 0
  %1193 = vperm.xlu0 %1192, %v423
  %v1194 = vpop.permute.xlu0 %1193
  %1197 = vset.pattern.permute.xlu0 0
  %1198 = vperm.xlu0 %1197, %v424
  %v1199 = vpop.permute.xlu0 %1198
  %1202 = vset.pattern.permute.xlu0 0
  %1203 = vperm.xlu0 %1202, %v425
  %v1204 = vpop.permute.xlu0 %1203
  %1207 = vset.pattern.permute.xlu0 0
  %1208 = vperm.xlu0 %1207, %v426
  %v1209 = vpop.permute.xlu0 %1208
  %1212 = vset.pattern.permute.xlu0 0
  %1213 = vperm.xlu0 %1212, %v427
  %v1214 = vpop.permute.xlu0 %1213
  %1217 = vset.pattern.permute.xlu0 0
  %1218 = vperm.xlu0 %1217, %v428
  %v1219 = vpop.permute.xlu0 %1218
  %1222 = vset.pattern.permute.xlu0 0
  %1223 = vperm.xlu0 %1222, %v429
  %v1224 = vpop.permute.xlu0 %1223
  %1227 = vset.pattern.permute.xlu0 0
  %1228 = vperm.xlu0 %1227, %v430
  %v1229 = vpop.permute.xlu0 %1228
  %1232 = vset.pattern.permute.xlu0 0
  %1233 = vperm.xlu0 %1232, %v431
  %v1234 = vpop.permute.xlu0 %1233
  %1237 = vset.pattern.permute.xlu0 0
  %1238 = vperm.xlu0 %1237, %v432
  %v1239 = vpop.permute.xlu0 %1238
  %1242 = vset.pattern.permute.xlu0 0
  %1243 = vperm.xlu0 %1242, %v433
  %v1244 = vpop.permute.xlu0 %1243
  %1247 = vset.pattern.permute.xlu0 0
  %1248 = vperm.xlu0 %1247, %v434
  %v1249 = vpop.permute.xlu0 %1248
  %1252 = vset.pattern.permute.xlu0 0
  %1253 = vperm.xlu0 %1252, %v435
  %v1254 = vpop.permute.xlu0 %1253
  %1257 = vset.pattern.permute.xlu0 0
  %1258 = vperm.xlu0 %1257, %v436
  %v1259 = vpop.permute.xlu0 %1258
  %1262 = vset.pattern.permute.xlu0 0
  %1263 = vperm.xlu0 %1262, %v437
  %v1264 = vpop.permute.xlu0 %1263
  %1267 = vset.pattern.permute.xlu0 0
  %1268 = vperm.xlu0 %1267, %v438
  %v1269 = vpop.permute.xlu0 %1268
  %1272 = vset.pattern.permute.xlu0 0
  %1273 = vperm.xlu0 %1272, %v439
  %v1274 = vpop.permute.xlu0 %1273
  %1277 = vset.pattern.permute.xlu0 0
  %1278 = vperm.xlu0 %1277, %v440
  %v1279 = vpop.permute.xlu0 %1278
  %1282 = vset.pattern.permute.xlu0 0
  %1283 = vperm.xlu0 %1282, %v441
  %v1284 = vpop.permute.xlu0 %1283
  %1287 = vset.pattern.permute.xlu0 0
  %1288 = vperm.xlu0 %1287, %v442
  %v1289 = vpop.permute.xlu0 %1288
  %1292 = vset.pattern.permute.xlu0 0
  %1293 = vperm.xlu0 %1292, %v443
  %v1294 = vpop.permute.xlu0 %1293
  %1297 = vset.pattern.permute.xlu0 0
  %1298 = vperm.xlu0 %1297, %v444
  %v1299 = vpop.permute.xlu0 %1298
  %1302 = vset.pattern.permute.xlu0 0
  %1303 = vperm.xlu0 %1302, %v445
  %v1304 = vpop.permute.xlu0 %1303
  %1307 = vset.pattern.permute.xlu0 0
  %1308 = vperm.xlu0 %1307, %v446
  %v1309 = vpop.permute.xlu0 %1308
  %1312 = vset.pattern.permute.xlu0 0
  %1313 = vperm.xlu0 %1312, %v447
  %v1314 = vpop.permute.xlu0 %1313
  %1317 = vset.pattern.permute.xlu0 0
  %1318 = vperm.xlu0 %1317, %v448
  %v1319 = vpop.permute.xlu0 %1318
  %1322 = vset.pattern.permute.xlu0 0
  %1323 = vperm.xlu0 %1322, %v449
  %v1324 = vpop.permute.xlu0 %1323
  %1327 = vset.pattern.permute.xlu0 0
  %1328 = vperm.xlu0 %1327, %v450
  %v1329 = vpop.permute.xlu0 %1328
  %1332 = vset.pattern.permute.xlu0 0
  %1333 = vperm.xlu0 %1332, %v451
  %v1334 = vpop.permute.xlu0 %1333
  %1337 = vset.pattern.permute.xlu0 0
  %1338 = vperm.xlu0 %1337, %v452
  %v1339 = vpop.permute.xlu0 %1338
  %1342 = vset.pattern.permute.xlu0 0
  %1343 = vperm.xlu0 %1342, %v453
  %v1344 = vpop.permute.xlu0 %1343
  %1347 = vset.pattern.permute.xlu0 0
  %1348 = vperm.xlu0 %1347, %v454
  %v1349 = vpop.permute.xlu0 %1348
  %1352 = vset.pattern.permute.xlu0 0
  %1353 = vperm.xlu0 %1352, %v455
  %v1354 = vpop.permute.xlu0 %1353
  %1357 = vset.pattern.permute.xlu0 0
  %1358 = vperm.xlu0 %1357, %v456
  %v1359 = vpop.permute.xlu0 %1358
  %1362 = vset.pattern.permute.xlu0 0
  %1363 = vperm.xlu0 %1362, %v457
  %v1364 = vpop.permute.xlu0 %1363
  %1367 = vset.pattern.permute.xlu0 0
  %1368 = vperm.xlu0 %1367, %v458
  %v1369 = vpop.permute.xlu0 %1368
  %1372 = vset.pattern.permute.xlu0 0
  %1373 = vperm.xlu0 %1372, %v459
  %v1374 = vpop.permute.xlu0 %1373
  %1377 = vset.pattern.permute.xlu0 0
  %1378 = vperm.xlu0 %1377, %v460
  %v1379 = vpop.permute.xlu0 %1378
  %1382 = vset.pattern.permute.xlu0 0
  %1383 = vperm.xlu0 %1382, %v461
  %v1384 = vpop.permute.xlu0 %1383
  %1387 = vset.pattern.permute.xlu0 0
  %1388 = vperm.xlu0 %1387, %v462
  %v1389 = vpop.permute.xlu0 %1388
  %1392 = vset.pattern.permute.xlu0 0
  %1393 = vperm.xlu0 %1392, %v463
  %v1394 = vpop.permute.xlu0 %1393
  %1397 = vset.pattern.permute.xlu0 0
  %1398 = vperm.xlu0 %1397, %v464
  %v1399 = vpop.permute.xlu0 %1398
  %1402 = vset.pattern.permute.xlu0 0
  %1403 = vperm.xlu0 %1402, %v465
  %v1404 = vpop.permute.xlu0 %1403
  %1407 = vset.pattern.permute.xlu0 0
  %1408 = vperm.xlu0 %1407, %v466
  %v1409 = vpop.permute.xlu0 %1408
  %1412 = vset.pattern.permute.xlu0 0
  %1413 = vperm.xlu0 %1412, %v467
  %v1414 = vpop.permute.xlu0 %1413
  %1417 = vset.pattern.permute.xlu0 0
  %1418 = vperm.xlu0 %1417, %v468
  %v1419 = vpop.permute.xlu0 %1418
  %1422 = vset.pattern.permute.xlu0 0
  %1423 = vperm.xlu0 %1422, %v469
  %v1424 = vpop.permute.xlu0 %1423
  %1427 = vset.pattern.permute.xlu0 0
  %1428 = vperm.xlu0 %1427, %v470
  %v1429 = vpop.permute.xlu0 %1428
  %1432 = vset.pattern.permute.xlu0 0
  %1433 = vperm.xlu0 %1432, %v471
  %v1434 = vpop.permute.xlu0 %1433
  %1437 = vset.pattern.permute.xlu0 0
  %1438 = vperm.xlu0 %1437, %v472
  %v1439 = vpop.permute.xlu0 %1438
  %1442 = vset.pattern.permute.xlu0 0
  %1443 = vperm.xlu0 %1442, %v473
  %v1444 = vpop.permute.xlu0 %1443
  %1447 = vset.pattern.permute.xlu0 0
  %1448 = vperm.xlu0 %1447, %v474
  %v1449 = vpop.permute.xlu0 %1448
  %1452 = vset.pattern.permute.xlu0 0
  %1453 = vperm.xlu0 %1452, %v475
  %v1454 = vpop.permute.xlu0 %1453
  %1457 = vset.pattern.permute.xlu0 0
  %1458 = vperm.xlu0 %1457, %v476
  %v1459 = vpop.permute.xlu0 %1458
  %1462 = vset.pattern.permute.xlu0 0
  %1463 = vperm.xlu0 %1462, %v477
  %v1464 = vpop.permute.xlu0 %1463
  %1467 = vset.pattern.permute.xlu0 0
  %1468 = vperm.xlu0 %1467, %v478
  %v1469 = vpop.permute.xlu0 %1468
  %1472 = vset.pattern.permute.xlu0 0
  %1473 = vperm.xlu0 %1472, %v479
  %v1474 = vpop.permute.xlu0 %1473
  %1477 = vset.pattern.permute.xlu0 0
  %1478 = vperm.xlu0 %1477, %v480
  %v1479 = vpop.permute.xlu0 %1478
  %1482 = vset.pattern.permute.xlu0 0
  %1483 = vperm.xlu0 %1482, %v481
  %v1484 = vpop.permute.xlu0 %1483
  %1487 = vset.pattern.permute.xlu0 0
  %1488 = vperm.xlu0 %1487, %v482
  %v1489 = vpop.permute.xlu0 %1488
  %1492 = vset.pattern.permute.xlu0 0
  %1493 = vperm.xlu0 %1492, %v483
  %v1494 = vpop.permute.xlu0 %1493
  %1497 = vset.pattern.permute.xlu0 0
  %1498 = vperm.xlu0 %1497, %v484
  %v1499 = vpop.permute.xlu0 %1498
  %1502 = vset.pattern.permute.xlu0 0
  %1503 = vperm.xlu0 %1502, %v485
  %v1504 = vpop.permute.xlu0 %1503
  %1507 = vset.pattern.permute.xlu0 0
  %1508 = vperm.xlu0 %1507, %v486
  %v1509 = vpop.permute.xlu0 %1508
  %1512 = vset.pattern.permute.xlu0 0
  %1513 = vperm.xlu0 %1512, %v487
  %v1514 = vpop.permute.xlu0 %1513
  %1517 = vset.pattern.permute.xlu0 0
  %1518 = vperm.xlu0 %1517, %v488
  %v1519 = vpop.permute.xlu0 %1518
  %1522 = vset.pattern.permute.xlu0 0
  %1523 = vperm.xlu0 %1522, %v489
  %v1524 = vpop.permute.xlu0 %1523
  %1527 = vset.pattern.permute.xlu0 0
  %1528 = vperm.xlu0 %1527, %v490
  %v1529 = vpop.permute.xlu0 %1528
  %1532 = vset.pattern.permute.xlu0 0
  %1533 = vperm.xlu0 %1532, %v491
  %v1534 = vpop.permute.xlu0 %1533
  %1537 = vset.pattern.permute.xlu0 0
  %1538 = vperm.xlu0 %1537, %v492
  %v1539 = vpop.permute.xlu0 %1538
  %1542 = vset.pattern.permute.xlu0 0
  %1543 = vperm.xlu0 %1542, %v493
  %v1544 = vpop.permute.xlu0 %1543
  %1547 = vset.pattern.permute.xlu0 0
  %1548 = vperm.xlu0 %1547, %v494
  %v1549 = vpop.permute.xlu0 %1548
  %1552 = vset.pattern.permute.xlu0 0
  %1553 = vperm.xlu0 %1552, %v495
  %v1554 = vpop.permute.xlu0 %1553
  %1557 = vset.pattern.permute.xlu0 0
  %1558 = vperm.xlu0 %1557, %v496
  %v1559 = vpop.permute.xlu0 %1558
  %1562 = vset.pattern.permute.xlu0 0
  %1563 = vperm.xlu0 %1562, %v497
  %v1564 = vpop.permute.xlu0 %1563
  %1567 = vset.pattern.permute.xlu0 0
  %1568 = vperm.xlu0 %1567, %v498
  %v1569 = vpop.permute.xlu0 %1568
  %1572 = vset.pattern.permute.xlu0 0
  %1573 = vperm.xlu0 %1572, %v499
  %v1574 = vpop.permute.xlu0 %1573
  %1577 = vset.pattern.permute.xlu0 0
  %1578 = vperm.xlu0 %1577, %v500
  %v1579 = vpop.permute.xlu0 %1578
  %1582 = vset.pattern.permute.xlu0 0
  %1583 = vperm.xlu0 %1582, %v501
  %v1584 = vpop.permute.xlu0 %1583
  %1587 = vset.pattern.permute.xlu0 0
  %1588 = vperm.xlu0 %1587, %v502
  %v1589 = vpop.permute.xlu0 %1588
  %1592 = vset.pattern.permute.xlu0 0
  %1593 = vperm.xlu0 %1592, %v503
  %v1594 = vpop.permute.xlu0 %1593
  %1597 = vset.pattern.permute.xlu0 0
  %1598 = vperm.xlu0 %1597, %v504
  %v1599 = vpop.permute.xlu0 %1598
  %1602 = vset.pattern.permute.xlu0 0
  %1603 = vperm.xlu0 %1602, %v505
  %v1604 = vpop.permute.xlu0 %1603
  %1607 = vset.pattern.permute.xlu0 0
  %1608 = vperm.xlu0 %1607, %v506
  %v1609 = vpop.permute.xlu0 %1608
  %1612 = vset.pattern.permute.xlu0 0
  %1613 = vperm.xlu0 %1612, %v507
  %v1614 = vpop.permute.xlu0 %1613
  %1617 = vset.pattern.permute.xlu0 0
  %1618 = vperm.xlu0 %1617, %v508
  %v1619 = vpop.permute.xlu0 %1618
  %1622 = vset.pattern.permute.xlu0 0
  %1623 = vperm.xlu0 %1622, %v509
  %v1624 = vpop.permute.xlu0 %1623
  %1627 = vset.pattern.permute.xlu0 0
  %1628 = vperm.xlu0 %1627, %v510
  %v1629 = vpop.permute.xlu0 %1628
  %1632 = vset.pattern.permute.xlu0 0
  %1633 = vperm.xlu0 %1632, %v511
  %v1634 = vpop.permute.xlu0 %1633
  %1637 = vset.pattern.permute.xlu0 0
  %1638 = vperm.xlu0 %1637, %v512
  %v1639 = vpop.permute.xlu0 %1638
  %1642 = vset.pattern.permute.xlu0 0
  %1643 = vperm.xlu0 %1642, %v513
  %v1644 = vpop.permute.xlu0 %1643
  %1647 = vset.pattern.permute.xlu0 0
  %1648 = vperm.xlu0 %1647, %v514
  %v1649 = vpop.permute.xlu0 %1648
  %1652 = vset.pattern.permute.xlu0 0
  %1653 = vperm.xlu0 %1652, %v515
  %v1654 = vpop.permute.xlu0 %1653
  %1657 = vset.pattern.permute.xlu0 0
  %1658 = vperm.xlu0 %1657, %v516
  %v1659 = vpop.permute.xlu0 %1658
  %1662 = vset.pattern.permute.xlu0 0
  %1663 = vperm.xlu0 %1662, %v517
  %v1664 = vpop.permute.xlu0 %1663
  %1667 = vset.pattern.permute.xlu0 0
  %1668 = vperm.xlu0 %1667, %v518
  %v1669 = vpop.permute.xlu0 %1668
  %1672 = vset.pattern.permute.xlu0 0
  %1673 = vperm.xlu0 %1672, %v519
  %v1674 = vpop.permute.xlu0 %1673
  %1677 = vset.pattern.permute.xlu0 0
  %1678 = vperm.xlu0 %1677, %v520
  %v1679 = vpop.permute.xlu0 %1678
  %1682 = vset.pattern.permute.xlu0 0
  %1683 = vperm.xlu0 %1682, %v521
  %v1684 = vpop.permute.xlu0 %1683
  %1687 = vset.pattern.permute.xlu0 0
  %1688 = vperm.xlu0 %1687, %v522
  %v1689 = vpop.permute.xlu0 %1688
  %1692 = vset.pattern.permute.xlu0 0
  %1693 = vperm.xlu0 %1692, %v523
  %v1694 = vpop.permute.xlu0 %1693
  %1697 = vset.pattern.permute.xlu0 0
  %1698 = vperm.xlu0 %1697, %v524
  %v1699 = vpop.permute.xlu0 %1698
  %1702 = vset.pattern.permute.xlu0 0
  %1703 = vperm.xlu0 %1702, %v525
  %v1704 = vpop.permute.xlu0 %1703
  %1707 = vset.pattern.permute.xlu0 0
  %1708 = vperm.xlu0 %1707, %v526
  %v1709 = vpop.permute.xlu0 %1708
  %1712 = vset.pattern.permute.xlu0 0
  %1713 = vperm.xlu0 %1712, %v527
  %v1714 = vpop.permute.xlu0 %1713
  %1717 = vset.pattern.permute.xlu0 0
  %1718 = vperm.xlu0 %1717, %v528
  %v1719 = vpop.permute.xlu0 %1718
  %1722 = vset.pattern.permute.xlu0 0
  %1723 = vperm.xlu0 %1722, %v529
  %v1724 = vpop.permute.xlu0 %1723
  %1727 = vset.pattern.permute.xlu0 0
  %1728 = vperm.xlu0 %1727, %v530
  %v1729 = vpop.permute.xlu0 %1728
  %1732 = vset.pattern.permute.xlu0 0
  %1733 = vperm.xlu0 %1732, %v531
  %v1734 = vpop.permute.xlu0 %1733
  %1737 = vset.pattern.permute.xlu0 0
  %1738 = vperm.xlu0 %1737, %v532
  %v1739 = vpop.permute.xlu0 %1738
  %1742 = vset.pattern.permute.xlu0 0
  %1743 = vperm.xlu0 %1742, %v533
  %v1744 = vpop.permute.xlu0 %1743
  %1747 = vset.pattern.permute.xlu0 0
  %1748 = vperm.xlu0 %1747, %v534
  %v1749 = vpop.permute.xlu0 %1748
  %1752 = vset.pattern.permute.xlu0 0
  %1753 = vperm.xlu0 %1752, %v535
  %v1754 = vpop.permute.xlu0 %1753
  %1757 = vset.pattern.permute.xlu0 0
  %1758 = vperm.xlu0 %1757, %v536
  %v1759 = vpop.permute.xlu0 %1758
  %1762 = vset.pattern.permute.xlu0 0
  %1763 = vperm.xlu0 %1762, %v537
  %v1764 = vpop.permute.xlu0 %1763
  %1767 = vset.pattern.permute.xlu0 0
  %1768 = vperm.xlu0 %1767, %v538
  %v1769 = vpop.permute.xlu0 %1768
  %1772 = vset.pattern.permute.xlu0 0
  %1773 = vperm.xlu0 %1772, %v539
  %v1774 = vpop.permute.xlu0 %1773
  %1777 = vset.pattern.permute.xlu0 0
  %1778 = vperm.xlu0 %1777, %v540
  %v1779 = vpop.permute.xlu0 %1778
  %1782 = vset.pattern.permute.xlu0 0
  %1783 = vperm.xlu0 %1782, %v541
  %v1784 = vpop.permute.xlu0 %1783
  %1787 = vset.pattern.permute.xlu0 0
  %1788 = vperm.xlu0 %1787, %v542
  %v1789 = vpop.permute.xlu0 %1788
  %1792 = vset.pattern.permute.xlu0 0
  %1793 = vperm.xlu0 %1792, %v543
  %v1794 = vpop.permute.xlu0 %1793
  %1797 = vset.pattern.permute.xlu0 0
  %1798 = vperm.xlu0 %1797, %v544
  %v1799 = vpop.permute.xlu0 %1798
  %1802 = vset.pattern.permute.xlu0 0
  %1803 = vperm.xlu0 %1802, %v545
  %v1804 = vpop.permute.xlu0 %1803
  %1807 = vset.pattern.permute.xlu0 0
  %1808 = vperm.xlu0 %1807, %v546
  %v1809 = vpop.permute.xlu0 %1808
  %1812 = vset.pattern.permute.xlu0 0
  %1813 = vperm.xlu0 %1812, %v547
  %v1814 = vpop.permute.xlu0 %1813
  %1817 = vset.pattern.permute.xlu0 0
  %1818 = vperm.xlu0 %1817, %v548
  %v1819 = vpop.permute.xlu0 %1818
  %1822 = vset.pattern.permute.xlu0 0
  %1823 = vperm.xlu0 %1822, %v549
  %v1824 = vpop.permute.xlu0 %1823
  %1827 = vset.pattern.permute.xlu0 0
  %1828 = vperm.xlu0 %1827, %v550
  %v1829 = vpop.permute.xlu0 %1828
  %1832 = vset.pattern.permute.xlu0 0
  %1833 = vperm.xlu0 %1832, %v551
  %v1834 = vpop.permute.xlu0 %1833
  %1837 = vset.pattern.permute.xlu0 0
  %1838 = vperm.xlu0 %1837, %v552
  %v1839 = vpop.permute.xlu0 %1838
  %1842 = vset.pattern.permute.xlu0 0
  %1843 = vperm.xlu0 %1842, %v553
  %v1844 = vpop.permute.xlu0 %1843
  %1847 = vset.pattern.permute.xlu0 0
  %1848 = vperm.xlu0 %1847, %v554
  %v1849 = vpop.permute.xlu0 %1848
  %1852 = vset.pattern.permute.xlu0 0
  %1853 = vperm.xlu0 %1852, %v555
  %v1854 = vpop.permute.xlu0 %1853
  %1857 = vset.pattern.permute.xlu0 0
  %1858 = vperm.xlu0 %1857, %v556
  %v1859 = vpop.permute.xlu0 %1858
  %1862 = vset.pattern.permute.xlu0 0
  %1863 = vperm.xlu0 %1862, %v557
  %v1864 = vpop.permute.xlu0 %1863
  %1867 = vset.pattern.permute.xlu0 0
  %1868 = vperm.xlu0 %1867, %v558
  %v1869 = vpop.permute.xlu0 %1868
  %1872 = vset.pattern.permute.xlu0 0
  %1873 = vperm.xlu0 %1872, %v559
  %v1874 = vpop.permute.xlu0 %1873
  %1877 = vset.pattern.permute.xlu0 0
  %1878 = vperm.xlu0 %1877, %v560
  %v1879 = vpop.permute.xlu0 %1878
  %1882 = vset.pattern.permute.xlu0 0
  %1883 = vperm.xlu0 %1882, %v561
  %v1884 = vpop.permute.xlu0 %1883
  %1887 = vset.pattern.permute.xlu0 0
  %1888 = vperm.xlu0 %1887, %v562
  %v1889 = vpop.permute.xlu0 %1888
  %1892 = vset.pattern.permute.xlu0 0
  %1893 = vperm.xlu0 %1892, %v563
  %v1894 = vpop.permute.xlu0 %1893
  %1897 = vset.pattern.permute.xlu0 0
  %1898 = vperm.xlu0 %1897, %v564
  %v1899 = vpop.permute.xlu0 %1898
  %1902 = vset.pattern.permute.xlu0 0
  %1903 = vperm.xlu0 %1902, %v565
  %v1904 = vpop.permute.xlu0 %1903
  %1907 = vset.pattern.permute.xlu0 0
  %1908 = vperm.xlu0 %1907, %v566
  %v1909 = vpop.permute.xlu0 %1908
  %1912 = vset.pattern.permute.xlu0 0
  %1913 = vperm.xlu0 %1912, %v567
  %v1914 = vpop.permute.xlu0 %1913
  %1917 = vset.pattern.permute.xlu0 0
  %1918 = vperm.xlu0 %1917, %v568
  %v1919 = vpop.permute.xlu0 %1918
  %1922 = vset.pattern.permute.xlu0 0
  %1923 = vperm.xlu0 %1922, %v569
  %v1924 = vpop.permute.xlu0 %1923
  %1927 = vset.pattern.permute.xlu0 0
  %1928 = vperm.xlu0 %1927, %v570
  %v1929 = vpop.permute.xlu0 %1928
  %1932 = vset.pattern.permute.xlu0 0
  %1933 = vperm.xlu0 %1932, %v571
  %v1934 = vpop.permute.xlu0 %1933
  %1937 = vset.pattern.permute.xlu0 0
  %1938 = vperm.xlu0 %1937, %v572
  %v1939 = vpop.permute.xlu0 %1938
  %1942 = vset.pattern.permute.xlu0 0
  %1943 = vperm.xlu0 %1942, %v573
  %v1944 = vpop.permute.xlu0 %1943
  %1947 = vset.pattern.permute.xlu0 0
  %1948 = vperm.xlu0 %1947, %v574
  %v1949 = vpop.permute.xlu0 %1948
  %1952 = vset.pattern.permute.xlu0 0
  %1953 = vperm.xlu0 %1952, %v575
  %v1954 = vpop.permute.xlu0 %1953
  %1957 = vset.pattern.permute.xlu0 0
  %1958 = vperm.xlu0 %1957, %v576
  %v1959 = vpop.permute.xlu0 %1958
  %1962 = vset.pattern.permute.xlu0 0
  %1963 = vperm.xlu0 %1962, %v577
  %v1964 = vpop.permute.xlu0 %1963
  %1967 = vset.pattern.permute.xlu0 0
  %1968 = vperm.xlu0 %1967, %v578
  %v1969 = vpop.permute.xlu0 %1968
  %1972 = vset.pattern.permute.xlu0 0
  %1973 = vperm.xlu0 %1972, %v579
  %v1974 = vpop.permute.xlu0 %1973
  %1977 = vset.pattern.permute.xlu0 0
  %1978 = vperm.xlu0 %1977, %v580
  %v1979 = vpop.permute.xlu0 %1978
  %1982 = vset.pattern.permute.xlu0 0
  %1983 = vperm.xlu0 %1982, %v581
  %v1984 = vpop.permute.xlu0 %1983
  %1987 = vset.pattern.permute.xlu0 0
  %1988 = vperm.xlu0 %1987, %v582
  %v1989 = vpop.permute.xlu0 %1988
  %1992 = vset.pattern.permute.xlu0 0
  %1993 = vperm.xlu0 %1992, %v583
  %v1994 = vpop.permute.xlu0 %1993
  %1997 = vset.pattern.permute.xlu0 0
  %1998 = vperm.xlu0 %1997, %v584
  %v1999 = vpop.permute.xlu0 %1998
  %2002 = vset.pattern.permute.xlu0 0
  %2003 = vperm.xlu0 %2002, %v585
  %v2004 = vpop.permute.xlu0 %2003
  %2007 = vset.pattern.permute.xlu0 0
  %2008 = vperm.xlu0 %2007, %v586
  %v2009 = vpop.permute.xlu0 %2008
  %2012 = vset.pattern.permute.xlu0 0
  %2013 = vperm.xlu0 %2012, %v587
  %v2014 = vpop.permute.xlu0 %2013
  %2017 = vset.pattern.permute.xlu0 0
  %2018 = vperm.xlu0 %2017, %v588
  %v2019 = vpop.permute.xlu0 %2018
  %2022 = vset.pattern.permute.xlu0 0
  %2023 = vperm.xlu0 %2022, %v589
  %v2024 = vpop.permute.xlu0 %2023
  %2027 = vset.pattern.permute.xlu0 0
  %2028 = vperm.xlu0 %2027, %v590
  %v2029 = vpop.permute.xlu0 %2028
  %v2031 = vmul.f32 %v15, %v594
  %v2032 = vmul.f32 %v16, %v599
  %v2033 = vmul.f32 %v17, %v604
  %v2034 = vmul.f32 %v18, %v609
  %v2035 = vmul.f32 %v19, %v614
  %v2036 = vmul.f32 %v20, %v619
  %v2037 = vmul.f32 %v21, %v624
  %v2038 = vmul.f32 %v22, %v629
  %v2039 = vmul.f32 %v23, %v634
  %v2040 = vmul.f32 %v24, %v639
  %v2041 = vmul.f32 %v25, %v644
  %v2042 = vmul.f32 %v26, %v649
  %v2043 = vmul.f32 %v27, %v654
  %v2044 = vmul.f32 %v28, %v659
  %v2045 = vmul.f32 %v29, %v664
  %v2046 = vmul.f32 %v30, %v669
  %v2047 = vmul.f32 %v31, %v674
  %v2048 = vmul.f32 %v32, %v679
  %v2049 = vmul.f32 %v33, %v684
  %v2050 = vmul.f32 %v34, %v689
  %v2051 = vmul.f32 %v35, %v694
  %v2052 = vmul.f32 %v36, %v699
  %v2053 = vmul.f32 %v37, %v704
  %v2054 = vmul.f32 %v38, %v709
  %v2055 = vmul.f32 %v39, %v714
  %v2056 = vmul.f32 %v40, %v719
  %v2057 = vmul.f32 %v41, %v724
  %v2058 = vmul.f32 %v42, %v729
  %v2059 = vmul.f32 %v43, %v734
  %v2060 = vmul.f32 %v44, %v739
  %v2061 = vmul.f32 %v45, %v744
  %v2062 = vmul.f32 %v46, %v749
  %v2063 = vmul.f32 %v47, %v754
  %v2064 = vmul.f32 %v48, %v759
  %v2065 = vmul.f32 %v49, %v764
  %v2066 = vmul.f32 %v50, %v769
  %v2067 = vmul.f32 %v51, %v774
  %v2068 = vmul.f32 %v52, %v779
  %v2069 = vmul.f32 %v53, %v784
  %v2070 = vmul.f32 %v54, %v789
  %v2071 = vmul.f32 %v55, %v794
  %v2072 = vmul.f32 %v56, %v799
  %v2073 = vmul.f32 %v57, %v804
  %v2074 = vmul.f32 %v58, %v809
  %v2075 = vmul.f32 %v59, %v814
  %v2076 = vmul.f32 %v60, %v819
  %v2077 = vmul.f32 %v61, %v824
  %v2078 = vmul.f32 %v62, %v829
  %v2079 = vmul.f32 %v63, %v834
  %v2080 = vmul.f32 %v64, %v839
  %v2081 = vmul.f32 %v65, %v844
  %v2082 = vmul.f32 %v66, %v849
  %v2083 = vmul.f32 %v67, %v854
  %v2084 = vmul.f32 %v68, %v859
  %v2085 = vmul.f32 %v69, %v864
  %v2086 = vmul.f32 %v70, %v869
  %v2087 = vmul.f32 %v71, %v874
  %v2088 = vmul.f32 %v72, %v879
  %v2089 = vmul.f32 %v73, %v884
  %v2090 = vmul.f32 %v74, %v889
  %v2091 = vmul.f32 %v75, %v894
  %v2092 = vmul.f32 %v76, %v899
  %v2093 = vmul.f32 %v77, %v904
  %v2094 = vmul.f32 %v78, %v909
  %v2095 = vmul.f32 %v79, %v914
  %v2096 = vmul.f32 %v80, %v919
  %v2097 = vmul.f32 %v81, %v924
  %v2098 = vmul.f32 %v82, %v929
  %v2099 = vmul.f32 %v83, %v934
  %v2100 = vmul.f32 %v84, %v939
  %v2101 = vmul.f32 %v85, %v944
  %v2102 = vmul.f32 %v86, %v949
  %v2103 = vmul.f32 %v87, %v954
  %v2104 = vmul.f32 %v88, %v959
  %v2105 = vmul.f32 %v89, %v964
  %v2106 = vmul.f32 %v90, %v969
  %v2107 = vmul.f32 %v91, %v974
  %v2108 = vmul.f32 %v92, %v979
  %v2109 = vmul.f32 %v93, %v984
  %v2110 = vmul.f32 %v94, %v989
  %v2111 = vmul.f32 %v95, %v994
  %v2112 = vmul.f32 %v96, %v999
  %v2113 = vmul.f32 %v97, %v1004
  %v2114 = vmul.f32 %v98, %v1009
  %v2115 = vmul.f32 %v99, %v1014
  %v2116 = vmul.f32 %v100, %v1019
  %v2117 = vmul.f32 %v101, %v1024
  %v2118 = vmul.f32 %v102, %v1029
  %v2119 = vmul.f32 %v103, %v1034
  %v2120 = vmul.f32 %v104, %v1039
  %v2121 = vmul.f32 %v105, %v1044
  %v2122 = vmul.f32 %v106, %v1049
  %v2123 = vmul.f32 %v107, %v1054
  %v2124 = vmul.f32 %v108, %v1059
  %v2125 = vmul.f32 %v109, %v1064
  %v2126 = vmul.f32 %v110, %v1069
  %v2127 = vmul.f32 %v111, %v1074
  %v2128 = vmul.f32 %v112, %v1079
  %v2129 = vmul.f32 %v113, %v1084
  %v2130 = vmul.f32 %v114, %v1089
  %v2131 = vmul.f32 %v115, %v1094
  %v2132 = vmul.f32 %v116, %v1099
  %v2133 = vmul.f32 %v117, %v1104
  %v2134 = vmul.f32 %v118, %v1109
  %v2135 = vmul.f32 %v119, %v1114
  %v2136 = vmul.f32 %v120, %v1119
  %v2137 = vmul.f32 %v121, %v1124
  %v2138 = vmul.f32 %v122, %v1129
  %v2139 = vmul.f32 %v123, %v1134
  %v2140 = vmul.f32 %v124, %v1139
  %v2141 = vmul.f32 %v125, %v1144
  %v2142 = vmul.f32 %v126, %v1149
  %v2143 = vmul.f32 %v127, %v1154
  %v2144 = vmul.f32 %v128, %v1159
  %v2145 = vmul.f32 %v129, %v1164
  %v2146 = vmul.f32 %v130, %v1169
  %v2147 = vmul.f32 %v131, %v1174
  %v2148 = vmul.f32 %v132, %v1179
  %v2149 = vmul.f32 %v133, %v1184
  %v2150 = vmul.f32 %v134, %v1189
  %v2151 = vmul.f32 %v135, %v1194
  %v2152 = vmul.f32 %v136, %v1199
  %v2153 = vmul.f32 %v137, %v1204
  %v2154 = vmul.f32 %v138, %v1209
  %v2155 = vmul.f32 %v139, %v1214
  %v2156 = vmul.f32 %v140, %v1219
  %v2157 = vmul.f32 %v141, %v1224
  %v2158 = vmul.f32 %v142, %v1229
  %v2159 = vmul.f32 %v143, %v1234
  %v2160 = vmul.f32 %v144, %v1239
  %v2161 = vmul.f32 %v145, %v1244
  %v2162 = vmul.f32 %v146, %v1249
  %v2163 = vmul.f32 %v147, %v1254
  %v2164 = vmul.f32 %v148, %v1259
  %v2165 = vmul.f32 %v149, %v1264
  %v2166 = vmul.f32 %v150, %v1269
  %v2167 = vmul.f32 %v151, %v1274
  %v2168 = vmul.f32 %v152, %v1279
  %v2169 = vmul.f32 %v153, %v1284
  %v2170 = vmul.f32 %v154, %v1289
  %v2171 = vmul.f32 %v155, %v1294
  %v2172 = vmul.f32 %v156, %v1299
  %v2173 = vmul.f32 %v157, %v1304
  %v2174 = vmul.f32 %v158, %v1309
  %v2175 = vmul.f32 %v159, %v1314
  %v2176 = vmul.f32 %v160, %v1319
  %v2177 = vmul.f32 %v161, %v1324
  %v2178 = vmul.f32 %v162, %v1329
  %v2179 = vmul.f32 %v163, %v1334
  %v2180 = vmul.f32 %v164, %v1339
  %v2181 = vmul.f32 %v165, %v1344
  %v2182 = vmul.f32 %v166, %v1349
  %v2183 = vmul.f32 %v167, %v1354
  %v2184 = vmul.f32 %v168, %v1359
  %v2185 = vmul.f32 %v169, %v1364
  %v2186 = vmul.f32 %v170, %v1369
  %v2187 = vmul.f32 %v171, %v1374
  %v2188 = vmul.f32 %v172, %v1379
  %v2189 = vmul.f32 %v173, %v1384
  %v2190 = vmul.f32 %v174, %v1389
  %v2191 = vmul.f32 %v175, %v1394
  %v2192 = vmul.f32 %v176, %v1399
  %v2193 = vmul.f32 %v177, %v1404
  %v2194 = vmul.f32 %v178, %v1409
  %v2195 = vmul.f32 %v179, %v1414
  %v2196 = vmul.f32 %v180, %v1419
  %v2197 = vmul.f32 %v181, %v1424
  %v2198 = vmul.f32 %v182, %v1429
  %v2199 = vmul.f32 %v183, %v1434
  %v2200 = vmul.f32 %v184, %v1439
  %v2201 = vmul.f32 %v185, %v1444
  %v2202 = vmul.f32 %v186, %v1449
  %v2203 = vmul.f32 %v187, %v1454
  %v2204 = vmul.f32 %v188, %v1459
  %v2205 = vmul.f32 %v189, %v1464
  %v2206 = vmul.f32 %v190, %v1469
  %v2207 = vmul.f32 %v191, %v1474
  %v2208 = vmul.f32 %v192, %v1479
  %v2209 = vmul.f32 %v193, %v1484
  %v2210 = vmul.f32 %v194, %v1489
  %v2211 = vmul.f32 %v195, %v1494
  %v2212 = vmul.f32 %v196, %v1499
  %v2213 = vmul.f32 %v197, %v1504
  %v2214 = vmul.f32 %v198, %v1509
  %v2215 = vmul.f32 %v199, %v1514
  %v2216 = vmul.f32 %v200, %v1519
  %v2217 = vmul.f32 %v201, %v1524
  %v2218 = vmul.f32 %v202, %v1529
  %v2219 = vmul.f32 %v203, %v1534
  %v2220 = vmul.f32 %v204, %v1539
  %v2221 = vmul.f32 %v205, %v1544
  %v2222 = vmul.f32 %v206, %v1549
  %v2223 = vmul.f32 %v207, %v1554
  %v2224 = vmul.f32 %v208, %v1559
  %v2225 = vmul.f32 %v209, %v1564
  %v2226 = vmul.f32 %v210, %v1569
  %v2227 = vmul.f32 %v211, %v1574
  %v2228 = vmul.f32 %v212, %v1579
  %v2229 = vmul.f32 %v213, %v1584
  %v2230 = vmul.f32 %v214, %v1589
  %v2231 = vmul.f32 %v215, %v1594
  %v2232 = vmul.f32 %v216, %v1599
  %v2233 = vmul.f32 %v217, %v1604
  %v2234 = vmul.f32 %v218, %v1609
  %v2235 = vmul.f32 %v219, %v1614
  %v2236 = vmul.f32 %v220, %v1619
  %v2237 = vmul.f32 %v221, %v1624
  %v2238 = vmul.f32 %v222, %v1629
  %v2239 = vmul.f32 %v223, %v1634
  %v2240 = vmul.f32 %v224, %v1639
  %v2241 = vmul.f32 %v225, %v1644
  %v2242 = vmul.f32 %v226, %v1649
  %v2243 = vmul.f32 %v227, %v1654
  %v2244 = vmul.f32 %v228, %v1659
  %v2245 = vmul.f32 %v229, %v1664
  %v2246 = vmul.f32 %v230, %v1669
  %v2247 = vmul.f32 %v231, %v1674
  %v2248 = vmul.f32 %v232, %v1679
  %v2249 = vmul.f32 %v233, %v1684
  %v2250 = vmul.f32 %v234, %v1689
  %v2251 = vmul.f32 %v235, %v1694
  %v2252 = vmul.f32 %v236, %v1699
  %v2253 = vmul.f32 %v237, %v1704
  %v2254 = vmul.f32 %v238, %v1709
  %v2255 = vmul.f32 %v239, %v1714
  %v2256 = vmul.f32 %v240, %v1719
  %v2257 = vmul.f32 %v241, %v1724
  %v2258 = vmul.f32 %v242, %v1729
  %v2259 = vmul.f32 %v243, %v1734
  %v2260 = vmul.f32 %v244, %v1739
  %v2261 = vmul.f32 %v245, %v1744
  %v2262 = vmul.f32 %v246, %v1749
  %v2263 = vmul.f32 %v247, %v1754
  %v2264 = vmul.f32 %v248, %v1759
  %v2265 = vmul.f32 %v249, %v1764
  %v2266 = vmul.f32 %v250, %v1769
  %v2267 = vmul.f32 %v251, %v1774
  %v2268 = vmul.f32 %v252, %v1779
  %v2269 = vmul.f32 %v253, %v1784
  %v2270 = vmul.f32 %v254, %v1789
  %v2271 = vmul.f32 %v255, %v1794
  %v2272 = vmul.f32 %v256, %v1799
  %v2273 = vmul.f32 %v257, %v1804
  %v2274 = vmul.f32 %v258, %v1809
  %v2275 = vmul.f32 %v259, %v1814
  %v2276 = vmul.f32 %v260, %v1819
  %v2277 = vmul.f32 %v261, %v1824
  %v2278 = vmul.f32 %v262, %v1829
  %v2279 = vmul.f32 %v263, %v1834
  %v2280 = vmul.f32 %v264, %v1839
  %v2281 = vmul.f32 %v265, %v1844
  %v2282 = vmul.f32 %v266, %v1849
  %v2283 = vmul.f32 %v267, %v1854
  %v2284 = vmul.f32 %v268, %v1859
  %v2285 = vmul.f32 %v269, %v1864
  %v2286 = vmul.f32 %v270, %v1869
  %v2287 = vmul.f32 %v271, %v1874
  %v2288 = vmul.f32 %v272, %v1879
  %v2289 = vmul.f32 %v273, %v1884
  %v2290 = vmul.f32 %v274, %v1889
  %v2291 = vmul.f32 %v275, %v1894
  %v2292 = vmul.f32 %v276, %v1899
  %v2293 = vmul.f32 %v277, %v1904
  %v2294 = vmul.f32 %v278, %v1909
  %v2295 = vmul.f32 %v279, %v1914
  %v2296 = vmul.f32 %v280, %v1919
  %v2297 = vmul.f32 %v281, %v1924
  %v2298 = vmul.f32 %v282, %v1929
  %v2299 = vmul.f32 %v283, %v1934
  %v2300 = vmul.f32 %v284, %v1939
  %v2301 = vmul.f32 %v285, %v1944
  %v2302 = vmul.f32 %v286, %v1949
  %v2303 = vmul.f32 %v287, %v1954
  %v2304 = vmul.f32 %v288, %v1959
  %v2305 = vmul.f32 %v289, %v1964
  %v2306 = vmul.f32 %v290, %v1969
  %v2307 = vmul.f32 %v291, %v1974
  %v2308 = vmul.f32 %v292, %v1979
  %v2309 = vmul.f32 %v293, %v1984
  %v2310 = vmul.f32 %v294, %v1989
  %v2311 = vmul.f32 %v295, %v1994
  %v2312 = vmul.f32 %v296, %v1999
  %v2313 = vmul.f32 %v297, %v2004
  %v2314 = vmul.f32 %v298, %v2009
  %v2315 = vmul.f32 %v299, %v2014
  %v2316 = vmul.f32 %v300, %v2019
  %v2317 = vmul.f32 %v301, %v2024
  %v2318 = vmul.f32 %v302, %v2029
  %v2319 = vpack.c.bf16 %v2032, %v2031
  %v2320 = vpack.c.bf16 %v2034, %v2033
  %v2321 = vpack.c.bf16 %v2036, %v2035
  %v2322 = vpack.c.bf16 %v2038, %v2037
  %v2323 = vpack.c.bf16 %v2040, %v2039
  %v2324 = vpack.c.bf16 %v2042, %v2041
  %v2325 = vpack.c.bf16 %v2044, %v2043
  %v2326 = vpack.c.bf16 %v2046, %v2045
  %v2327 = vpack.c.bf16 %v2048, %v2047
  %v2328 = vpack.c.bf16 %v2050, %v2049
  %v2329 = vpack.c.bf16 %v2052, %v2051
  %v2330 = vpack.c.bf16 %v2054, %v2053
  %v2331 = vpack.c.bf16 %v2056, %v2055
  %v2332 = vpack.c.bf16 %v2058, %v2057
  %v2333 = vpack.c.bf16 %v2060, %v2059
  %v2334 = vpack.c.bf16 %v2062, %v2061
  %v2335 = vpack.c.bf16 %v2064, %v2063
  %v2336 = vpack.c.bf16 %v2066, %v2065
  %v2337 = vpack.c.bf16 %v2068, %v2067
  %v2338 = vpack.c.bf16 %v2070, %v2069
  %v2339 = vpack.c.bf16 %v2072, %v2071
  %v2340 = vpack.c.bf16 %v2074, %v2073
  %v2341 = vpack.c.bf16 %v2076, %v2075
  %v2342 = vpack.c.bf16 %v2078, %v2077
  %v2343 = vpack.c.bf16 %v2080, %v2079
  %v2344 = vpack.c.bf16 %v2082, %v2081
  %v2345 = vpack.c.bf16 %v2084, %v2083
  %v2346 = vpack.c.bf16 %v2086, %v2085
  %v2347 = vpack.c.bf16 %v2088, %v2087
  %v2348 = vpack.c.bf16 %v2090, %v2089
  %v2349 = vpack.c.bf16 %v2092, %v2091
  %v2350 = vpack.c.bf16 %v2094, %v2093
  %v2351 = vpack.c.bf16 %v2096, %v2095
  %v2352 = vpack.c.bf16 %v2098, %v2097
  %v2353 = vpack.c.bf16 %v2100, %v2099
  %v2354 = vpack.c.bf16 %v2102, %v2101
  %v2355 = vpack.c.bf16 %v2104, %v2103
  %v2356 = vpack.c.bf16 %v2106, %v2105
  %v2357 = vpack.c.bf16 %v2108, %v2107
  %v2358 = vpack.c.bf16 %v2110, %v2109
  %v2359 = vpack.c.bf16 %v2112, %v2111
  %v2360 = vpack.c.bf16 %v2114, %v2113
  %v2361 = vpack.c.bf16 %v2116, %v2115
  %v2362 = vpack.c.bf16 %v2118, %v2117
  %v2363 = vpack.c.bf16 %v2120, %v2119
  %v2364 = vpack.c.bf16 %v2122, %v2121
  %v2365 = vpack.c.bf16 %v2124, %v2123
  %v2366 = vpack.c.bf16 %v2126, %v2125
  %v2367 = vpack.c.bf16 %v2128, %v2127
  %v2368 = vpack.c.bf16 %v2130, %v2129
  %v2369 = vpack.c.bf16 %v2132, %v2131
  %v2370 = vpack.c.bf16 %v2134, %v2133
  %v2371 = vpack.c.bf16 %v2136, %v2135
  %v2372 = vpack.c.bf16 %v2138, %v2137
  %v2373 = vpack.c.bf16 %v2140, %v2139
  %v2374 = vpack.c.bf16 %v2142, %v2141
  %v2375 = vpack.c.bf16 %v2144, %v2143
  %v2376 = vpack.c.bf16 %v2146, %v2145
  %v2377 = vpack.c.bf16 %v2148, %v2147
  %v2378 = vpack.c.bf16 %v2150, %v2149
  %v2379 = vpack.c.bf16 %v2152, %v2151
  %v2380 = vpack.c.bf16 %v2154, %v2153
  %v2381 = vpack.c.bf16 %v2156, %v2155
  %v2382 = vpack.c.bf16 %v2158, %v2157
  %v2383 = vpack.c.bf16 %v2160, %v2159
  %v2384 = vpack.c.bf16 %v2162, %v2161
  %v2385 = vpack.c.bf16 %v2164, %v2163
  %v2386 = vpack.c.bf16 %v2166, %v2165
  %v2387 = vpack.c.bf16 %v2168, %v2167
  %v2388 = vpack.c.bf16 %v2170, %v2169
  %v2389 = vpack.c.bf16 %v2172, %v2171
  %v2390 = vpack.c.bf16 %v2174, %v2173
  %v2391 = vpack.c.bf16 %v2176, %v2175
  %v2392 = vpack.c.bf16 %v2178, %v2177
  %v2393 = vpack.c.bf16 %v2180, %v2179
  %v2394 = vpack.c.bf16 %v2182, %v2181
  %v2395 = vpack.c.bf16 %v2184, %v2183
  %v2396 = vpack.c.bf16 %v2186, %v2185
  %v2397 = vpack.c.bf16 %v2188, %v2187
  %v2398 = vpack.c.bf16 %v2190, %v2189
  %v2399 = vpack.c.bf16 %v2192, %v2191
  %v2400 = vpack.c.bf16 %v2194, %v2193
  %v2401 = vpack.c.bf16 %v2196, %v2195
  %v2402 = vpack.c.bf16 %v2198, %v2197
  %v2403 = vpack.c.bf16 %v2200, %v2199
  %v2404 = vpack.c.bf16 %v2202, %v2201
  %v2405 = vpack.c.bf16 %v2204, %v2203
  %v2406 = vpack.c.bf16 %v2206, %v2205
  %v2407 = vpack.c.bf16 %v2208, %v2207
  %v2408 = vpack.c.bf16 %v2210, %v2209
  %v2409 = vpack.c.bf16 %v2212, %v2211
  %v2410 = vpack.c.bf16 %v2214, %v2213
  %v2411 = vpack.c.bf16 %v2216, %v2215
  %v2412 = vpack.c.bf16 %v2218, %v2217
  %v2413 = vpack.c.bf16 %v2220, %v2219
  %v2414 = vpack.c.bf16 %v2222, %v2221
  %v2415 = vpack.c.bf16 %v2224, %v2223
  %v2416 = vpack.c.bf16 %v2226, %v2225
  %v2417 = vpack.c.bf16 %v2228, %v2227
  %v2418 = vpack.c.bf16 %v2230, %v2229
  %v2419 = vpack.c.bf16 %v2232, %v2231
  %v2420 = vpack.c.bf16 %v2234, %v2233
  %v2421 = vpack.c.bf16 %v2236, %v2235
  %v2422 = vpack.c.bf16 %v2238, %v2237
  %v2423 = vpack.c.bf16 %v2240, %v2239
  %v2424 = vpack.c.bf16 %v2242, %v2241
  %v2425 = vpack.c.bf16 %v2244, %v2243
  %v2426 = vpack.c.bf16 %v2246, %v2245
  %v2427 = vpack.c.bf16 %v2248, %v2247
  %v2428 = vpack.c.bf16 %v2250, %v2249
  %v2429 = vpack.c.bf16 %v2252, %v2251
  %v2430 = vpack.c.bf16 %v2254, %v2253
  %v2431 = vpack.c.bf16 %v2256, %v2255
  %v2432 = vpack.c.bf16 %v2258, %v2257
  %v2433 = vpack.c.bf16 %v2260, %v2259
  %v2434 = vpack.c.bf16 %v2262, %v2261
  %v2435 = vpack.c.bf16 %v2264, %v2263
  %v2436 = vpack.c.bf16 %v2266, %v2265
  %v2437 = vpack.c.bf16 %v2268, %v2267
  %v2438 = vpack.c.bf16 %v2270, %v2269
  %v2439 = vpack.c.bf16 %v2272, %v2271
  %v2440 = vpack.c.bf16 %v2274, %v2273
  %v2441 = vpack.c.bf16 %v2276, %v2275
  %v2442 = vpack.c.bf16 %v2278, %v2277
  %v2443 = vpack.c.bf16 %v2280, %v2279
  %v2444 = vpack.c.bf16 %v2282, %v2281
  %v2445 = vpack.c.bf16 %v2284, %v2283
  %v2446 = vpack.c.bf16 %v2286, %v2285
  %v2447 = vpack.c.bf16 %v2288, %v2287
  %v2448 = vpack.c.bf16 %v2290, %v2289
  %v2449 = vpack.c.bf16 %v2292, %v2291
  %v2450 = vpack.c.bf16 %v2294, %v2293
  %v2451 = vpack.c.bf16 %v2296, %v2295
  %v2452 = vpack.c.bf16 %v2298, %v2297
  %v2453 = vpack.c.bf16 %v2300, %v2299
  %v2454 = vpack.c.bf16 %v2302, %v2301
  %v2455 = vpack.c.bf16 %v2304, %v2303
  %v2456 = vpack.c.bf16 %v2306, %v2305
  %v2457 = vpack.c.bf16 %v2308, %v2307
  %v2458 = vpack.c.bf16 %v2310, %v2309
  %v2459 = vpack.c.bf16 %v2312, %v2311
  %v2460 = vpack.c.bf16 %v2314, %v2313
  %v2461 = vpack.c.bf16 %v2316, %v2315
  %v2462 = vpack.c.bf16 %v2318, %v2317
  %v2463 = vld [vmem:[%s2] sm:$0xff]
  %v2464 = vld [vmem:[%s2 + $0x8] sm:$0xff]
  %v2465 = vld [vmem:[%s2 + $0x10] sm:$0xff]
  %v2466 = vld [vmem:[%s2 + $0x18] sm:$0xff]
  %v2467 = vld [vmem:[%s2 + $0x20] sm:$0xff]
  %v2468 = vld [vmem:[%s2 + $0x28] sm:$0xff]
  %v2469 = vld [vmem:[%s2 + $0x30] sm:$0xff]
  %v2470 = vld [vmem:[%s2 + $0x38] sm:$0xff]
  %v2471 = vld [vmem:[%s2 + $0x40] sm:$0xff]
  %v2472 = vld [vmem:[%s2 + $0x48] sm:$0xff]
  %v2473 = vld [vmem:[%s2 + $0x50] sm:$0xff]
  %v2474 = vld [vmem:[%s2 + $0x58] sm:$0xff]
  %v2475 = vld [vmem:[%s2 + $0x60] sm:$0xff]
  %v2476 = vld [vmem:[%s2 + $0x68] sm:$0xff]
  %v2477 = vld [vmem:[%s2 + $0x70] sm:$0xff]
  %v2478 = vld [vmem:[%s2 + $0x78] sm:$0xff]
  %v2479 = vld [vmem:[%s2 + $0x80] sm:$0xff]
  %v2480 = vld [vmem:[%s2 + $0x88] sm:$0xff]
  %v2481 = vld [vmem:[%s2 + $0x90] sm:$0xff]
  %v2482 = vld [vmem:[%s2 + $0x98] sm:$0xff]
  %v2483 = vld [vmem:[%s2 + $0xa0] sm:$0xff]
  %v2484 = vld [vmem:[%s2 + $0xa8] sm:$0xff]
  %v2485 = vld [vmem:[%s2 + $0xb0] sm:$0xff]
  %v2486 = vld [vmem:[%s2 + $0xb8] sm:$0xff]
  %v2487 = vld [vmem:[%s2 + $0xc0] sm:$0xff]
  %v2488 = vld [vmem:[%s2 + $0xc8] sm:$0xff]
  %v2489 = vld [vmem:[%s2 + $0xd0] sm:$0xff]
  %v2490 = vld [vmem:[%s2 + $0xd8] sm:$0xff]
  %v2491 = vld [vmem:[%s2 + $0xe0] sm:$0xff]
  %v2492 = vld [vmem:[%s2 + $0xe8] sm:$0xff]
  %v2493 = vld [vmem:[%s2 + $0xf0] sm:$0xff]
  %v2494 = vld [vmem:[%s2 + $0xf8] sm:$0xff]
  %v2495 = vld [vmem:[%s2 + $0x100] sm:$0xff]
  %v2496 = vld [vmem:[%s2 + $0x108] sm:$0xff]
  %v2497 = vld [vmem:[%s2 + $0x110] sm:$0xff]
  %v2498 = vld [vmem:[%s2 + $0x118] sm:$0xff]
  %v2499 = vld [vmem:[%s2 + $0x120] sm:$0xff]
  %v2500 = vld [vmem:[%s2 + $0x128] sm:$0xff]
  %v2501 = vld [vmem:[%s2 + $0x130] sm:$0xff]
  %v2502 = vld [vmem:[%s2 + $0x138] sm:$0xff]
  %v2503 = vld [vmem:[%s2 + $0x140] sm:$0xff]
  %v2504 = vld [vmem:[%s2 + $0x148] sm:$0xff]
  %v2505 = vld [vmem:[%s2 + $0x150] sm:$0xff]
  %v2506 = vld [vmem:[%s2 + $0x158] sm:$0xff]
  %v2507 = vld [vmem:[%s2 + $0x160] sm:$0xff]
  %v2508 = vld [vmem:[%s2 + $0x168] sm:$0xff]
  %v2509 = vld [vmem:[%s2 + $0x170] sm:$0xff]
  %v2510 = vld [vmem:[%s2 + $0x178] sm:$0xff]
  %v2511 = vld [vmem:[%s2 + $0x180] sm:$0xff]
  %v2512 = vld [vmem:[%s2 + $0x188] sm:$0xff]
  %v2513 = vld [vmem:[%s2 + $0x190] sm:$0xff]
  %v2514 = vld [vmem:[%s2 + $0x198] sm:$0xff]
  %v2515 = vld [vmem:[%s2 + $0x1a0] sm:$0xff]
  %v2516 = vld [vmem:[%s2 + $0x1a8] sm:$0xff]
  %v2517 = vld [vmem:[%s2 + $0x1b0] sm:$0xff]
  %v2518 = vld [vmem:[%s2 + $0x1b8] sm:$0xff]
  %v2519 = vld [vmem:[%s2 + $0x1c0] sm:$0xff]
  %v2520 = vld [vmem:[%s2 + $0x1c8] sm:$0xff]
  %v2521 = vld [vmem:[%s2 + $0x1d0] sm:$0xff]
  %v2522 = vld [vmem:[%s2 + $0x1d8] sm:$0xff]
  %v2523 = vld [vmem:[%s2 + $0x1e0] sm:$0xff]
  %v2524 = vld [vmem:[%s2 + $0x1e8] sm:$0xff]
  %v2525 = vld [vmem:[%s2 + $0x1f0] sm:$0xff]
  %v2526 = vld [vmem:[%s2 + $0x1f8] sm:$0xff]
  %v2527 = vld [vmem:[%s2 + $0x200] sm:$0xff]
  %v2528 = vld [vmem:[%s2 + $0x208] sm:$0xff]
  %v2529 = vld [vmem:[%s2 + $0x210] sm:$0xff]
  %v2530 = vld [vmem:[%s2 + $0x218] sm:$0xff]
  %v2531 = vld [vmem:[%s2 + $0x220] sm:$0xff]
  %v2532 = vld [vmem:[%s2 + $0x228] sm:$0xff]
  %v2533 = vld [vmem:[%s2 + $0x230] sm:$0xff]
  %v2534 = vld [vmem:[%s2 + $0x238] sm:$0xff]
  %v2535 = vld [vmem:[%s2 + $0x240] sm:$0xff]
  %v2536 = vld [vmem:[%s2 + $0x248] sm:$0xff]
  %v2537 = vld [vmem:[%s2 + $0x250] sm:$0xff]
  %v2538 = vld [vmem:[%s2 + $0x258] sm:$0xff]
  %v2539 = vld [vmem:[%s2 + $0x260] sm:$0xff]
  %v2540 = vld [vmem:[%s2 + $0x268] sm:$0xff]
  %v2541 = vld [vmem:[%s2 + $0x270] sm:$0xff]
  %v2542 = vld [vmem:[%s2 + $0x278] sm:$0xff]
  %v2543 = vld [vmem:[%s2 + $0x280] sm:$0xff]
  %v2544 = vld [vmem:[%s2 + $0x288] sm:$0xff]
  %v2545 = vld [vmem:[%s2 + $0x290] sm:$0xff]
  %v2546 = vld [vmem:[%s2 + $0x298] sm:$0xff]
  %v2547 = vld [vmem:[%s2 + $0x2a0] sm:$0xff]
  %v2548 = vld [vmem:[%s2 + $0x2a8] sm:$0xff]
  %v2549 = vld [vmem:[%s2 + $0x2b0] sm:$0xff]
  %v2550 = vld [vmem:[%s2 + $0x2b8] sm:$0xff]
  %v2551 = vld [vmem:[%s2 + $0x2c0] sm:$0xff]
  %v2552 = vld [vmem:[%s2 + $0x2c8] sm:$0xff]
  %v2553 = vld [vmem:[%s2 + $0x2d0] sm:$0xff]
  %v2554 = vld [vmem:[%s2 + $0x2d8] sm:$0xff]
  %v2555 = vld [vmem:[%s2 + $0x2e0] sm:$0xff]
  %v2556 = vld [vmem:[%s2 + $0x2e8] sm:$0xff]
  %v2557 = vld [vmem:[%s2 + $0x2f0] sm:$0xff]
  %v2558 = vld [vmem:[%s2 + $0x2f8] sm:$0xff]
  %v2559 = vld [vmem:[%s2 + $0x300] sm:$0xff]
  %v2560 = vld [vmem:[%s2 + $0x308] sm:$0xff]
  %v2561 = vld [vmem:[%s2 + $0x310] sm:$0xff]
  %v2562 = vld [vmem:[%s2 + $0x318] sm:$0xff]
  %v2563 = vld [vmem:[%s2 + $0x320] sm:$0xff]
  %v2564 = vld [vmem:[%s2 + $0x328] sm:$0xff]
  %v2565 = vld [vmem:[%s2 + $0x330] sm:$0xff]
  %v2566 = vld [vmem:[%s2 + $0x338] sm:$0xff]
  %v2567 = vld [vmem:[%s2 + $0x340] sm:$0xff]
  %v2568 = vld [vmem:[%s2 + $0x348] sm:$0xff]
  %v2569 = vld [vmem:[%s2 + $0x350] sm:$0xff]
  %v2570 = vld [vmem:[%s2 + $0x358] sm:$0xff]
  %v2571 = vld [vmem:[%s2 + $0x360] sm:$0xff]
  %v2572 = vld [vmem:[%s2 + $0x368] sm:$0xff]
  %v2573 = vld [vmem:[%s2 + $0x370] sm:$0xff]
  %v2574 = vld [vmem:[%s2 + $0x378] sm:$0xff]
  %v2575 = vld [vmem:[%s2 + $0x380] sm:$0xff]
  %v2576 = vld [vmem:[%s2 + $0x388] sm:$0xff]
  %v2577 = vld [vmem:[%s2 + $0x390] sm:$0xff]
  %v2578 = vld [vmem:[%s2 + $0x398] sm:$0xff]
  %v2579 = vld [vmem:[%s2 + $0x3a0] sm:$0xff]
  %v2580 = vld [vmem:[%s2 + $0x3a8] sm:$0xff]
  %v2581 = vld [vmem:[%s2 + $0x3b0] sm:$0xff]
  %v2582 = vld [vmem:[%s2 + $0x3b8] sm:$0xff]
  %v2583 = vld [vmem:[%s2 + $0x3c0] sm:$0xff]
  %v2584 = vld [vmem:[%s2 + $0x3c8] sm:$0xff]
  %v2585 = vld [vmem:[%s2 + $0x3d0] sm:$0xff]
  %v2586 = vld [vmem:[%s2 + $0x3d8] sm:$0xff]
  %v2587 = vld [vmem:[%s2 + $0x3e0] sm:$0xff]
  %v2588 = vld [vmem:[%s2 + $0x3e8] sm:$0xff]
  %v2589 = vld [vmem:[%s2 + $0x3f0] sm:$0xff]
  %v2590 = vld [vmem:[%s2 + $0x3f8] sm:$0xff]
  %v2591 = vld [vmem:[%s2 + $0x400] sm:$0xff]
  %v2592 = vld [vmem:[%s2 + $0x408] sm:$0xff]
  %v2593 = vld [vmem:[%s2 + $0x410] sm:$0xff]
  %v2594 = vld [vmem:[%s2 + $0x418] sm:$0xff]
  %v2595 = vld [vmem:[%s2 + $0x420] sm:$0xff]
  %v2596 = vld [vmem:[%s2 + $0x428] sm:$0xff]
  %v2597 = vld [vmem:[%s2 + $0x430] sm:$0xff]
  %v2598 = vld [vmem:[%s2 + $0x438] sm:$0xff]
  %v2599 = vld [vmem:[%s2 + $0x440] sm:$0xff]
  %v2600 = vld [vmem:[%s2 + $0x448] sm:$0xff]
  %v2601 = vld [vmem:[%s2 + $0x450] sm:$0xff]
  %v2602 = vld [vmem:[%s2 + $0x458] sm:$0xff]
  %v2603 = vld [vmem:[%s2 + $0x460] sm:$0xff]
  %v2604 = vld [vmem:[%s2 + $0x468] sm:$0xff]
  %v2605 = vld [vmem:[%s2 + $0x470] sm:$0xff]
  %v2606 = vld [vmem:[%s2 + $0x478] sm:$0xff]
  %v2607 = vld [vmem:[%s2 + $0x480] sm:$0xff]
  %v2608 = vld [vmem:[%s2 + $0x488] sm:$0xff]
  %v2609 = vld [vmem:[%s2 + $0x490] sm:$0xff]
  %v2610 = vld [vmem:[%s2 + $0x498] sm:$0xff]
  %v2611 = vld [vmem:[%s2 + $0x4a0] sm:$0xff]
  %v2612 = vld [vmem:[%s2 + $0x4a8] sm:$0xff]
  %v2613 = vld [vmem:[%s2 + $0x4b0] sm:$0xff]
  %v2614 = vld [vmem:[%s2 + $0x4b8] sm:$0xff]
  %v2615 = vld [vmem:[%s2 + $0x4c0] sm:$0xff]
  %v2616 = vld [vmem:[%s2 + $0x4c8] sm:$0xff]
  %v2617 = vld [vmem:[%s2 + $0x4d0] sm:$0xff]
  %v2618 = vld [vmem:[%s2 + $0x4d8] sm:$0xff]
  %v2619 = vld [vmem:[%s2 + $0x4e0] sm:$0xff]
  %v2620 = vld [vmem:[%s2 + $0x4e8] sm:$0xff]
  %v2621 = vld [vmem:[%s2 + $0x4f0] sm:$0xff]
  %v2622 = vld [vmem:[%s2 + $0x4f8] sm:$0xff]
  %v2623 = vld [vmem:[%s2 + $0x500] sm:$0xff]
  %v2624 = vld [vmem:[%s2 + $0x508] sm:$0xff]
  %v2625 = vld [vmem:[%s2 + $0x510] sm:$0xff]
  %v2626 = vld [vmem:[%s2 + $0x518] sm:$0xff]
  %v2627 = vld [vmem:[%s2 + $0x520] sm:$0xff]
  %v2628 = vld [vmem:[%s2 + $0x528] sm:$0xff]
  %v2629 = vld [vmem:[%s2 + $0x530] sm:$0xff]
  %v2630 = vld [vmem:[%s2 + $0x538] sm:$0xff]
  %v2631 = vld [vmem:[%s2 + $0x540] sm:$0xff]
  %v2632 = vld [vmem:[%s2 + $0x548] sm:$0xff]
  %v2633 = vld [vmem:[%s2 + $0x550] sm:$0xff]
  %v2634 = vld [vmem:[%s2 + $0x558] sm:$0xff]
  %v2635 = vld [vmem:[%s2 + $0x560] sm:$0xff]
  %v2636 = vld [vmem:[%s2 + $0x568] sm:$0xff]
  %v2637 = vld [vmem:[%s2 + $0x570] sm:$0xff]
  %v2638 = vld [vmem:[%s2 + $0x578] sm:$0xff]
  %v2639 = vld [vmem:[%s2 + $0x580] sm:$0xff]
  %v2640 = vld [vmem:[%s2 + $0x588] sm:$0xff]
  %v2641 = vld [vmem:[%s2 + $0x590] sm:$0xff]
  %v2642 = vld [vmem:[%s2 + $0x598] sm:$0xff]
  %v2643 = vld [vmem:[%s2 + $0x5a0] sm:$0xff]
  %v2644 = vld [vmem:[%s2 + $0x5a8] sm:$0xff]
  %v2645 = vld [vmem:[%s2 + $0x5b0] sm:$0xff]
  %v2646 = vld [vmem:[%s2 + $0x5b8] sm:$0xff]
  %v2647 = vld [vmem:[%s2 + $0x5c0] sm:$0xff]
  %v2648 = vld [vmem:[%s2 + $0x5c8] sm:$0xff]
  %v2649 = vld [vmem:[%s2 + $0x5d0] sm:$0xff]
  %v2650 = vld [vmem:[%s2 + $0x5d8] sm:$0xff]
  %v2651 = vld [vmem:[%s2 + $0x5e0] sm:$0xff]
  %v2652 = vld [vmem:[%s2 + $0x5e8] sm:$0xff]
  %v2653 = vld [vmem:[%s2 + $0x5f0] sm:$0xff]
  %v2654 = vld [vmem:[%s2 + $0x5f8] sm:$0xff]
  %v2655 = vld [vmem:[%s2 + $0x600] sm:$0xff]
  %v2656 = vld [vmem:[%s2 + $0x608] sm:$0xff]
  %v2657 = vld [vmem:[%s2 + $0x610] sm:$0xff]
  %v2658 = vld [vmem:[%s2 + $0x618] sm:$0xff]
  %v2659 = vld [vmem:[%s2 + $0x620] sm:$0xff]
  %v2660 = vld [vmem:[%s2 + $0x628] sm:$0xff]
  %v2661 = vld [vmem:[%s2 + $0x630] sm:$0xff]
  %v2662 = vld [vmem:[%s2 + $0x638] sm:$0xff]
  %v2663 = vld [vmem:[%s2 + $0x640] sm:$0xff]
  %v2664 = vld [vmem:[%s2 + $0x648] sm:$0xff]
  %v2665 = vld [vmem:[%s2 + $0x650] sm:$0xff]
  %v2666 = vld [vmem:[%s2 + $0x658] sm:$0xff]
  %v2667 = vld [vmem:[%s2 + $0x660] sm:$0xff]
  %v2668 = vld [vmem:[%s2 + $0x668] sm:$0xff]
  %v2669 = vld [vmem:[%s2 + $0x670] sm:$0xff]
  %v2670 = vld [vmem:[%s2 + $0x678] sm:$0xff]
  %v2671 = vld [vmem:[%s2 + $0x680] sm:$0xff]
  %v2672 = vld [vmem:[%s2 + $0x688] sm:$0xff]
  %v2673 = vld [vmem:[%s2 + $0x690] sm:$0xff]
  %v2674 = vld [vmem:[%s2 + $0x698] sm:$0xff]
  %v2675 = vld [vmem:[%s2 + $0x6a0] sm:$0xff]
  %v2676 = vld [vmem:[%s2 + $0x6a8] sm:$0xff]
  %v2677 = vld [vmem:[%s2 + $0x6b0] sm:$0xff]
  %v2678 = vld [vmem:[%s2 + $0x6b8] sm:$0xff]
  %v2679 = vld [vmem:[%s2 + $0x6c0] sm:$0xff]
  %v2680 = vld [vmem:[%s2 + $0x6c8] sm:$0xff]
  %v2681 = vld [vmem:[%s2 + $0x6d0] sm:$0xff]
  %v2682 = vld [vmem:[%s2 + $0x6d8] sm:$0xff]
  %v2683 = vld [vmem:[%s2 + $0x6e0] sm:$0xff]
  %v2684 = vld [vmem:[%s2 + $0x6e8] sm:$0xff]
  %v2685 = vld [vmem:[%s2 + $0x6f0] sm:$0xff]
  %v2686 = vld [vmem:[%s2 + $0x6f8] sm:$0xff]
  %v2687 = vld [vmem:[%s2 + $0x700] sm:$0xff]
  %v2688 = vld [vmem:[%s2 + $0x708] sm:$0xff]
  %v2689 = vld [vmem:[%s2 + $0x710] sm:$0xff]
  %v2690 = vld [vmem:[%s2 + $0x718] sm:$0xff]
  %v2691 = vld [vmem:[%s2 + $0x720] sm:$0xff]
  %v2692 = vld [vmem:[%s2 + $0x728] sm:$0xff]
  %v2693 = vld [vmem:[%s2 + $0x730] sm:$0xff]
  %v2694 = vld [vmem:[%s2 + $0x738] sm:$0xff]
  %v2695 = vld [vmem:[%s2 + $0x740] sm:$0xff]
  %v2696 = vld [vmem:[%s2 + $0x748] sm:$0xff]
  %v2697 = vld [vmem:[%s2 + $0x750] sm:$0xff]
  %v2698 = vld [vmem:[%s2 + $0x758] sm:$0xff]
  %v2699 = vld [vmem:[%s2 + $0x760] sm:$0xff]
  %v2700 = vld [vmem:[%s2 + $0x768] sm:$0xff]
  %v2701 = vld [vmem:[%s2 + $0x770] sm:$0xff]
  %v2702 = vld [vmem:[%s2 + $0x778] sm:$0xff]
  %v2703 = vld [vmem:[%s2 + $0x780] sm:$0xff]
  %v2704 = vld [vmem:[%s2 + $0x788] sm:$0xff]
  %v2705 = vld [vmem:[%s2 + $0x790] sm:$0xff]
  %v2706 = vld [vmem:[%s2 + $0x798] sm:$0xff]
  %v2707 = vld [vmem:[%s2 + $0x7a0] sm:$0xff]
  %v2708 = vld [vmem:[%s2 + $0x7a8] sm:$0xff]
  %v2709 = vld [vmem:[%s2 + $0x7b0] sm:$0xff]
  %v2710 = vld [vmem:[%s2 + $0x7b8] sm:$0xff]
  %v2711 = vld [vmem:[%s2 + $0x7c0] sm:$0xff]
  %v2712 = vld [vmem:[%s2 + $0x7c8] sm:$0xff]
  %v2713 = vld [vmem:[%s2 + $0x7d0] sm:$0xff]
  %v2714 = vld [vmem:[%s2 + $0x7d8] sm:$0xff]
  %v2715 = vld [vmem:[%s2 + $0x7e0] sm:$0xff]
  %v2716 = vld [vmem:[%s2 + $0x7e8] sm:$0xff]
  %v2717 = vld [vmem:[%s2 + $0x7f0] sm:$0xff]
  %v2718 = vld [vmem:[%s2 + $0x7f8] sm:$0xff]
  %v2719 = vld [vmem:[%s2 + $0x800] sm:$0xff]
  %v2720 = vld [vmem:[%s2 + $0x808] sm:$0xff]
  %v2721 = vld [vmem:[%s2 + $0x810] sm:$0xff]
  %v2722 = vld [vmem:[%s2 + $0x818] sm:$0xff]
  %v2723 = vld [vmem:[%s2 + $0x820] sm:$0xff]
  %v2724 = vld [vmem:[%s2 + $0x828] sm:$0xff]
  %v2725 = vld [vmem:[%s2 + $0x830] sm:$0xff]
  %v2726 = vld [vmem:[%s2 + $0x838] sm:$0xff]
  %v2727 = vld [vmem:[%s2 + $0x840] sm:$0xff]
  %v2728 = vld [vmem:[%s2 + $0x848] sm:$0xff]
  %v2729 = vld [vmem:[%s2 + $0x850] sm:$0xff]
  %v2730 = vld [vmem:[%s2 + $0x858] sm:$0xff]
  %v2731 = vld [vmem:[%s2 + $0x860] sm:$0xff]
  %v2732 = vld [vmem:[%s2 + $0x868] sm:$0xff]
  %v2733 = vld [vmem:[%s2 + $0x870] sm:$0xff]
  %v2734 = vld [vmem:[%s2 + $0x878] sm:$0xff]
  %v2735 = vld [vmem:[%s2 + $0x880] sm:$0xff]
  %v2736 = vld [vmem:[%s2 + $0x888] sm:$0xff]
  %v2737 = vld [vmem:[%s2 + $0x890] sm:$0xff]
  %v2738 = vld [vmem:[%s2 + $0x898] sm:$0xff]
  %v2739 = vld [vmem:[%s2 + $0x8a0] sm:$0xff]
  %v2740 = vld [vmem:[%s2 + $0x8a8] sm:$0xff]
  %v2741 = vld [vmem:[%s2 + $0x8b0] sm:$0xff]
  %v2742 = vld [vmem:[%s2 + $0x8b8] sm:$0xff]
  %v2743 = vld [vmem:[%s2 + $0x8c0] sm:$0xff]
  %v2744 = vld [vmem:[%s2 + $0x8c8] sm:$0xff]
  %v2745 = vld [vmem:[%s2 + $0x8d0] sm:$0xff]
  %v2746 = vld [vmem:[%s2 + $0x8d8] sm:$0xff]
  %v2747 = vld [vmem:[%s2 + $0x8e0] sm:$0xff]
  %v2748 = vld [vmem:[%s2 + $0x8e8] sm:$0xff]
  %v2749 = vld [vmem:[%s2 + $0x8f0] sm:$0xff]
  %v2750 = vld [vmem:[%s2 + $0x8f8] sm:$0xff]
  %v2751 = vld [vmem:[%s2 + $0x900] sm:$0xff]
  %v2752 = vld [vmem:[%s2 + $0x908] sm:$0xff]
  %v2753 = vld [vmem:[%s2 + $0x910] sm:$0xff]
  %v2754 = vld [vmem:[%s2 + $0x918] sm:$0xff]
  %v2755 = vld [vmem:[%s2 + $0x920] sm:$0xff]
  %v2756 = vld [vmem:[%s2 + $0x928] sm:$0xff]
  %v2757 = vld [vmem:[%s2 + $0x930] sm:$0xff]
  %v2758 = vld [vmem:[%s2 + $0x938] sm:$0xff]
  %v2759 = vld [vmem:[%s2 + $0x940] sm:$0xff]
  %v2760 = vld [vmem:[%s2 + $0x948] sm:$0xff]
  %v2761 = vld [vmem:[%s2 + $0x950] sm:$0xff]
  %v2762 = vld [vmem:[%s2 + $0x958] sm:$0xff]
  %v2763 = vld [vmem:[%s2 + $0x960] sm:$0xff]
  %v2764 = vld [vmem:[%s2 + $0x968] sm:$0xff]
  %v2765 = vld [vmem:[%s2 + $0x970] sm:$0xff]
  %v2766 = vld [vmem:[%s2 + $0x978] sm:$0xff]
  %v2767 = vld [vmem:[%s2 + $0x980] sm:$0xff]
  %v2768 = vld [vmem:[%s2 + $0x988] sm:$0xff]
  %v2769 = vld [vmem:[%s2 + $0x990] sm:$0xff]
  %v2770 = vld [vmem:[%s2 + $0x998] sm:$0xff]
  %v2771 = vld [vmem:[%s2 + $0x9a0] sm:$0xff]
  %v2772 = vld [vmem:[%s2 + $0x9a8] sm:$0xff]
  %v2773 = vld [vmem:[%s2 + $0x9b0] sm:$0xff]
  %v2774 = vld [vmem:[%s2 + $0x9b8] sm:$0xff]
  %v2775 = vld [vmem:[%s2 + $0x9c0] sm:$0xff]
  %v2776 = vld [vmem:[%s2 + $0x9c8] sm:$0xff]
  %v2777 = vld [vmem:[%s2 + $0x9d0] sm:$0xff]
  %v2778 = vld [vmem:[%s2 + $0x9d8] sm:$0xff]
  %v2779 = vld [vmem:[%s2 + $0x9e0] sm:$0xff]
  %v2780 = vld [vmem:[%s2 + $0x9e8] sm:$0xff]
  %v2781 = vld [vmem:[%s2 + $0x9f0] sm:$0xff]
  %v2782 = vld [vmem:[%s2 + $0x9f8] sm:$0xff]
  %v2783 = vld [vmem:[%s2 + $0xa00] sm:$0xff]
  %v2784 = vld [vmem:[%s2 + $0xa08] sm:$0xff]
  %v2785 = vld [vmem:[%s2 + $0xa10] sm:$0xff]
  %v2786 = vld [vmem:[%s2 + $0xa18] sm:$0xff]
  %v2787 = vld [vmem:[%s2 + $0xa20] sm:$0xff]
  %v2788 = vld [vmem:[%s2 + $0xa28] sm:$0xff]
  %v2789 = vld [vmem:[%s2 + $0xa30] sm:$0xff]
  %v2790 = vld [vmem:[%s2 + $0xa38] sm:$0xff]
  %v2791 = vld [vmem:[%s2 + $0xa40] sm:$0xff]
  %v2792 = vld [vmem:[%s2 + $0xa48] sm:$0xff]
  %v2793 = vld [vmem:[%s2 + $0xa50] sm:$0xff]
  %v2794 = vld [vmem:[%s2 + $0xa58] sm:$0xff]
  %v2795 = vld [vmem:[%s2 + $0xa60] sm:$0xff]
  %v2796 = vld [vmem:[%s2 + $0xa68] sm:$0xff]
  %v2797 = vld [vmem:[%s2 + $0xa70] sm:$0xff]
  %v2798 = vld [vmem:[%s2 + $0xa78] sm:$0xff]
  %v2799 = vld [vmem:[%s2 + $0xa80] sm:$0xff]
  %v2800 = vld [vmem:[%s2 + $0xa88] sm:$0xff]
  %v2801 = vld [vmem:[%s2 + $0xa90] sm:$0xff]
  %v2802 = vld [vmem:[%s2 + $0xa98] sm:$0xff]
  %v2803 = vld [vmem:[%s2 + $0xaa0] sm:$0xff]
  %v2804 = vld [vmem:[%s2 + $0xaa8] sm:$0xff]
  %v2805 = vld [vmem:[%s2 + $0xab0] sm:$0xff]
  %v2806 = vld [vmem:[%s2 + $0xab8] sm:$0xff]
  %v2807 = vld [vmem:[%s2 + $0xac0] sm:$0xff]
  %v2808 = vld [vmem:[%s2 + $0xac8] sm:$0xff]
  %v2809 = vld [vmem:[%s2 + $0xad0] sm:$0xff]
  %v2810 = vld [vmem:[%s2 + $0xad8] sm:$0xff]
  %v2811 = vld [vmem:[%s2 + $0xae0] sm:$0xff]
  %v2812 = vld [vmem:[%s2 + $0xae8] sm:$0xff]
  %v2813 = vld [vmem:[%s2 + $0xaf0] sm:$0xff]
  %v2814 = vld [vmem:[%s2 + $0xaf8] sm:$0xff]
  %v2815 = vld [vmem:[%s2 + $0xb00] sm:$0xff]
  %v2816 = vld [vmem:[%s2 + $0xb08] sm:$0xff]
  %v2817 = vld [vmem:[%s2 + $0xb10] sm:$0xff]
  %v2818 = vld [vmem:[%s2 + $0xb18] sm:$0xff]
  %v2819 = vld [vmem:[%s2 + $0xb20] sm:$0xff]
  %v2820 = vld [vmem:[%s2 + $0xb28] sm:$0xff]
  %v2821 = vld [vmem:[%s2 + $0xb30] sm:$0xff]
  %v2822 = vld [vmem:[%s2 + $0xb38] sm:$0xff]
  %v2823 = vld [vmem:[%s2 + $0xb40] sm:$0xff]
  %v2824 = vld [vmem:[%s2 + $0xb48] sm:$0xff]
  %v2825 = vld [vmem:[%s2 + $0xb50] sm:$0xff]
  %v2826 = vld [vmem:[%s2 + $0xb58] sm:$0xff]
  %v2827 = vld [vmem:[%s2 + $0xb60] sm:$0xff]
  %v2828 = vld [vmem:[%s2 + $0xb68] sm:$0xff]
  %v2829 = vld [vmem:[%s2 + $0xb70] sm:$0xff]
  %v2830 = vld [vmem:[%s2 + $0xb78] sm:$0xff]
  %v2831 = vld [vmem:[%s2 + $0xb80] sm:$0xff]
  %v2832 = vld [vmem:[%s2 + $0xb88] sm:$0xff]
  %v2833 = vld [vmem:[%s2 + $0xb90] sm:$0xff]
  %v2834 = vld [vmem:[%s2 + $0xb98] sm:$0xff]
  %v2835 = vld [vmem:[%s2 + $0xba0] sm:$0xff]
  %v2836 = vld [vmem:[%s2 + $0xba8] sm:$0xff]
  %v2837 = vld [vmem:[%s2 + $0xbb0] sm:$0xff]
  %v2838 = vld [vmem:[%s2 + $0xbb8] sm:$0xff]
  %v2839 = vld [vmem:[%s2 + $0xbc0] sm:$0xff]
  %v2840 = vld [vmem:[%s2 + $0xbc8] sm:$0xff]
  %v2841 = vld [vmem:[%s2 + $0xbd0] sm:$0xff]
  %v2842 = vld [vmem:[%s2 + $0xbd8] sm:$0xff]
  %v2843 = vld [vmem:[%s2 + $0xbe0] sm:$0xff]
  %v2844 = vld [vmem:[%s2 + $0xbe8] sm:$0xff]
  %v2845 = vld [vmem:[%s2 + $0xbf0] sm:$0xff]
  %v2846 = vld [vmem:[%s2 + $0xbf8] sm:$0xff]
  %v2847 = vld [vmem:[%s2 + $0xc00] sm:$0xff]
  %v2848 = vld [vmem:[%s2 + $0xc08] sm:$0xff]
  %v2849 = vld [vmem:[%s2 + $0xc10] sm:$0xff]
  %v2850 = vld [vmem:[%s2 + $0xc18] sm:$0xff]
  %v2851 = vld [vmem:[%s2 + $0xc20] sm:$0xff]
  %v2852 = vld [vmem:[%s2 + $0xc28] sm:$0xff]
  %v2853 = vld [vmem:[%s2 + $0xc30] sm:$0xff]
  %v2854 = vld [vmem:[%s2 + $0xc38] sm:$0xff]
  %v2855 = vld [vmem:[%s2 + $0xc40] sm:$0xff]
  %v2856 = vld [vmem:[%s2 + $0xc48] sm:$0xff]
  %v2857 = vld [vmem:[%s2 + $0xc50] sm:$0xff]
  %v2858 = vld [vmem:[%s2 + $0xc58] sm:$0xff]
  %v2859 = vld [vmem:[%s2 + $0xc60] sm:$0xff]
  %v2860 = vld [vmem:[%s2 + $0xc68] sm:$0xff]
  %v2861 = vld [vmem:[%s2 + $0xc70] sm:$0xff]
  %v2862 = vld [vmem:[%s2 + $0xc78] sm:$0xff]
  %v2863 = vld [vmem:[%s2 + $0xc80] sm:$0xff]
  %v2864 = vld [vmem:[%s2 + $0xc88] sm:$0xff]
  %v2865 = vld [vmem:[%s2 + $0xc90] sm:$0xff]
  %v2866 = vld [vmem:[%s2 + $0xc98] sm:$0xff]
  %v2867 = vld [vmem:[%s2 + $0xca0] sm:$0xff]
  %v2868 = vld [vmem:[%s2 + $0xca8] sm:$0xff]
  %v2869 = vld [vmem:[%s2 + $0xcb0] sm:$0xff]
  %v2870 = vld [vmem:[%s2 + $0xcb8] sm:$0xff]
  %v2871 = vld [vmem:[%s2 + $0xcc0] sm:$0xff]
  %v2872 = vld [vmem:[%s2 + $0xcc8] sm:$0xff]
  %v2873 = vld [vmem:[%s2 + $0xcd0] sm:$0xff]
  %v2874 = vld [vmem:[%s2 + $0xcd8] sm:$0xff]
  %v2875 = vld [vmem:[%s2 + $0xce0] sm:$0xff]
  %v2876 = vld [vmem:[%s2 + $0xce8] sm:$0xff]
  %v2877 = vld [vmem:[%s2 + $0xcf0] sm:$0xff]
  %v2878 = vld [vmem:[%s2 + $0xcf8] sm:$0xff]
  %v2879 = vld [vmem:[%s2 + $0xd00] sm:$0xff]
  %v2880 = vld [vmem:[%s2 + $0xd08] sm:$0xff]
  %v2881 = vld [vmem:[%s2 + $0xd10] sm:$0xff]
  %v2882 = vld [vmem:[%s2 + $0xd18] sm:$0xff]
  %v2883 = vld [vmem:[%s2 + $0xd20] sm:$0xff]
  %v2884 = vld [vmem:[%s2 + $0xd28] sm:$0xff]
  %v2885 = vld [vmem:[%s2 + $0xd30] sm:$0xff]
  %v2886 = vld [vmem:[%s2 + $0xd38] sm:$0xff]
  %v2887 = vld [vmem:[%s2 + $0xd40] sm:$0xff]
  %v2888 = vld [vmem:[%s2 + $0xd48] sm:$0xff]
  %v2889 = vld [vmem:[%s2 + $0xd50] sm:$0xff]
  %v2890 = vld [vmem:[%s2 + $0xd58] sm:$0xff]
  %v2891 = vld [vmem:[%s2 + $0xd60] sm:$0xff]
  %v2892 = vld [vmem:[%s2 + $0xd68] sm:$0xff]
  %v2893 = vld [vmem:[%s2 + $0xd70] sm:$0xff]
  %v2894 = vld [vmem:[%s2 + $0xd78] sm:$0xff]
  %v3327 = vunpack.c.l.b16 %v2463
  %v3328 = vunpack.c.h.b16 %v2463
  %v3329 = vunpack.c.l.b16 %v2464
  %v3330 = vunpack.c.h.b16 %v2464
  %v3331 = vunpack.c.l.b16 %v2465
  %v3332 = vunpack.c.h.b16 %v2465
  %v3333 = vunpack.c.l.b16 %v2466
  %v3334 = vunpack.c.h.b16 %v2466
  %v3335 = vunpack.c.l.b16 %v2467
  %v3336 = vunpack.c.h.b16 %v2467
  %v3337 = vunpack.c.l.b16 %v2468
  %v3338 = vunpack.c.h.b16 %v2468
  %v3339 = vunpack.c.l.b16 %v2469
  %v3340 = vunpack.c.h.b16 %v2469
  %v3341 = vunpack.c.l.b16 %v2470
  %v3342 = vunpack.c.h.b16 %v2470
  %v3343 = vunpack.c.l.b16 %v2471
  %v3344 = vunpack.c.h.b16 %v2471
  %v3345 = vunpack.c.l.b16 %v2472
  %v3346 = vunpack.c.h.b16 %v2472
  %v3347 = vunpack.c.l.b16 %v2473
  %v3348 = vunpack.c.h.b16 %v2473
  %v3349 = vunpack.c.l.b16 %v2474
  %v3350 = vunpack.c.h.b16 %v2474
  %v3351 = vunpack.c.l.b16 %v2475
  %v3352 = vunpack.c.h.b16 %v2475
  %v3353 = vunpack.c.l.b16 %v2476
  %v3354 = vunpack.c.h.b16 %v2476
  %v3355 = vunpack.c.l.b16 %v2477
  %v3356 = vunpack.c.h.b16 %v2477
  %v3357 = vunpack.c.l.b16 %v2478
  %v3358 = vunpack.c.h.b16 %v2478
  %v3359 = vunpack.c.l.b16 %v2479
  %v3360 = vunpack.c.h.b16 %v2479
  %v3361 = vunpack.c.l.b16 %v2480
  %v3362 = vunpack.c.h.b16 %v2480
  %v3363 = vunpack.c.l.b16 %v2481
  %v3364 = vunpack.c.h.b16 %v2481
  %v3365 = vunpack.c.l.b16 %v2482
  %v3366 = vunpack.c.h.b16 %v2482
  %v3367 = vunpack.c.l.b16 %v2483
  %v3368 = vunpack.c.h.b16 %v2483
  %v3369 = vunpack.c.l.b16 %v2484
  %v3370 = vunpack.c.h.b16 %v2484
  %v3371 = vunpack.c.l.b16 %v2485
  %v3372 = vunpack.c.h.b16 %v2485
  %v3373 = vunpack.c.l.b16 %v2486
  %v3374 = vunpack.c.h.b16 %v2486
  %v3375 = vunpack.c.l.b16 %v2487
  %v3376 = vunpack.c.h.b16 %v2487
  %v3377 = vunpack.c.l.b16 %v2488
  %v3378 = vunpack.c.h.b16 %v2488
  %v3379 = vunpack.c.l.b16 %v2489
  %v3380 = vunpack.c.h.b16 %v2489
  %v3381 = vunpack.c.l.b16 %v2490
  %v3382 = vunpack.c.h.b16 %v2490
  %v3383 = vunpack.c.l.b16 %v2491
  %v3384 = vunpack.c.h.b16 %v2491
  %v3385 = vunpack.c.l.b16 %v2492
  %v3386 = vunpack.c.h.b16 %v2492
  %v3387 = vunpack.c.l.b16 %v2493
  %v3388 = vunpack.c.h.b16 %v2493
  %v3389 = vunpack.c.l.b16 %v2494
  %v3390 = vunpack.c.h.b16 %v2494
  %v3391 = vunpack.c.l.b16 %v2495
  %v3392 = vunpack.c.h.b16 %v2495
  %v3393 = vunpack.c.l.b16 %v2496
  %v3394 = vunpack.c.h.b16 %v2496
  %v3395 = vunpack.c.l.b16 %v2497
  %v3396 = vunpack.c.h.b16 %v2497
  %v3397 = vunpack.c.l.b16 %v2498
  %v3398 = vunpack.c.h.b16 %v2498
  %v3399 = vunpack.c.l.b16 %v2499
  %v3400 = vunpack.c.h.b16 %v2499
  %v3401 = vunpack.c.l.b16 %v2500
  %v3402 = vunpack.c.h.b16 %v2500
  %v3403 = vunpack.c.l.b16 %v2501
  %v3404 = vunpack.c.h.b16 %v2501
  %v3405 = vunpack.c.l.b16 %v2502
  %v3406 = vunpack.c.h.b16 %v2502
  %v3407 = vunpack.c.l.b16 %v2503
  %v3408 = vunpack.c.h.b16 %v2503
  %v3409 = vunpack.c.l.b16 %v2504
  %v3410 = vunpack.c.h.b16 %v2504
  %v3411 = vunpack.c.l.b16 %v2505
  %v3412 = vunpack.c.h.b16 %v2505
  %v3413 = vunpack.c.l.b16 %v2506
  %v3414 = vunpack.c.h.b16 %v2506
  %v3415 = vunpack.c.l.b16 %v2507
  %v3416 = vunpack.c.h.b16 %v2507
  %v3417 = vunpack.c.l.b16 %v2508
  %v3418 = vunpack.c.h.b16 %v2508
  %v3419 = vunpack.c.l.b16 %v2509
  %v3420 = vunpack.c.h.b16 %v2509
  %v3421 = vunpack.c.l.b16 %v2510
  %v3422 = vunpack.c.h.b16 %v2510
  %v3423 = vunpack.c.l.b16 %v2511
  %v3424 = vunpack.c.h.b16 %v2511
  %v3425 = vunpack.c.l.b16 %v2512
  %v3426 = vunpack.c.h.b16 %v2512
  %v3427 = vunpack.c.l.b16 %v2513
  %v3428 = vunpack.c.h.b16 %v2513
  %v3429 = vunpack.c.l.b16 %v2514
  %v3430 = vunpack.c.h.b16 %v2514
  %v3431 = vunpack.c.l.b16 %v2515
  %v3432 = vunpack.c.h.b16 %v2515
  %v3433 = vunpack.c.l.b16 %v2516
  %v3434 = vunpack.c.h.b16 %v2516
  %v3435 = vunpack.c.l.b16 %v2517
  %v3436 = vunpack.c.h.b16 %v2517
  %v3437 = vunpack.c.l.b16 %v2518
  %v3438 = vunpack.c.h.b16 %v2518
  %v3439 = vunpack.c.l.b16 %v2519
  %v3440 = vunpack.c.h.b16 %v2519
  %v3441 = vunpack.c.l.b16 %v2520
  %v3442 = vunpack.c.h.b16 %v2520
  %v3443 = vunpack.c.l.b16 %v2521
  %v3444 = vunpack.c.h.b16 %v2521
  %v3445 = vunpack.c.l.b16 %v2522
  %v3446 = vunpack.c.h.b16 %v2522
  %v3447 = vunpack.c.l.b16 %v2523
  %v3448 = vunpack.c.h.b16 %v2523
  %v3449 = vunpack.c.l.b16 %v2524
  %v3450 = vunpack.c.h.b16 %v2524
  %v3451 = vunpack.c.l.b16 %v2525
  %v3452 = vunpack.c.h.b16 %v2525
  %v3453 = vunpack.c.l.b16 %v2526
  %v3454 = vunpack.c.h.b16 %v2526
  %v3455 = vunpack.c.l.b16 %v2527
  %v3456 = vunpack.c.h.b16 %v2527
  %v3457 = vunpack.c.l.b16 %v2528
  %v3458 = vunpack.c.h.b16 %v2528
  %v3459 = vunpack.c.l.b16 %v2529
  %v3460 = vunpack.c.h.b16 %v2529
  %v3461 = vunpack.c.l.b16 %v2530
  %v3462 = vunpack.c.h.b16 %v2530
  %v3463 = vunpack.c.l.b16 %v2531
  %v3464 = vunpack.c.h.b16 %v2531
  %v3465 = vunpack.c.l.b16 %v2532
  %v3466 = vunpack.c.h.b16 %v2532
  %v3467 = vunpack.c.l.b16 %v2533
  %v3468 = vunpack.c.h.b16 %v2533
  %v3469 = vunpack.c.l.b16 %v2534
  %v3470 = vunpack.c.h.b16 %v2534
  %v3471 = vunpack.c.l.b16 %v2535
  %v3472 = vunpack.c.h.b16 %v2535
  %v3473 = vunpack.c.l.b16 %v2536
  %v3474 = vunpack.c.h.b16 %v2536
  %v3475 = vunpack.c.l.b16 %v2537
  %v3476 = vunpack.c.h.b16 %v2537
  %v3477 = vunpack.c.l.b16 %v2538
  %v3478 = vunpack.c.h.b16 %v2538
  %v3479 = vunpack.c.l.b16 %v2539
  %v3480 = vunpack.c.h.b16 %v2539
  %v3481 = vunpack.c.l.b16 %v2540
  %v3482 = vunpack.c.h.b16 %v2540
  %v3483 = vunpack.c.l.b16 %v2541
  %v3484 = vunpack.c.h.b16 %v2541
  %v3485 = vunpack.c.l.b16 %v2542
  %v3486 = vunpack.c.h.b16 %v2542
  %v3487 = vunpack.c.l.b16 %v2543
  %v3488 = vunpack.c.h.b16 %v2543
  %v3489 = vunpack.c.l.b16 %v2544
  %v3490 = vunpack.c.h.b16 %v2544
  %v3491 = vunpack.c.l.b16 %v2545
  %v3492 = vunpack.c.h.b16 %v2545
  %v3493 = vunpack.c.l.b16 %v2546
  %v3494 = vunpack.c.h.b16 %v2546
  %v3495 = vunpack.c.l.b16 %v2547
  %v3496 = vunpack.c.h.b16 %v2547
  %v3497 = vunpack.c.l.b16 %v2548
  %v3498 = vunpack.c.h.b16 %v2548
  %v3499 = vunpack.c.l.b16 %v2549
  %v3500 = vunpack.c.h.b16 %v2549
  %v3501 = vunpack.c.l.b16 %v2550
  %v3502 = vunpack.c.h.b16 %v2550
  %v3503 = vunpack.c.l.b16 %v2551
  %v3504 = vunpack.c.h.b16 %v2551
  %v3505 = vunpack.c.l.b16 %v2552
  %v3506 = vunpack.c.h.b16 %v2552
  %v3507 = vunpack.c.l.b16 %v2553
  %v3508 = vunpack.c.h.b16 %v2553
  %v3509 = vunpack.c.l.b16 %v2554
  %v3510 = vunpack.c.h.b16 %v2554
  %v3511 = vunpack.c.l.b16 %v2555
  %v3512 = vunpack.c.h.b16 %v2555
  %v3513 = vunpack.c.l.b16 %v2556
  %v3514 = vunpack.c.h.b16 %v2556
  %v3515 = vunpack.c.l.b16 %v2557
  %v3516 = vunpack.c.h.b16 %v2557
  %v3517 = vunpack.c.l.b16 %v2558
  %v3518 = vunpack.c.h.b16 %v2558
  %v3519 = vunpack.c.l.b16 %v2559
  %v3520 = vunpack.c.h.b16 %v2559
  %v3521 = vunpack.c.l.b16 %v2560
  %v3522 = vunpack.c.h.b16 %v2560
  %v3523 = vunpack.c.l.b16 %v2561
  %v3524 = vunpack.c.h.b16 %v2561
  %v3525 = vunpack.c.l.b16 %v2562
  %v3526 = vunpack.c.h.b16 %v2562
  %v3527 = vunpack.c.l.b16 %v2563
  %v3528 = vunpack.c.h.b16 %v2563
  %v3529 = vunpack.c.l.b16 %v2564
  %v3530 = vunpack.c.h.b16 %v2564
  %v3531 = vunpack.c.l.b16 %v2565
  %v3532 = vunpack.c.h.b16 %v2565
  %v3533 = vunpack.c.l.b16 %v2566
  %v3534 = vunpack.c.h.b16 %v2566
  %v3535 = vunpack.c.l.b16 %v2567
  %v3536 = vunpack.c.h.b16 %v2567
  %v3537 = vunpack.c.l.b16 %v2568
  %v3538 = vunpack.c.h.b16 %v2568
  %v3539 = vunpack.c.l.b16 %v2569
  %v3540 = vunpack.c.h.b16 %v2569
  %v3541 = vunpack.c.l.b16 %v2570
  %v3542 = vunpack.c.h.b16 %v2570
  %v3543 = vunpack.c.l.b16 %v2571
  %v3544 = vunpack.c.h.b16 %v2571
  %v3545 = vunpack.c.l.b16 %v2572
  %v3546 = vunpack.c.h.b16 %v2572
  %v3547 = vunpack.c.l.b16 %v2573
  %v3548 = vunpack.c.h.b16 %v2573
  %v3549 = vunpack.c.l.b16 %v2574
  %v3550 = vunpack.c.h.b16 %v2574
  %v3551 = vunpack.c.l.b16 %v2575
  %v3552 = vunpack.c.h.b16 %v2575
  %v3553 = vunpack.c.l.b16 %v2576
  %v3554 = vunpack.c.h.b16 %v2576
  %v3555 = vunpack.c.l.b16 %v2577
  %v3556 = vunpack.c.h.b16 %v2577
  %v3557 = vunpack.c.l.b16 %v2578
  %v3558 = vunpack.c.h.b16 %v2578
  %v3559 = vunpack.c.l.b16 %v2579
  %v3560 = vunpack.c.h.b16 %v2579
  %v3561 = vunpack.c.l.b16 %v2580
  %v3562 = vunpack.c.h.b16 %v2580
  %v3563 = vunpack.c.l.b16 %v2581
  %v3564 = vunpack.c.h.b16 %v2581
  %v3565 = vunpack.c.l.b16 %v2582
  %v3566 = vunpack.c.h.b16 %v2582
  %v3567 = vunpack.c.l.b16 %v2583
  %v3568 = vunpack.c.h.b16 %v2583
  %v3569 = vunpack.c.l.b16 %v2584
  %v3570 = vunpack.c.h.b16 %v2584
  %v3571 = vunpack.c.l.b16 %v2585
  %v3572 = vunpack.c.h.b16 %v2585
  %v3573 = vunpack.c.l.b16 %v2586
  %v3574 = vunpack.c.h.b16 %v2586
  %v3575 = vunpack.c.l.b16 %v2587
  %v3576 = vunpack.c.h.b16 %v2587
  %v3577 = vunpack.c.l.b16 %v2588
  %v3578 = vunpack.c.h.b16 %v2588
  %v3579 = vunpack.c.l.b16 %v2589
  %v3580 = vunpack.c.h.b16 %v2589
  %v3581 = vunpack.c.l.b16 %v2590
  %v3582 = vunpack.c.h.b16 %v2590
  %v3583 = vunpack.c.l.b16 %v2591
  %v3584 = vunpack.c.h.b16 %v2591
  %v3585 = vunpack.c.l.b16 %v2592
  %v3586 = vunpack.c.h.b16 %v2592
  %v3587 = vunpack.c.l.b16 %v2593
  %v3588 = vunpack.c.h.b16 %v2593
  %v3589 = vunpack.c.l.b16 %v2594
  %v3590 = vunpack.c.h.b16 %v2594
  %v3591 = vunpack.c.l.b16 %v2595
  %v3592 = vunpack.c.h.b16 %v2595
  %v3593 = vunpack.c.l.b16 %v2596
  %v3594 = vunpack.c.h.b16 %v2596
  %v3595 = vunpack.c.l.b16 %v2597
  %v3596 = vunpack.c.h.b16 %v2597
  %v3597 = vunpack.c.l.b16 %v2598
  %v3598 = vunpack.c.h.b16 %v2598
  %v3599 = vunpack.c.l.b16 %v2599
  %v3600 = vunpack.c.h.b16 %v2599
  %v3601 = vunpack.c.l.b16 %v2600
  %v3602 = vunpack.c.h.b16 %v2600
  %v3603 = vunpack.c.l.b16 %v2601
  %v3604 = vunpack.c.h.b16 %v2601
  %v3605 = vunpack.c.l.b16 %v2602
  %v3606 = vunpack.c.h.b16 %v2602
  %v3607 = vunpack.c.l.b16 %v2603
  %v3608 = vunpack.c.h.b16 %v2603
  %v3609 = vunpack.c.l.b16 %v2604
  %v3610 = vunpack.c.h.b16 %v2604
  %v3611 = vunpack.c.l.b16 %v2605
  %v3612 = vunpack.c.h.b16 %v2605
  %v3613 = vunpack.c.l.b16 %v2606
  %v3614 = vunpack.c.h.b16 %v2606
  %v3615 = vunpack.c.l.b16 %v2607
  %v3616 = vunpack.c.h.b16 %v2607
  %v3617 = vunpack.c.l.b16 %v2608
  %v3618 = vunpack.c.h.b16 %v2608
  %v3619 = vunpack.c.l.b16 %v2609
  %v3620 = vunpack.c.h.b16 %v2609
  %v3621 = vunpack.c.l.b16 %v2610
  %v3622 = vunpack.c.h.b16 %v2610
  %v3623 = vunpack.c.l.b16 %v2611
  %v3624 = vunpack.c.h.b16 %v2611
  %v3625 = vunpack.c.l.b16 %v2612
  %v3626 = vunpack.c.h.b16 %v2612
  %v3627 = vunpack.c.l.b16 %v2613
  %v3628 = vunpack.c.h.b16 %v2613
  %v3629 = vunpack.c.l.b16 %v2614
  %v3630 = vunpack.c.h.b16 %v2614
  %v3631 = vunpack.c.l.b16 %v2615
  %v3632 = vunpack.c.h.b16 %v2615
  %v3633 = vunpack.c.l.b16 %v2616
  %v3634 = vunpack.c.h.b16 %v2616
  %v3635 = vunpack.c.l.b16 %v2617
  %v3636 = vunpack.c.h.b16 %v2617
  %v3637 = vunpack.c.l.b16 %v2618
  %v3638 = vunpack.c.h.b16 %v2618
  %v3639 = vunpack.c.l.b16 %v2619
  %v3640 = vunpack.c.h.b16 %v2619
  %v3641 = vunpack.c.l.b16 %v2620
  %v3642 = vunpack.c.h.b16 %v2620
  %v3643 = vunpack.c.l.b16 %v2621
  %v3644 = vunpack.c.h.b16 %v2621
  %v3645 = vunpack.c.l.b16 %v2622
  %v3646 = vunpack.c.h.b16 %v2622
  %v3647 = vunpack.c.l.b16 %v2623
  %v3648 = vunpack.c.h.b16 %v2623
  %v3649 = vunpack.c.l.b16 %v2624
  %v3650 = vunpack.c.h.b16 %v2624
  %v3651 = vunpack.c.l.b16 %v2625
  %v3652 = vunpack.c.h.b16 %v2625
  %v3653 = vunpack.c.l.b16 %v2626
  %v3654 = vunpack.c.h.b16 %v2626
  %v3655 = vunpack.c.l.b16 %v2627
  %v3656 = vunpack.c.h.b16 %v2627
  %v3657 = vunpack.c.l.b16 %v2628
  %v3658 = vunpack.c.h.b16 %v2628
  %v3659 = vunpack.c.l.b16 %v2629
  %v3660 = vunpack.c.h.b16 %v2629
  %v3661 = vunpack.c.l.b16 %v2630
  %v3662 = vunpack.c.h.b16 %v2630
  %v3663 = vunpack.c.l.b16 %v2631
  %v3664 = vunpack.c.h.b16 %v2631
  %v3665 = vunpack.c.l.b16 %v2632
  %v3666 = vunpack.c.h.b16 %v2632
  %v3667 = vunpack.c.l.b16 %v2633
  %v3668 = vunpack.c.h.b16 %v2633
  %v3669 = vunpack.c.l.b16 %v2634
  %v3670 = vunpack.c.h.b16 %v2634
  %v3671 = vunpack.c.l.b16 %v2635
  %v3672 = vunpack.c.h.b16 %v2635
  %v3673 = vunpack.c.l.b16 %v2636
  %v3674 = vunpack.c.h.b16 %v2636
  %v3675 = vunpack.c.l.b16 %v2637
  %v3676 = vunpack.c.h.b16 %v2637
  %v3677 = vunpack.c.l.b16 %v2638
  %v3678 = vunpack.c.h.b16 %v2638
  %v3679 = vunpack.c.l.b16 %v2639
  %v3680 = vunpack.c.h.b16 %v2639
  %v3681 = vunpack.c.l.b16 %v2640
  %v3682 = vunpack.c.h.b16 %v2640
  %v3683 = vunpack.c.l.b16 %v2641
  %v3684 = vunpack.c.h.b16 %v2641
  %v3685 = vunpack.c.l.b16 %v2642
  %v3686 = vunpack.c.h.b16 %v2642
  %v3687 = vunpack.c.l.b16 %v2643
  %v3688 = vunpack.c.h.b16 %v2643
  %v3689 = vunpack.c.l.b16 %v2644
  %v3690 = vunpack.c.h.b16 %v2644
  %v3691 = vunpack.c.l.b16 %v2645
  %v3692 = vunpack.c.h.b16 %v2645
  %v3693 = vunpack.c.l.b16 %v2646
  %v3694 = vunpack.c.h.b16 %v2646
  %v3695 = vunpack.c.l.b16 %v2647
  %v3696 = vunpack.c.h.b16 %v2647
  %v3697 = vunpack.c.l.b16 %v2648
  %v3698 = vunpack.c.h.b16 %v2648
  %v3699 = vunpack.c.l.b16 %v2649
  %v3700 = vunpack.c.h.b16 %v2649
  %v3701 = vunpack.c.l.b16 %v2650
  %v3702 = vunpack.c.h.b16 %v2650
  %v3703 = vunpack.c.l.b16 %v2651
  %v3704 = vunpack.c.h.b16 %v2651
  %v3705 = vunpack.c.l.b16 %v2652
  %v3706 = vunpack.c.h.b16 %v2652
  %v3707 = vunpack.c.l.b16 %v2653
  %v3708 = vunpack.c.h.b16 %v2653
  %v3709 = vunpack.c.l.b16 %v2654
  %v3710 = vunpack.c.h.b16 %v2654
  %v3711 = vunpack.c.l.b16 %v2655
  %v3712 = vunpack.c.h.b16 %v2655
  %v3713 = vunpack.c.l.b16 %v2656
  %v3714 = vunpack.c.h.b16 %v2656
  %v3715 = vunpack.c.l.b16 %v2657
  %v3716 = vunpack.c.h.b16 %v2657
  %v3717 = vunpack.c.l.b16 %v2658
  %v3718 = vunpack.c.h.b16 %v2658
  %v3719 = vunpack.c.l.b16 %v2659
  %v3720 = vunpack.c.h.b16 %v2659
  %v3721 = vunpack.c.l.b16 %v2660
  %v3722 = vunpack.c.h.b16 %v2660
  %v3723 = vunpack.c.l.b16 %v2661
  %v3724 = vunpack.c.h.b16 %v2661
  %v3725 = vunpack.c.l.b16 %v2662
  %v3726 = vunpack.c.h.b16 %v2662
  %v3727 = vunpack.c.l.b16 %v2663
  %v3728 = vunpack.c.h.b16 %v2663
  %v3729 = vunpack.c.l.b16 %v2664
  %v3730 = vunpack.c.h.b16 %v2664
  %v3731 = vunpack.c.l.b16 %v2665
  %v3732 = vunpack.c.h.b16 %v2665
  %v3733 = vunpack.c.l.b16 %v2666
  %v3734 = vunpack.c.h.b16 %v2666
  %v3735 = vunpack.c.l.b16 %v2667
  %v3736 = vunpack.c.h.b16 %v2667
  %v3737 = vunpack.c.l.b16 %v2668
  %v3738 = vunpack.c.h.b16 %v2668
  %v3739 = vunpack.c.l.b16 %v2669
  %v3740 = vunpack.c.h.b16 %v2669
  %v3741 = vunpack.c.l.b16 %v2670
  %v3742 = vunpack.c.h.b16 %v2670
  %v3743 = vunpack.c.l.b16 %v2671
  %v3744 = vunpack.c.h.b16 %v2671
  %v3745 = vunpack.c.l.b16 %v2672
  %v3746 = vunpack.c.h.b16 %v2672
  %v3747 = vunpack.c.l.b16 %v2673
  %v3748 = vunpack.c.h.b16 %v2673
  %v3749 = vunpack.c.l.b16 %v2674
  %v3750 = vunpack.c.h.b16 %v2674
  %v3751 = vunpack.c.l.b16 %v2675
  %v3752 = vunpack.c.h.b16 %v2675
  %v3753 = vunpack.c.l.b16 %v2676
  %v3754 = vunpack.c.h.b16 %v2676
  %v3755 = vunpack.c.l.b16 %v2677
  %v3756 = vunpack.c.h.b16 %v2677
  %v3757 = vunpack.c.l.b16 %v2678
  %v3758 = vunpack.c.h.b16 %v2678
  %v3759 = vunpack.c.l.b16 %v2679
  %v3760 = vunpack.c.h.b16 %v2679
  %v3761 = vunpack.c.l.b16 %v2680
  %v3762 = vunpack.c.h.b16 %v2680
  %v3763 = vunpack.c.l.b16 %v2681
  %v3764 = vunpack.c.h.b16 %v2681
  %v3765 = vunpack.c.l.b16 %v2682
  %v3766 = vunpack.c.h.b16 %v2682
  %v3767 = vunpack.c.l.b16 %v2683
  %v3768 = vunpack.c.h.b16 %v2683
  %v3769 = vunpack.c.l.b16 %v2684
  %v3770 = vunpack.c.h.b16 %v2684
  %v3771 = vunpack.c.l.b16 %v2685
  %v3772 = vunpack.c.h.b16 %v2685
  %v3773 = vunpack.c.l.b16 %v2686
  %v3774 = vunpack.c.h.b16 %v2686
  %v3775 = vunpack.c.l.b16 %v2687
  %v3776 = vunpack.c.h.b16 %v2687
  %v3777 = vunpack.c.l.b16 %v2688
  %v3778 = vunpack.c.h.b16 %v2688
  %v3779 = vunpack.c.l.b16 %v2689
  %v3780 = vunpack.c.h.b16 %v2689
  %v3781 = vunpack.c.l.b16 %v2690
  %v3782 = vunpack.c.h.b16 %v2690
  %v3783 = vunpack.c.l.b16 %v2691
  %v3784 = vunpack.c.h.b16 %v2691
  %v3785 = vunpack.c.l.b16 %v2692
  %v3786 = vunpack.c.h.b16 %v2692
  %v3787 = vunpack.c.l.b16 %v2693
  %v3788 = vunpack.c.h.b16 %v2693
  %v3789 = vunpack.c.l.b16 %v2694
  %v3790 = vunpack.c.h.b16 %v2694
  %v3791 = vunpack.c.l.b16 %v2695
  %v3792 = vunpack.c.h.b16 %v2695
  %v3793 = vunpack.c.l.b16 %v2696
  %v3794 = vunpack.c.h.b16 %v2696
  %v3795 = vunpack.c.l.b16 %v2697
  %v3796 = vunpack.c.h.b16 %v2697
  %v3797 = vunpack.c.l.b16 %v2698
  %v3798 = vunpack.c.h.b16 %v2698
  %v3799 = vunpack.c.l.b16 %v2699
  %v3800 = vunpack.c.h.b16 %v2699
  %v3801 = vunpack.c.l.b16 %v2700
  %v3802 = vunpack.c.h.b16 %v2700
  %v3803 = vunpack.c.l.b16 %v2701
  %v3804 = vunpack.c.h.b16 %v2701
  %v3805 = vunpack.c.l.b16 %v2702
  %v3806 = vunpack.c.h.b16 %v2702
  %v3807 = vunpack.c.l.b16 %v2703
  %v3808 = vunpack.c.h.b16 %v2703
  %v3809 = vunpack.c.l.b16 %v2704
  %v3810 = vunpack.c.h.b16 %v2704
  %v3811 = vunpack.c.l.b16 %v2705
  %v3812 = vunpack.c.h.b16 %v2705
  %v3813 = vunpack.c.l.b16 %v2706
  %v3814 = vunpack.c.h.b16 %v2706
  %v3815 = vunpack.c.l.b16 %v2707
  %v3816 = vunpack.c.h.b16 %v2707
  %v3817 = vunpack.c.l.b16 %v2708
  %v3818 = vunpack.c.h.b16 %v2708
  %v3819 = vunpack.c.l.b16 %v2709
  %v3820 = vunpack.c.h.b16 %v2709
  %v3821 = vunpack.c.l.b16 %v2710
  %v3822 = vunpack.c.h.b16 %v2710
  %v3823 = vunpack.c.l.b16 %v2711
  %v3824 = vunpack.c.h.b16 %v2711
  %v3825 = vunpack.c.l.b16 %v2712
  %v3826 = vunpack.c.h.b16 %v2712
  %v3827 = vunpack.c.l.b16 %v2713
  %v3828 = vunpack.c.h.b16 %v2713
  %v3829 = vunpack.c.l.b16 %v2714
  %v3830 = vunpack.c.h.b16 %v2714
  %v3831 = vunpack.c.l.b16 %v2715
  %v3832 = vunpack.c.h.b16 %v2715
  %v3833 = vunpack.c.l.b16 %v2716
  %v3834 = vunpack.c.h.b16 %v2716
  %v3835 = vunpack.c.l.b16 %v2717
  %v3836 = vunpack.c.h.b16 %v2717
  %v3837 = vunpack.c.l.b16 %v2718
  %v3838 = vunpack.c.h.b16 %v2718
  %v3839 = vunpack.c.l.b16 %v2719
  %v3840 = vunpack.c.h.b16 %v2719
  %v3841 = vunpack.c.l.b16 %v2720
  %v3842 = vunpack.c.h.b16 %v2720
  %v3843 = vunpack.c.l.b16 %v2721
  %v3844 = vunpack.c.h.b16 %v2721
  %v3845 = vunpack.c.l.b16 %v2722
  %v3846 = vunpack.c.h.b16 %v2722
  %v3847 = vunpack.c.l.b16 %v2723
  %v3848 = vunpack.c.h.b16 %v2723
  %v3849 = vunpack.c.l.b16 %v2724
  %v3850 = vunpack.c.h.b16 %v2724
  %v3851 = vunpack.c.l.b16 %v2725
  %v3852 = vunpack.c.h.b16 %v2725
  %v3853 = vunpack.c.l.b16 %v2726
  %v3854 = vunpack.c.h.b16 %v2726
  %v3855 = vunpack.c.l.b16 %v2727
  %v3856 = vunpack.c.h.b16 %v2727
  %v3857 = vunpack.c.l.b16 %v2728
  %v3858 = vunpack.c.h.b16 %v2728
  %v3859 = vunpack.c.l.b16 %v2729
  %v3860 = vunpack.c.h.b16 %v2729
  %v3861 = vunpack.c.l.b16 %v2730
  %v3862 = vunpack.c.h.b16 %v2730
  %v3863 = vunpack.c.l.b16 %v2731
  %v3864 = vunpack.c.h.b16 %v2731
  %v3865 = vunpack.c.l.b16 %v2732
  %v3866 = vunpack.c.h.b16 %v2732
  %v3867 = vunpack.c.l.b16 %v2733
  %v3868 = vunpack.c.h.b16 %v2733
  %v3869 = vunpack.c.l.b16 %v2734
  %v3870 = vunpack.c.h.b16 %v2734
  %v3871 = vunpack.c.l.b16 %v2735
  %v3872 = vunpack.c.h.b16 %v2735
  %v3873 = vunpack.c.l.b16 %v2736
  %v3874 = vunpack.c.h.b16 %v2736
  %v3875 = vunpack.c.l.b16 %v2737
  %v3876 = vunpack.c.h.b16 %v2737
  %v3877 = vunpack.c.l.b16 %v2738
  %v3878 = vunpack.c.h.b16 %v2738
  %v3879 = vunpack.c.l.b16 %v2739
  %v3880 = vunpack.c.h.b16 %v2739
  %v3881 = vunpack.c.l.b16 %v2740
  %v3882 = vunpack.c.h.b16 %v2740
  %v3883 = vunpack.c.l.b16 %v2741
  %v3884 = vunpack.c.h.b16 %v2741
  %v3885 = vunpack.c.l.b16 %v2742
  %v3886 = vunpack.c.h.b16 %v2742
  %v3887 = vunpack.c.l.b16 %v2743
  %v3888 = vunpack.c.h.b16 %v2743
  %v3889 = vunpack.c.l.b16 %v2744
  %v3890 = vunpack.c.h.b16 %v2744
  %v3891 = vunpack.c.l.b16 %v2745
  %v3892 = vunpack.c.h.b16 %v2745
  %v3893 = vunpack.c.l.b16 %v2746
  %v3894 = vunpack.c.h.b16 %v2746
  %v3895 = vunpack.c.l.b16 %v2747
  %v3896 = vunpack.c.h.b16 %v2747
  %v3897 = vunpack.c.l.b16 %v2748
  %v3898 = vunpack.c.h.b16 %v2748
  %v3899 = vunpack.c.l.b16 %v2749
  %v3900 = vunpack.c.h.b16 %v2749
  %v3901 = vunpack.c.l.b16 %v2750
  %v3902 = vunpack.c.h.b16 %v2750
  %v3903 = vunpack.c.l.b16 %v2751
  %v3904 = vunpack.c.h.b16 %v2751
  %v3905 = vunpack.c.l.b16 %v2752
  %v3906 = vunpack.c.h.b16 %v2752
  %v3907 = vunpack.c.l.b16 %v2753
  %v3908 = vunpack.c.h.b16 %v2753
  %v3909 = vunpack.c.l.b16 %v2754
  %v3910 = vunpack.c.h.b16 %v2754
  %v3911 = vunpack.c.l.b16 %v2755
  %v3912 = vunpack.c.h.b16 %v2755
  %v3913 = vunpack.c.l.b16 %v2756
  %v3914 = vunpack.c.h.b16 %v2756
  %v3915 = vunpack.c.l.b16 %v2757
  %v3916 = vunpack.c.h.b16 %v2757
  %v3917 = vunpack.c.l.b16 %v2758
  %v3918 = vunpack.c.h.b16 %v2758
  %v3919 = vunpack.c.l.b16 %v2759
  %v3920 = vunpack.c.h.b16 %v2759
  %v3921 = vunpack.c.l.b16 %v2760
  %v3922 = vunpack.c.h.b16 %v2760
  %v3923 = vunpack.c.l.b16 %v2761
  %v3924 = vunpack.c.h.b16 %v2761
  %v3925 = vunpack.c.l.b16 %v2762
  %v3926 = vunpack.c.h.b16 %v2762
  %v3927 = vunpack.c.l.b16 %v2763
  %v3928 = vunpack.c.h.b16 %v2763
  %v3929 = vunpack.c.l.b16 %v2764
  %v3930 = vunpack.c.h.b16 %v2764
  %v3931 = vunpack.c.l.b16 %v2765
  %v3932 = vunpack.c.h.b16 %v2765
  %v3933 = vunpack.c.l.b16 %v2766
  %v3934 = vunpack.c.h.b16 %v2766
  %v3935 = vunpack.c.l.b16 %v2767
  %v3936 = vunpack.c.h.b16 %v2767
  %v3937 = vunpack.c.l.b16 %v2768
  %v3938 = vunpack.c.h.b16 %v2768
  %v3939 = vunpack.c.l.b16 %v2769
  %v3940 = vunpack.c.h.b16 %v2769
  %v3941 = vunpack.c.l.b16 %v2770
  %v3942 = vunpack.c.h.b16 %v2770
  %v3943 = vunpack.c.l.b16 %v2771
  %v3944 = vunpack.c.h.b16 %v2771
  %v3945 = vunpack.c.l.b16 %v2772
  %v3946 = vunpack.c.h.b16 %v2772
  %v3947 = vunpack.c.l.b16 %v2773
  %v3948 = vunpack.c.h.b16 %v2773
  %v3949 = vunpack.c.l.b16 %v2774
  %v3950 = vunpack.c.h.b16 %v2774
  %v3951 = vunpack.c.l.b16 %v2775
  %v3952 = vunpack.c.h.b16 %v2775
  %v3953 = vunpack.c.l.b16 %v2776
  %v3954 = vunpack.c.h.b16 %v2776
  %v3955 = vunpack.c.l.b16 %v2777
  %v3956 = vunpack.c.h.b16 %v2777
  %v3957 = vunpack.c.l.b16 %v2778
  %v3958 = vunpack.c.h.b16 %v2778
  %v3959 = vunpack.c.l.b16 %v2779
  %v3960 = vunpack.c.h.b16 %v2779
  %v3961 = vunpack.c.l.b16 %v2780
  %v3962 = vunpack.c.h.b16 %v2780
  %v3963 = vunpack.c.l.b16 %v2781
  %v3964 = vunpack.c.h.b16 %v2781
  %v3965 = vunpack.c.l.b16 %v2782
  %v3966 = vunpack.c.h.b16 %v2782
  %v3967 = vunpack.c.l.b16 %v2783
  %v3968 = vunpack.c.h.b16 %v2783
  %v3969 = vunpack.c.l.b16 %v2784
  %v3970 = vunpack.c.h.b16 %v2784
  %v3971 = vunpack.c.l.b16 %v2785
  %v3972 = vunpack.c.h.b16 %v2785
  %v3973 = vunpack.c.l.b16 %v2786
  %v3974 = vunpack.c.h.b16 %v2786
  %v3975 = vunpack.c.l.b16 %v2787
  %v3976 = vunpack.c.h.b16 %v2787
  %v3977 = vunpack.c.l.b16 %v2788
  %v3978 = vunpack.c.h.b16 %v2788
  %v3979 = vunpack.c.l.b16 %v2789
  %v3980 = vunpack.c.h.b16 %v2789
  %v3981 = vunpack.c.l.b16 %v2790
  %v3982 = vunpack.c.h.b16 %v2790
  %v3983 = vunpack.c.l.b16 %v2791
  %v3984 = vunpack.c.h.b16 %v2791
  %v3985 = vunpack.c.l.b16 %v2792
  %v3986 = vunpack.c.h.b16 %v2792
  %v3987 = vunpack.c.l.b16 %v2793
  %v3988 = vunpack.c.h.b16 %v2793
  %v3989 = vunpack.c.l.b16 %v2794
  %v3990 = vunpack.c.h.b16 %v2794
  %v3991 = vunpack.c.l.b16 %v2795
  %v3992 = vunpack.c.h.b16 %v2795
  %v3993 = vunpack.c.l.b16 %v2796
  %v3994 = vunpack.c.h.b16 %v2796
  %v3995 = vunpack.c.l.b16 %v2797
  %v3996 = vunpack.c.h.b16 %v2797
  %v3997 = vunpack.c.l.b16 %v2798
  %v3998 = vunpack.c.h.b16 %v2798
  %v3999 = vunpack.c.l.b16 %v2799
  %v4000 = vunpack.c.h.b16 %v2799
  %v4001 = vunpack.c.l.b16 %v2800
  %v4002 = vunpack.c.h.b16 %v2800
  %v4003 = vunpack.c.l.b16 %v2801
  %v4004 = vunpack.c.h.b16 %v2801
  %v4005 = vunpack.c.l.b16 %v2802
  %v4006 = vunpack.c.h.b16 %v2802
  %v4007 = vunpack.c.l.b16 %v2803
  %v4008 = vunpack.c.h.b16 %v2803
  %v4009 = vunpack.c.l.b16 %v2804
  %v4010 = vunpack.c.h.b16 %v2804
  %v4011 = vunpack.c.l.b16 %v2805
  %v4012 = vunpack.c.h.b16 %v2805
  %v4013 = vunpack.c.l.b16 %v2806
  %v4014 = vunpack.c.h.b16 %v2806
  %v4015 = vunpack.c.l.b16 %v2807
  %v4016 = vunpack.c.h.b16 %v2807
  %v4017 = vunpack.c.l.b16 %v2808
  %v4018 = vunpack.c.h.b16 %v2808
  %v4019 = vunpack.c.l.b16 %v2809
  %v4020 = vunpack.c.h.b16 %v2809
  %v4021 = vunpack.c.l.b16 %v2810
  %v4022 = vunpack.c.h.b16 %v2810
  %v4023 = vunpack.c.l.b16 %v2811
  %v4024 = vunpack.c.h.b16 %v2811
  %v4025 = vunpack.c.l.b16 %v2812
  %v4026 = vunpack.c.h.b16 %v2812
  %v4027 = vunpack.c.l.b16 %v2813
  %v4028 = vunpack.c.h.b16 %v2813
  %v4029 = vunpack.c.l.b16 %v2814
  %v4030 = vunpack.c.h.b16 %v2814
  %v4031 = vunpack.c.l.b16 %v2815
  %v4032 = vunpack.c.h.b16 %v2815
  %v4033 = vunpack.c.l.b16 %v2816
  %v4034 = vunpack.c.h.b16 %v2816
  %v4035 = vunpack.c.l.b16 %v2817
  %v4036 = vunpack.c.h.b16 %v2817
  %v4037 = vunpack.c.l.b16 %v2818
  %v4038 = vunpack.c.h.b16 %v2818
  %v4039 = vunpack.c.l.b16 %v2819
  %v4040 = vunpack.c.h.b16 %v2819
  %v4041 = vunpack.c.l.b16 %v2820
  %v4042 = vunpack.c.h.b16 %v2820
  %v4043 = vunpack.c.l.b16 %v2821
  %v4044 = vunpack.c.h.b16 %v2821
  %v4045 = vunpack.c.l.b16 %v2822
  %v4046 = vunpack.c.h.b16 %v2822
  %v4047 = vunpack.c.l.b16 %v2823
  %v4048 = vunpack.c.h.b16 %v2823
  %v4049 = vunpack.c.l.b16 %v2824
  %v4050 = vunpack.c.h.b16 %v2824
  %v4051 = vunpack.c.l.b16 %v2825
  %v4052 = vunpack.c.h.b16 %v2825
  %v4053 = vunpack.c.l.b16 %v2826
  %v4054 = vunpack.c.h.b16 %v2826
  %v4055 = vunpack.c.l.b16 %v2827
  %v4056 = vunpack.c.h.b16 %v2827
  %v4057 = vunpack.c.l.b16 %v2828
  %v4058 = vunpack.c.h.b16 %v2828
  %v4059 = vunpack.c.l.b16 %v2829
  %v4060 = vunpack.c.h.b16 %v2829
  %v4061 = vunpack.c.l.b16 %v2830
  %v4062 = vunpack.c.h.b16 %v2830
  %v4063 = vunpack.c.l.b16 %v2831
  %v4064 = vunpack.c.h.b16 %v2831
  %v4065 = vunpack.c.l.b16 %v2832
  %v4066 = vunpack.c.h.b16 %v2832
  %v4067 = vunpack.c.l.b16 %v2833
  %v4068 = vunpack.c.h.b16 %v2833
  %v4069 = vunpack.c.l.b16 %v2834
  %v4070 = vunpack.c.h.b16 %v2834
  %v4071 = vunpack.c.l.b16 %v2835
  %v4072 = vunpack.c.h.b16 %v2835
  %v4073 = vunpack.c.l.b16 %v2836
  %v4074 = vunpack.c.h.b16 %v2836
  %v4075 = vunpack.c.l.b16 %v2837
  %v4076 = vunpack.c.h.b16 %v2837
  %v4077 = vunpack.c.l.b16 %v2838
  %v4078 = vunpack.c.h.b16 %v2838
  %v4079 = vunpack.c.l.b16 %v2839
  %v4080 = vunpack.c.h.b16 %v2839
  %v4081 = vunpack.c.l.b16 %v2840
  %v4082 = vunpack.c.h.b16 %v2840
  %v4083 = vunpack.c.l.b16 %v2841
  %v4084 = vunpack.c.h.b16 %v2841
  %v4085 = vunpack.c.l.b16 %v2842
  %v4086 = vunpack.c.h.b16 %v2842
  %v4087 = vunpack.c.l.b16 %v2843
  %v4088 = vunpack.c.h.b16 %v2843
  %v4089 = vunpack.c.l.b16 %v2844
  %v4090 = vunpack.c.h.b16 %v2844
  %v4091 = vunpack.c.l.b16 %v2845
  %v4092 = vunpack.c.h.b16 %v2845
  %v4093 = vunpack.c.l.b16 %v2846
  %v4094 = vunpack.c.h.b16 %v2846
  %v4095 = vunpack.c.l.b16 %v2847
  %v4096 = vunpack.c.h.b16 %v2847
  %v4097 = vunpack.c.l.b16 %v2848
  %v4098 = vunpack.c.h.b16 %v2848
  %v4099 = vunpack.c.l.b16 %v2849
  %v4100 = vunpack.c.h.b16 %v2849
  %v4101 = vunpack.c.l.b16 %v2850
  %v4102 = vunpack.c.h.b16 %v2850
  %v4103 = vunpack.c.l.b16 %v2851
  %v4104 = vunpack.c.h.b16 %v2851
  %v4105 = vunpack.c.l.b16 %v2852
  %v4106 = vunpack.c.h.b16 %v2852
  %v4107 = vunpack.c.l.b16 %v2853
  %v4108 = vunpack.c.h.b16 %v2853
  %v4109 = vunpack.c.l.b16 %v2854
  %v4110 = vunpack.c.h.b16 %v2854
  %v4111 = vunpack.c.l.b16 %v2855
  %v4112 = vunpack.c.h.b16 %v2855
  %v4113 = vunpack.c.l.b16 %v2856
  %v4114 = vunpack.c.h.b16 %v2856
  %v4115 = vunpack.c.l.b16 %v2857
  %v4116 = vunpack.c.h.b16 %v2857
  %v4117 = vunpack.c.l.b16 %v2858
  %v4118 = vunpack.c.h.b16 %v2858
  %v4119 = vunpack.c.l.b16 %v2859
  %v4120 = vunpack.c.h.b16 %v2859
  %v4121 = vunpack.c.l.b16 %v2860
  %v4122 = vunpack.c.h.b16 %v2860
  %v4123 = vunpack.c.l.b16 %v2861
  %v4124 = vunpack.c.h.b16 %v2861
  %v4125 = vunpack.c.l.b16 %v2862
  %v4126 = vunpack.c.h.b16 %v2862
  %v4127 = vunpack.c.l.b16 %v2863
  %v4128 = vunpack.c.h.b16 %v2863
  %v4129 = vunpack.c.l.b16 %v2864
  %v4130 = vunpack.c.h.b16 %v2864
  %v4131 = vunpack.c.l.b16 %v2865
  %v4132 = vunpack.c.h.b16 %v2865
  %v4133 = vunpack.c.l.b16 %v2866
  %v4134 = vunpack.c.h.b16 %v2866
  %v4135 = vunpack.c.l.b16 %v2867
  %v4136 = vunpack.c.h.b16 %v2867
  %v4137 = vunpack.c.l.b16 %v2868
  %v4138 = vunpack.c.h.b16 %v2868
  %v4139 = vunpack.c.l.b16 %v2869
  %v4140 = vunpack.c.h.b16 %v2869
  %v4141 = vunpack.c.l.b16 %v2870
  %v4142 = vunpack.c.h.b16 %v2870
  %v4143 = vunpack.c.l.b16 %v2871
  %v4144 = vunpack.c.h.b16 %v2871
  %v4145 = vunpack.c.l.b16 %v2872
  %v4146 = vunpack.c.h.b16 %v2872
  %v4147 = vunpack.c.l.b16 %v2873
  %v4148 = vunpack.c.h.b16 %v2873
  %v4149 = vunpack.c.l.b16 %v2874
  %v4150 = vunpack.c.h.b16 %v2874
  %v4151 = vunpack.c.l.b16 %v2875
  %v4152 = vunpack.c.h.b16 %v2875
  %v4153 = vunpack.c.l.b16 %v2876
  %v4154 = vunpack.c.h.b16 %v2876
  %v4155 = vunpack.c.l.b16 %v2877
  %v4156 = vunpack.c.h.b16 %v2877
  %v4157 = vunpack.c.l.b16 %v2878
  %v4158 = vunpack.c.h.b16 %v2878
  %v4159 = vunpack.c.l.b16 %v2879
  %v4160 = vunpack.c.h.b16 %v2879
  %v4161 = vunpack.c.l.b16 %v2880
  %v4162 = vunpack.c.h.b16 %v2880
  %v4163 = vunpack.c.l.b16 %v2881
  %v4164 = vunpack.c.h.b16 %v2881
  %v4165 = vunpack.c.l.b16 %v2882
  %v4166 = vunpack.c.h.b16 %v2882
  %v4167 = vunpack.c.l.b16 %v2883
  %v4168 = vunpack.c.h.b16 %v2883
  %v4169 = vunpack.c.l.b16 %v2884
  %v4170 = vunpack.c.h.b16 %v2884
  %v4171 = vunpack.c.l.b16 %v2885
  %v4172 = vunpack.c.h.b16 %v2885
  %v4173 = vunpack.c.l.b16 %v2886
  %v4174 = vunpack.c.h.b16 %v2886
  %v4175 = vunpack.c.l.b16 %v2887
  %v4176 = vunpack.c.h.b16 %v2887
  %v4177 = vunpack.c.l.b16 %v2888
  %v4178 = vunpack.c.h.b16 %v2888
  %v4179 = vunpack.c.l.b16 %v2889
  %v4180 = vunpack.c.h.b16 %v2889
  %v4181 = vunpack.c.l.b16 %v2890
  %v4182 = vunpack.c.h.b16 %v2890
  %v4183 = vunpack.c.l.b16 %v2891
  %v4184 = vunpack.c.h.b16 %v2891
  %v4185 = vunpack.c.l.b16 %v2892
  %v4186 = vunpack.c.h.b16 %v2892
  %v4187 = vunpack.c.l.b16 %v2893
  %v4188 = vunpack.c.h.b16 %v2893
  %v4189 = vunpack.c.l.b16 %v2894
  %v4190 = vunpack.c.h.b16 %v2894
  %v4191 = vpack.c.b16 %v3345, %v3327
  %v4192 = vpack.c.b16 %v3346, %v3328
  %v4193 = vpack.c.b16 %v3347, %v3329
  %v4194 = vpack.c.b16 %v3348, %v3330
  %v4195 = vpack.c.b16 %v3349, %v3331
  %v4196 = vpack.c.b16 %v3350, %v3332
  %v4197 = vpack.c.b16 %v3351, %v3333
  %v4198 = vpack.c.b16 %v3352, %v3334
  %v4199 = vpack.c.b16 %v3353, %v3335
  %v4200 = vpack.c.b16 %v3354, %v3336
  %v4201 = vpack.c.b16 %v3355, %v3337
  %v4202 = vpack.c.b16 %v3356, %v3338
  %v4203 = vpack.c.b16 %v3357, %v3339
  %v4204 = vpack.c.b16 %v3358, %v3340
  %v4205 = vpack.c.b16 %v3359, %v3341
  %v4206 = vpack.c.b16 %v3360, %v3342
  %v4207 = vpack.c.b16 %v3361, %v3343
  %v4208 = vpack.c.b16 %v3362, %v3344
  %v4209 = vpack.c.b16 %v3381, %v3363
  %v4210 = vpack.c.b16 %v3382, %v3364
  %v4211 = vpack.c.b16 %v3383, %v3365
  %v4212 = vpack.c.b16 %v3384, %v3366
  %v4213 = vpack.c.b16 %v3385, %v3367
  %v4214 = vpack.c.b16 %v3386, %v3368
  %v4215 = vpack.c.b16 %v3387, %v3369
  %v4216 = vpack.c.b16 %v3388, %v3370
  %v4217 = vpack.c.b16 %v3389, %v3371
  %v4218 = vpack.c.b16 %v3390, %v3372
  %v4219 = vpack.c.b16 %v3391, %v3373
  %v4220 = vpack.c.b16 %v3392, %v3374
  %v4221 = vpack.c.b16 %v3393, %v3375
  %v4222 = vpack.c.b16 %v3394, %v3376
  %v4223 = vpack.c.b16 %v3395, %v3377
  %v4224 = vpack.c.b16 %v3396, %v3378
  %v4225 = vpack.c.b16 %v3397, %v3379
  %v4226 = vpack.c.b16 %v3398, %v3380
  %v4227 = vpack.c.b16 %v3417, %v3399
  %v4228 = vpack.c.b16 %v3418, %v3400
  %v4229 = vpack.c.b16 %v3419, %v3401
  %v4230 = vpack.c.b16 %v3420, %v3402
  %v4231 = vpack.c.b16 %v3421, %v3403
  %v4232 = vpack.c.b16 %v3422, %v3404
  %v4233 = vpack.c.b16 %v3423, %v3405
  %v4234 = vpack.c.b16 %v3424, %v3406
  %v4235 = vpack.c.b16 %v3425, %v3407
  %v4236 = vpack.c.b16 %v3426, %v3408
  %v4237 = vpack.c.b16 %v3427, %v3409
  %v4238 = vpack.c.b16 %v3428, %v3410
  %v4239 = vpack.c.b16 %v3429, %v3411
  %v4240 = vpack.c.b16 %v3430, %v3412
  %v4241 = vpack.c.b16 %v3431, %v3413
  %v4242 = vpack.c.b16 %v3432, %v3414
  %v4243 = vpack.c.b16 %v3433, %v3415
  %v4244 = vpack.c.b16 %v3434, %v3416
  %v4245 = vpack.c.b16 %v3453, %v3435
  %v4246 = vpack.c.b16 %v3454, %v3436
  %v4247 = vpack.c.b16 %v3455, %v3437
  %v4248 = vpack.c.b16 %v3456, %v3438
  %v4249 = vpack.c.b16 %v3457, %v3439
  %v4250 = vpack.c.b16 %v3458, %v3440
  %v4251 = vpack.c.b16 %v3459, %v3441
  %v4252 = vpack.c.b16 %v3460, %v3442
  %v4253 = vpack.c.b16 %v3461, %v3443
  %v4254 = vpack.c.b16 %v3462, %v3444
  %v4255 = vpack.c.b16 %v3463, %v3445
  %v4256 = vpack.c.b16 %v3464, %v3446
  %v4257 = vpack.c.b16 %v3465, %v3447
  %v4258 = vpack.c.b16 %v3466, %v3448
  %v4259 = vpack.c.b16 %v3467, %v3449
  %v4260 = vpack.c.b16 %v3468, %v3450
  %v4261 = vpack.c.b16 %v3469, %v3451
  %v4262 = vpack.c.b16 %v3470, %v3452
  %v4263 = vpack.c.b16 %v3489, %v3471
  %v4264 = vpack.c.b16 %v3490, %v3472
  %v4265 = vpack.c.b16 %v3491, %v3473
  %v4266 = vpack.c.b16 %v3492, %v3474
  %v4267 = vpack.c.b16 %v3493, %v3475
  %v4268 = vpack.c.b16 %v3494, %v3476
  %v4269 = vpack.c.b16 %v3495, %v3477
  %v4270 = vpack.c.b16 %v3496, %v3478
  %v4271 = vpack.c.b16 %v3497, %v3479
  %v4272 = vpack.c.b16 %v3498, %v3480
  %v4273 = vpack.c.b16 %v3499, %v3481
  %v4274 = vpack.c.b16 %v3500, %v3482
  %v4275 = vpack.c.b16 %v3501, %v3483
  %v4276 = vpack.c.b16 %v3502, %v3484
  %v4277 = vpack.c.b16 %v3503, %v3485
  %v4278 = vpack.c.b16 %v3504, %v3486
  %v4279 = vpack.c.b16 %v3505, %v3487
  %v4280 = vpack.c.b16 %v3506, %v3488
  %v4281 = vpack.c.b16 %v3525, %v3507
  %v4282 = vpack.c.b16 %v3526, %v3508
  %v4283 = vpack.c.b16 %v3527, %v3509
  %v4284 = vpack.c.b16 %v3528, %v3510
  %v4285 = vpack.c.b16 %v3529, %v3511
  %v4286 = vpack.c.b16 %v3530, %v3512
  %v4287 = vpack.c.b16 %v3531, %v3513
  %v4288 = vpack.c.b16 %v3532, %v3514
  %v4289 = vpack.c.b16 %v3533, %v3515
  %v4290 = vpack.c.b16 %v3534, %v3516
  %v4291 = vpack.c.b16 %v3535, %v3517
  %v4292 = vpack.c.b16 %v3536, %v3518
  %v4293 = vpack.c.b16 %v3537, %v3519
  %v4294 = vpack.c.b16 %v3538, %v3520
  %v4295 = vpack.c.b16 %v3539, %v3521
  %v4296 = vpack.c.b16 %v3540, %v3522
  %v4297 = vpack.c.b16 %v3541, %v3523
  %v4298 = vpack.c.b16 %v3542, %v3524
  %v4299 = vpack.c.b16 %v3561, %v3543
  %v4300 = vpack.c.b16 %v3562, %v3544
  %v4301 = vpack.c.b16 %v3563, %v3545
  %v4302 = vpack.c.b16 %v3564, %v3546
  %v4303 = vpack.c.b16 %v3565, %v3547
  %v4304 = vpack.c.b16 %v3566, %v3548
  %v4305 = vpack.c.b16 %v3567, %v3549
  %v4306 = vpack.c.b16 %v3568, %v3550
  %v4307 = vpack.c.b16 %v3569, %v3551
  %v4308 = vpack.c.b16 %v3570, %v3552
  %v4309 = vpack.c.b16 %v3571, %v3553
  %v4310 = vpack.c.b16 %v3572, %v3554
  %v4311 = vpack.c.b16 %v3573, %v3555
  %v4312 = vpack.c.b16 %v3574, %v3556
  %v4313 = vpack.c.b16 %v3575, %v3557
  %v4314 = vpack.c.b16 %v3576, %v3558
  %v4315 = vpack.c.b16 %v3577, %v3559
  %v4316 = vpack.c.b16 %v3578, %v3560
  %v4317 = vpack.c.b16 %v3597, %v3579
  %v4318 = vpack.c.b16 %v3598, %v3580
  %v4319 = vpack.c.b16 %v3599, %v3581
  %v4320 = vpack.c.b16 %v3600, %v3582
  %v4321 = vpack.c.b16 %v3601, %v3583
  %v4322 = vpack.c.b16 %v3602, %v3584
  %v4323 = vpack.c.b16 %v3603, %v3585
  %v4324 = vpack.c.b16 %v3604, %v3586
  %v4325 = vpack.c.b16 %v3605, %v3587
  %v4326 = vpack.c.b16 %v3606, %v3588
  %v4327 = vpack.c.b16 %v3607, %v3589
  %v4328 = vpack.c.b16 %v3608, %v3590
  %v4329 = vpack.c.b16 %v3609, %v3591
  %v4330 = vpack.c.b16 %v3610, %v3592
  %v4331 = vpack.c.b16 %v3611, %v3593
  %v4332 = vpack.c.b16 %v3612, %v3594
  %v4333 = vpack.c.b16 %v3613, %v3595
  %v4334 = vpack.c.b16 %v3614, %v3596
  %v4335 = vpack.c.b16 %v3633, %v3615
  %v4336 = vpack.c.b16 %v3634, %v3616
  %v4337 = vpack.c.b16 %v3635, %v3617
  %v4338 = vpack.c.b16 %v3636, %v3618
  %v4339 = vpack.c.b16 %v3637, %v3619
  %v4340 = vpack.c.b16 %v3638, %v3620
  %v4341 = vpack.c.b16 %v3639, %v3621
  %v4342 = vpack.c.b16 %v3640, %v3622
  %v4343 = vpack.c.b16 %v3641, %v3623
  %v4344 = vpack.c.b16 %v3642, %v3624
  %v4345 = vpack.c.b16 %v3643, %v3625
  %v4346 = vpack.c.b16 %v3644, %v3626
  %v4347 = vpack.c.b16 %v3645, %v3627
  %v4348 = vpack.c.b16 %v3646, %v3628
  %v4349 = vpack.c.b16 %v3647, %v3629
  %v4350 = vpack.c.b16 %v3648, %v3630
  %v4351 = vpack.c.b16 %v3649, %v3631
  %v4352 = vpack.c.b16 %v3650, %v3632
  %v4353 = vpack.c.b16 %v3669, %v3651
  %v4354 = vpack.c.b16 %v3670, %v3652
  %v4355 = vpack.c.b16 %v3671, %v3653
  %v4356 = vpack.c.b16 %v3672, %v3654
  %v4357 = vpack.c.b16 %v3673, %v3655
  %v4358 = vpack.c.b16 %v3674, %v3656
  %v4359 = vpack.c.b16 %v3675, %v3657
  %v4360 = vpack.c.b16 %v3676, %v3658
  %v4361 = vpack.c.b16 %v3677, %v3659
  %v4362 = vpack.c.b16 %v3678, %v3660
  %v4363 = vpack.c.b16 %v3679, %v3661
  %v4364 = vpack.c.b16 %v3680, %v3662
  %v4365 = vpack.c.b16 %v3681, %v3663
  %v4366 = vpack.c.b16 %v3682, %v3664
  %v4367 = vpack.c.b16 %v3683, %v3665
  %v4368 = vpack.c.b16 %v3684, %v3666
  %v4369 = vpack.c.b16 %v3685, %v3667
  %v4370 = vpack.c.b16 %v3686, %v3668
  %v4371 = vpack.c.b16 %v3705, %v3687
  %v4372 = vpack.c.b16 %v3706, %v3688
  %v4373 = vpack.c.b16 %v3707, %v3689
  %v4374 = vpack.c.b16 %v3708, %v3690
  %v4375 = vpack.c.b16 %v3709, %v3691
  %v4376 = vpack.c.b16 %v3710, %v3692
  %v4377 = vpack.c.b16 %v3711, %v3693
  %v4378 = vpack.c.b16 %v3712, %v3694
  %v4379 = vpack.c.b16 %v3713, %v3695
  %v4380 = vpack.c.b16 %v3714, %v3696
  %v4381 = vpack.c.b16 %v3715, %v3697
  %v4382 = vpack.c.b16 %v3716, %v3698
  %v4383 = vpack.c.b16 %v3717, %v3699
  %v4384 = vpack.c.b16 %v3718, %v3700
  %v4385 = vpack.c.b16 %v3719, %v3701
  %v4386 = vpack.c.b16 %v3720, %v3702
  %v4387 = vpack.c.b16 %v3721, %v3703
  %v4388 = vpack.c.b16 %v3722, %v3704
  %v4389 = vpack.c.b16 %v3741, %v3723
  %v4390 = vpack.c.b16 %v3742, %v3724
  %v4391 = vpack.c.b16 %v3743, %v3725
  %v4392 = vpack.c.b16 %v3744, %v3726
  %v4393 = vpack.c.b16 %v3745, %v3727
  %v4394 = vpack.c.b16 %v3746, %v3728
  %v4395 = vpack.c.b16 %v3747, %v3729
  %v4396 = vpack.c.b16 %v3748, %v3730
  %v4397 = vpack.c.b16 %v3749, %v3731
  %v4398 = vpack.c.b16 %v3750, %v3732
  %v4399 = vpack.c.b16 %v3751, %v3733
  %v4400 = vpack.c.b16 %v3752, %v3734
  %v4401 = vpack.c.b16 %v3753, %v3735
  %v4402 = vpack.c.b16 %v3754, %v3736
  %v4403 = vpack.c.b16 %v3755, %v3737
  %v4404 = vpack.c.b16 %v3756, %v3738
  %v4405 = vpack.c.b16 %v3757, %v3739
  %v4406 = vpack.c.b16 %v3758, %v3740
  %v4407 = vpack.c.b16 %v3777, %v3759
  %v4408 = vpack.c.b16 %v3778, %v3760
  %v4409 = vpack.c.b16 %v3779, %v3761
  %v4410 = vpack.c.b16 %v3780, %v3762
  %v4411 = vpack.c.b16 %v3781, %v3763
  %v4412 = vpack.c.b16 %v3782, %v3764
  %v4413 = vpack.c.b16 %v3783, %v3765
  %v4414 = vpack.c.b16 %v3784, %v3766
  %v4415 = vpack.c.b16 %v3785, %v3767
  %v4416 = vpack.c.b16 %v3786, %v3768
  %v4417 = vpack.c.b16 %v3787, %v3769
  %v4418 = vpack.c.b16 %v3788, %v3770
  %v4419 = vpack.c.b16 %v3789, %v3771
  %v4420 = vpack.c.b16 %v3790, %v3772
  %v4421 = vpack.c.b16 %v3791, %v3773
  %v4422 = vpack.c.b16 %v3792, %v3774
  %v4423 = vpack.c.b16 %v3793, %v3775
  %v4424 = vpack.c.b16 %v3794, %v3776
  %v4425 = vpack.c.b16 %v3813, %v3795
  %v4426 = vpack.c.b16 %v3814, %v3796
  %v4427 = vpack.c.b16 %v3815, %v3797
  %v4428 = vpack.c.b16 %v3816, %v3798
  %v4429 = vpack.c.b16 %v3817, %v3799
  %v4430 = vpack.c.b16 %v3818, %v3800
  %v4431 = vpack.c.b16 %v3819, %v3801
  %v4432 = vpack.c.b16 %v3820, %v3802
  %v4433 = vpack.c.b16 %v3821, %v3803
  %v4434 = vpack.c.b16 %v3822, %v3804
  %v4435 = vpack.c.b16 %v3823, %v3805
  %v4436 = vpack.c.b16 %v3824, %v3806
  %v4437 = vpack.c.b16 %v3825, %v3807
  %v4438 = vpack.c.b16 %v3826, %v3808
  %v4439 = vpack.c.b16 %v3827, %v3809
  %v4440 = vpack.c.b16 %v3828, %v3810
  %v4441 = vpack.c.b16 %v3829, %v3811
  %v4442 = vpack.c.b16 %v3830, %v3812
  %v4443 = vpack.c.b16 %v3849, %v3831
  %v4444 = vpack.c.b16 %v3850, %v3832
  %v4445 = vpack.c.b16 %v3851, %v3833
  %v4446 = vpack.c.b16 %v3852, %v3834
  %v4447 = vpack.c.b16 %v3853, %v3835
  %v4448 = vpack.c.b16 %v3854, %v3836
  %v4449 = vpack.c.b16 %v3855, %v3837
  %v4450 = vpack.c.b16 %v3856, %v3838
  %v4451 = vpack.c.b16 %v3857, %v3839
  %v4452 = vpack.c.b16 %v3858, %v3840
  %v4453 = vpack.c.b16 %v3859, %v3841
  %v4454 = vpack.c.b16 %v3860, %v3842
  %v4455 = vpack.c.b16 %v3861, %v3843
  %v4456 = vpack.c.b16 %v3862, %v3844
  %v4457 = vpack.c.b16 %v3863, %v3845
  %v4458 = vpack.c.b16 %v3864, %v3846
  %v4459 = vpack.c.b16 %v3865, %v3847
  %v4460 = vpack.c.b16 %v3866, %v3848
  %v4461 = vpack.c.b16 %v3885, %v3867
  %v4462 = vpack.c.b16 %v3886, %v3868
  %v4463 = vpack.c.b16 %v3887, %v3869
  %v4464 = vpack.c.b16 %v3888, %v3870
  %v4465 = vpack.c.b16 %v3889, %v3871
  %v4466 = vpack.c.b16 %v3890, %v3872
  %v4467 = vpack.c.b16 %v3891, %v3873
  %v4468 = vpack.c.b16 %v3892, %v3874
  %v4469 = vpack.c.b16 %v3893, %v3875
  %v4470 = vpack.c.b16 %v3894, %v3876
  %v4471 = vpack.c.b16 %v3895, %v3877
  %v4472 = vpack.c.b16 %v3896, %v3878
  %v4473 = vpack.c.b16 %v3897, %v3879
  %v4474 = vpack.c.b16 %v3898, %v3880
  %v4475 = vpack.c.b16 %v3899, %v3881
  %v4476 = vpack.c.b16 %v3900, %v3882
  %v4477 = vpack.c.b16 %v3901, %v3883
  %v4478 = vpack.c.b16 %v3902, %v3884
  %v4479 = vpack.c.b16 %v3921, %v3903
  %v4480 = vpack.c.b16 %v3922, %v3904
  %v4481 = vpack.c.b16 %v3923, %v3905
  %v4482 = vpack.c.b16 %v3924, %v3906
  %v4483 = vpack.c.b16 %v3925, %v3907
  %v4484 = vpack.c.b16 %v3926, %v3908
  %v4485 = vpack.c.b16 %v3927, %v3909
  %v4486 = vpack.c.b16 %v3928, %v3910
  %v4487 = vpack.c.b16 %v3929, %v3911
  %v4488 = vpack.c.b16 %v3930, %v3912
  %v4489 = vpack.c.b16 %v3931, %v3913
  %v4490 = vpack.c.b16 %v3932, %v3914
  %v4491 = vpack.c.b16 %v3933, %v3915
  %v4492 = vpack.c.b16 %v3934, %v3916
  %v4493 = vpack.c.b16 %v3935, %v3917
  %v4494 = vpack.c.b16 %v3936, %v3918
  %v4495 = vpack.c.b16 %v3937, %v3919
  %v4496 = vpack.c.b16 %v3938, %v3920
  %v4497 = vpack.c.b16 %v3957, %v3939
  %v4498 = vpack.c.b16 %v3958, %v3940
  %v4499 = vpack.c.b16 %v3959, %v3941
  %v4500 = vpack.c.b16 %v3960, %v3942
  %v4501 = vpack.c.b16 %v3961, %v3943
  %v4502 = vpack.c.b16 %v3962, %v3944
  %v4503 = vpack.c.b16 %v3963, %v3945
  %v4504 = vpack.c.b16 %v3964, %v3946
  %v4505 = vpack.c.b16 %v3965, %v3947
  %v4506 = vpack.c.b16 %v3966, %v3948
  %v4507 = vpack.c.b16 %v3967, %v3949
  %v4508 = vpack.c.b16 %v3968, %v3950
  %v4509 = vpack.c.b16 %v3969, %v3951
  %v4510 = vpack.c.b16 %v3970, %v3952
  %v4511 = vpack.c.b16 %v3971, %v3953
  %v4512 = vpack.c.b16 %v3972, %v3954
  %v4513 = vpack.c.b16 %v3973, %v3955
  %v4514 = vpack.c.b16 %v3974, %v3956
  %v4515 = vpack.c.b16 %v3993, %v3975
  %v4516 = vpack.c.b16 %v3994, %v3976
  %v4517 = vpack.c.b16 %v3995, %v3977
  %v4518 = vpack.c.b16 %v3996, %v3978
  %v4519 = vpack.c.b16 %v3997, %v3979
  %v4520 = vpack.c.b16 %v3998, %v3980
  %v4521 = vpack.c.b16 %v3999, %v3981
  %v4522 = vpack.c.b16 %v4000, %v3982
  %v4523 = vpack.c.b16 %v4001, %v3983
  %v4524 = vpack.c.b16 %v4002, %v3984
  %v4525 = vpack.c.b16 %v4003, %v3985
  %v4526 = vpack.c.b16 %v4004, %v3986
  %v4527 = vpack.c.b16 %v4005, %v3987
  %v4528 = vpack.c.b16 %v4006, %v3988
  %v4529 = vpack.c.b16 %v4007, %v3989
  %v4530 = vpack.c.b16 %v4008, %v3990
  %v4531 = vpack.c.b16 %v4009, %v3991
  %v4532 = vpack.c.b16 %v4010, %v3992
  %v4533 = vpack.c.b16 %v4029, %v4011
  %v4534 = vpack.c.b16 %v4030, %v4012
  %v4535 = vpack.c.b16 %v4031, %v4013
  %v4536 = vpack.c.b16 %v4032, %v4014
  %v4537 = vpack.c.b16 %v4033, %v4015
  %v4538 = vpack.c.b16 %v4034, %v4016
  %v4539 = vpack.c.b16 %v4035, %v4017
  %v4540 = vpack.c.b16 %v4036, %v4018
  %v4541 = vpack.c.b16 %v4037, %v4019
  %v4542 = vpack.c.b16 %v4038, %v4020
  %v4543 = vpack.c.b16 %v4039, %v4021
  %v4544 = vpack.c.b16 %v4040, %v4022
  %v4545 = vpack.c.b16 %v4041, %v4023
  %v4546 = vpack.c.b16 %v4042, %v4024
  %v4547 = vpack.c.b16 %v4043, %v4025
  %v4548 = vpack.c.b16 %v4044, %v4026
  %v4549 = vpack.c.b16 %v4045, %v4027
  %v4550 = vpack.c.b16 %v4046, %v4028
  %v4551 = vpack.c.b16 %v4065, %v4047
  %v4552 = vpack.c.b16 %v4066, %v4048
  %v4553 = vpack.c.b16 %v4067, %v4049
  %v4554 = vpack.c.b16 %v4068, %v4050
  %v4555 = vpack.c.b16 %v4069, %v4051
  %v4556 = vpack.c.b16 %v4070, %v4052
  %v4557 = vpack.c.b16 %v4071, %v4053
  %v4558 = vpack.c.b16 %v4072, %v4054
  %v4559 = vpack.c.b16 %v4073, %v4055
  %v4560 = vpack.c.b16 %v4074, %v4056
  %v4561 = vpack.c.b16 %v4075, %v4057
  %v4562 = vpack.c.b16 %v4076, %v4058
  %v4563 = vpack.c.b16 %v4077, %v4059
  %v4564 = vpack.c.b16 %v4078, %v4060
  %v4565 = vpack.c.b16 %v4079, %v4061
  %v4566 = vpack.c.b16 %v4080, %v4062
  %v4567 = vpack.c.b16 %v4081, %v4063
  %v4568 = vpack.c.b16 %v4082, %v4064
  %v4569 = vpack.c.b16 %v4101, %v4083
  %v4570 = vpack.c.b16 %v4102, %v4084
  %v4571 = vpack.c.b16 %v4103, %v4085
  %v4572 = vpack.c.b16 %v4104, %v4086
  %v4573 = vpack.c.b16 %v4105, %v4087
  %v4574 = vpack.c.b16 %v4106, %v4088
  %v4575 = vpack.c.b16 %v4107, %v4089
  %v4576 = vpack.c.b16 %v4108, %v4090
  %v4577 = vpack.c.b16 %v4109, %v4091
  %v4578 = vpack.c.b16 %v4110, %v4092
  %v4579 = vpack.c.b16 %v4111, %v4093
  %v4580 = vpack.c.b16 %v4112, %v4094
  %v4581 = vpack.c.b16 %v4113, %v4095
  %v4582 = vpack.c.b16 %v4114, %v4096
  %v4583 = vpack.c.b16 %v4115, %v4097
  %v4584 = vpack.c.b16 %v4116, %v4098
  %v4585 = vpack.c.b16 %v4117, %v4099
  %v4586 = vpack.c.b16 %v4118, %v4100
  %v4587 = vpack.c.b16 %v4137, %v4119
  %v4588 = vpack.c.b16 %v4138, %v4120
  %v4589 = vpack.c.b16 %v4139, %v4121
  %v4590 = vpack.c.b16 %v4140, %v4122
  %v4591 = vpack.c.b16 %v4141, %v4123
  %v4592 = vpack.c.b16 %v4142, %v4124
  %v4593 = vpack.c.b16 %v4143, %v4125
  %v4594 = vpack.c.b16 %v4144, %v4126
  %v4595 = vpack.c.b16 %v4145, %v4127
  %v4596 = vpack.c.b16 %v4146, %v4128
  %v4597 = vpack.c.b16 %v4147, %v4129
  %v4598 = vpack.c.b16 %v4148, %v4130
  %v4599 = vpack.c.b16 %v4149, %v4131
  %v4600 = vpack.c.b16 %v4150, %v4132
  %v4601 = vpack.c.b16 %v4151, %v4133
  %v4602 = vpack.c.b16 %v4152, %v4134
  %v4603 = vpack.c.b16 %v4153, %v4135
  %v4604 = vpack.c.b16 %v4154, %v4136
  %v4605 = vpack.c.b16 %v4173, %v4155
  %v4606 = vpack.c.b16 %v4174, %v4156
  %v4607 = vpack.c.b16 %v4175, %v4157
  %v4608 = vpack.c.b16 %v4176, %v4158
  %v4609 = vpack.c.b16 %v4177, %v4159
  %v4610 = vpack.c.b16 %v4178, %v4160
  %v4611 = vpack.c.b16 %v4179, %v4161
  %v4612 = vpack.c.b16 %v4180, %v4162
  %v4613 = vpack.c.b16 %v4181, %v4163
  %v4614 = vpack.c.b16 %v4182, %v4164
  %v4615 = vpack.c.b16 %v4183, %v4165
  %v4616 = vpack.c.b16 %v4184, %v4166
  %v4617 = vpack.c.b16 %v4185, %v4167
  %v4618 = vpack.c.b16 %v4186, %v4168
  %v4619 = vpack.c.b16 %v4187, %v4169
  %v4620 = vpack.c.b16 %v4188, %v4170
  %v4621 = vpack.c.b16 %v4189, %v4171
  %v4622 = vpack.c.b16 %v4190, %v4172
  %5055 = vmatprep.subr.bf16.mxu0 0
  %5056 = vmatpush1.bf16.msra.mxu0 %v2326
  %5057 = vmatprep.subr.bf16.mxu0 0
  %5058 = vmatpush1.bf16.msra.mxu0 %v2325
  %5059 = vmatprep.subr.bf16.mxu0 0
  %5060 = vmatpush1.bf16.msra.mxu0 %v2324
  %5061 = vmatprep.subr.bf16.mxu0 0
  %5062 = vmatpush1.bf16.msra.mxu0 %v2323
  %5063 = vmatprep.subr.bf16.mxu0 0
  %5064 = vmatpush1.bf16.msra.mxu0 %v2322
  %5065 = vmatprep.subr.bf16.mxu0 0
  %5066 = vmatpush1.bf16.msra.mxu0 %v2321
  %5067 = vmatprep.subr.bf16.mxu0 0
  %5068 = vmatpush1.bf16.msra.mxu0 %v2320
  %5069 = vmatprep.subr.bf16.mxu0 0
  %5070 = vmatpush1.bf16.msra.mxu0 %v2319
  %5071 = vmatprep.subr.bf16.mxu0 0
  %5072 = vmatpush2.bf16.msra.mxu0 %v2334
  %5073 = vmatprep.subr.bf16.mxu0 0
  %5074 = vmatpush2.bf16.msra.mxu0 %v2333
  %5075 = vmatprep.subr.bf16.mxu0 0
  %5076 = vmatpush2.bf16.msra.mxu0 %v2332
  %5077 = vmatprep.subr.bf16.mxu0 0
  %5078 = vmatpush2.bf16.msra.mxu0 %v2331
  %5079 = vmatprep.subr.bf16.mxu0 0
  %5080 = vmatpush2.bf16.msra.mxu0 %v2330
  %5081 = vmatprep.subr.bf16.mxu0 0
  %5082 = vmatpush2.bf16.msra.mxu0 %v2329
  %5083 = vmatprep.subr.bf16.mxu0 0
  %5084 = vmatpush2.bf16.msra.mxu0 %v2328
  %5085 = vmatprep.subr.bf16.mxu0 0
  %5086 = vmatpush2.bf16.msra.mxu0 %v2327
  %5087 = vmatprep.mubr.bf16.mxu0 %v4192
  %5088 = vmatmul.mubr.bf16.gmra.mxu0 %v4191
  %v5089 = vpop.f32.mrf.mxu0
  %v5090 = vadd.f32 0.0, %v5089
  %v5091 = vpop.f32.mrf.mxu0
  %v5092 = vpop.f32.mrf.mxu0
  %v5093 = vadd.f32 0.0, %v5092
  %v5094 = vpop.f32.mrf.mxu0
  %5095 = vmatprep.mubr.bf16.mxu0 %v4210
  %5096 = vmatmul.mubr.bf16.gmra.mxu0 %v4209
  %v5097 = vpop.f32.mrf.mxu0
  %v5098 = vadd.f32 0.0, %v5097
  %v5099 = vpop.f32.mrf.mxu0
  %v5100 = vpop.f32.mrf.mxu0
  %v5101 = vadd.f32 0.0, %v5100
  %v5102 = vpop.f32.mrf.mxu0
  %5103 = vmatprep.mubr.bf16.mxu0 %v4228
  %5104 = vmatmul.mubr.bf16.gmra.mxu0 %v4227
  %v5105 = vpop.f32.mrf.mxu0
  %v5106 = vadd.f32 0.0, %v5105
  %v5107 = vpop.f32.mrf.mxu0
  %v5108 = vpop.f32.mrf.mxu0
  %v5109 = vadd.f32 0.0, %v5108
  %v5110 = vpop.f32.mrf.mxu0
  %5111 = vmatprep.mubr.bf16.mxu0 %v4246
  %5112 = vmatmul.mubr.bf16.gmra.mxu0 %v4245
  %v5113 = vpop.f32.mrf.mxu0
  %v5114 = vadd.f32 0.0, %v5113
  %v5115 = vpop.f32.mrf.mxu0
  %v5116 = vpop.f32.mrf.mxu0
  %v5117 = vadd.f32 0.0, %v5116
  %v5118 = vpop.f32.mrf.mxu0
  %5119 = vmatprep.mubr.bf16.mxu0 %v4264
  %5120 = vmatmul.mubr.bf16.gmra.mxu0 %v4263
  %v5121 = vpop.f32.mrf.mxu0
  %v5122 = vadd.f32 0.0, %v5121
  %v5123 = vpop.f32.mrf.mxu0
  %v5124 = vpop.f32.mrf.mxu0
  %v5125 = vadd.f32 0.0, %v5124
  %v5126 = vpop.f32.mrf.mxu0
  %5127 = vmatprep.mubr.bf16.mxu0 %v4282
  %5128 = vmatmul.mubr.bf16.gmra.mxu0 %v4281
  %v5129 = vpop.f32.mrf.mxu0
  %v5130 = vadd.f32 0.0, %v5129
  %v5131 = vpop.f32.mrf.mxu0
  %v5132 = vpop.f32.mrf.mxu0
  %v5133 = vadd.f32 0.0, %v5132
  %v5134 = vpop.f32.mrf.mxu0
  %5135 = vmatprep.mubr.bf16.mxu0 %v4300
  %5136 = vmatmul.mubr.bf16.gmra.mxu0 %v4299
  %v5137 = vpop.f32.mrf.mxu0
  %v5138 = vadd.f32 0.0, %v5137
  %v5139 = vpop.f32.mrf.mxu0
  %v5140 = vpop.f32.mrf.mxu0
  %v5141 = vadd.f32 0.0, %v5140
  %v5142 = vpop.f32.mrf.mxu0
  %5143 = vmatprep.mubr.bf16.mxu0 %v4318
  %5144 = vmatmul.mubr.bf16.gmra.mxu0 %v4317
  %v5145 = vpop.f32.mrf.mxu0
  %v5146 = vadd.f32 0.0, %v5145
  %v5147 = vpop.f32.mrf.mxu0
  %v5148 = vpop.f32.mrf.mxu0
  %v5149 = vadd.f32 0.0, %v5148
  %v5150 = vpop.f32.mrf.mxu0
  %5151 = vmatprep.mubr.bf16.mxu0 %v4336
  %5152 = vmatmul.mubr.bf16.gmra.mxu0 %v4335
  %v5153 = vpop.f32.mrf.mxu0
  %v5154 = vadd.f32 0.0, %v5153
  %v5155 = vpop.f32.mrf.mxu0
  %v5156 = vpop.f32.mrf.mxu0
  %v5157 = vadd.f32 0.0, %v5156
  %v5158 = vpop.f32.mrf.mxu0
  %5159 = vmatprep.mubr.bf16.mxu0 %v4354
  %5160 = vmatmul.mubr.bf16.gmra.mxu0 %v4353
  %v5161 = vpop.f32.mrf.mxu0
  %v5162 = vadd.f32 0.0, %v5161
  %v5163 = vpop.f32.mrf.mxu0
  %v5164 = vpop.f32.mrf.mxu0
  %v5165 = vadd.f32 0.0, %v5164
  %v5166 = vpop.f32.mrf.mxu0
  %5167 = vmatprep.mubr.bf16.mxu0 %v4372
  %5168 = vmatmul.mubr.bf16.gmra.mxu0 %v4371
  %v5169 = vpop.f32.mrf.mxu0
  %v5170 = vadd.f32 0.0, %v5169
  %v5171 = vpop.f32.mrf.mxu0
  %v5172 = vpop.f32.mrf.mxu0
  %v5173 = vadd.f32 0.0, %v5172
  %v5174 = vpop.f32.mrf.mxu0
  %5175 = vmatprep.mubr.bf16.mxu0 %v4390
  %5176 = vmatmul.mubr.bf16.gmra.mxu0 %v4389
  %v5177 = vpop.f32.mrf.mxu0
  %v5178 = vadd.f32 0.0, %v5177
  %v5179 = vpop.f32.mrf.mxu0
  %v5180 = vpop.f32.mrf.mxu0
  %v5181 = vadd.f32 0.0, %v5180
  %v5182 = vpop.f32.mrf.mxu0
  %5183 = vmatprep.mubr.bf16.mxu0 %v4408
  %5184 = vmatmul.mubr.bf16.gmra.mxu0 %v4407
  %v5185 = vpop.f32.mrf.mxu0
  %v5186 = vadd.f32 0.0, %v5185
  %v5187 = vpop.f32.mrf.mxu0
  %v5188 = vpop.f32.mrf.mxu0
  %v5189 = vadd.f32 0.0, %v5188
  %v5190 = vpop.f32.mrf.mxu0
  %5191 = vmatprep.mubr.bf16.mxu0 %v4426
  %5192 = vmatmul.mubr.bf16.gmra.mxu0 %v4425
  %v5193 = vpop.f32.mrf.mxu0
  %v5194 = vadd.f32 0.0, %v5193
  %v5195 = vpop.f32.mrf.mxu0
  %v5196 = vpop.f32.mrf.mxu0
  %v5197 = vadd.f32 0.0, %v5196
  %v5198 = vpop.f32.mrf.mxu0
  %5199 = vmatprep.mubr.bf16.mxu0 %v4444
  %5200 = vmatmul.mubr.bf16.gmra.mxu0 %v4443
  %v5201 = vpop.f32.mrf.mxu0
  %v5202 = vadd.f32 0.0, %v5201
  %v5203 = vpop.f32.mrf.mxu0
  %v5204 = vpop.f32.mrf.mxu0
  %v5205 = vadd.f32 0.0, %v5204
  %v5206 = vpop.f32.mrf.mxu0
  %5207 = vmatprep.mubr.bf16.mxu0 %v4462
  %5208 = vmatmul.mubr.bf16.gmra.mxu0 %v4461
  %v5209 = vpop.f32.mrf.mxu0
  %v5210 = vadd.f32 0.0, %v5209
  %v5211 = vpop.f32.mrf.mxu0
  %v5212 = vpop.f32.mrf.mxu0
  %v5213 = vadd.f32 0.0, %v5212
  %v5214 = vpop.f32.mrf.mxu0
  %5215 = vmatprep.mubr.bf16.mxu0 %v4480
  %5216 = vmatmul.mubr.bf16.gmra.mxu0 %v4479
  %v5217 = vpop.f32.mrf.mxu0
  %v5218 = vadd.f32 0.0, %v5217
  %v5219 = vpop.f32.mrf.mxu0
  %v5220 = vpop.f32.mrf.mxu0
  %v5221 = vadd.f32 0.0, %v5220
  %v5222 = vpop.f32.mrf.mxu0
  %5223 = vmatprep.mubr.bf16.mxu0 %v4498
  %5224 = vmatmul.mubr.bf16.gmra.mxu0 %v4497
  %v5225 = vpop.f32.mrf.mxu0
  %v5226 = vadd.f32 0.0, %v5225
  %v5227 = vpop.f32.mrf.mxu0
  %v5228 = vpop.f32.mrf.mxu0
  %v5229 = vadd.f32 0.0, %v5228
  %v5230 = vpop.f32.mrf.mxu0
  %5231 = vmatprep.mubr.bf16.mxu0 %v4516
  %5232 = vmatmul.mubr.bf16.gmra.mxu0 %v4515
  %v5233 = vpop.f32.mrf.mxu0
  %v5234 = vadd.f32 0.0, %v5233
  %v5235 = vpop.f32.mrf.mxu0
  %v5236 = vpop.f32.mrf.mxu0
  %v5237 = vadd.f32 0.0, %v5236
  %v5238 = vpop.f32.mrf.mxu0
  %5239 = vmatprep.mubr.bf16.mxu0 %v4534
  %5240 = vmatmul.mubr.bf16.gmra.mxu0 %v4533
  %v5241 = vpop.f32.mrf.mxu0
  %v5242 = vadd.f32 0.0, %v5241
  %v5243 = vpop.f32.mrf.mxu0
  %v5244 = vpop.f32.mrf.mxu0
  %v5245 = vadd.f32 0.0, %v5244
  %v5246 = vpop.f32.mrf.mxu0
  %5247 = vmatprep.mubr.bf16.mxu0 %v4552
  %5248 = vmatmul.mubr.bf16.gmra.mxu0 %v4551
  %v5249 = vpop.f32.mrf.mxu0
  %v5250 = vadd.f32 0.0, %v5249
  %v5251 = vpop.f32.mrf.mxu0
  %v5252 = vpop.f32.mrf.mxu0
  %v5253 = vadd.f32 0.0, %v5252
  %v5254 = vpop.f32.mrf.mxu0
  %5255 = vmatprep.mubr.bf16.mxu0 %v4570
  %5256 = vmatmul.mubr.bf16.gmra.mxu0 %v4569
  %v5257 = vpop.f32.mrf.mxu0
  %v5258 = vadd.f32 0.0, %v5257
  %v5259 = vpop.f32.mrf.mxu0
  %v5260 = vpop.f32.mrf.mxu0
  %v5261 = vadd.f32 0.0, %v5260
  %v5262 = vpop.f32.mrf.mxu0
  %5263 = vmatprep.mubr.bf16.mxu0 %v4588
  %5264 = vmatmul.mubr.bf16.gmra.mxu0 %v4587
  %v5265 = vpop.f32.mrf.mxu0
  %v5266 = vadd.f32 0.0, %v5265
  %v5267 = vpop.f32.mrf.mxu0
  %v5268 = vpop.f32.mrf.mxu0
  %v5269 = vadd.f32 0.0, %v5268
  %v5270 = vpop.f32.mrf.mxu0
  %5271 = vmatprep.mubr.bf16.mxu0 %v4606
  %5272 = vmatmul.mubr.bf16.gmra.mxu0 %v4605
  %v5273 = vpop.f32.mrf.mxu0
  %v5274 = vadd.f32 0.0, %v5273
  %v5275 = vpop.f32.mrf.mxu0
  %v5276 = vpop.f32.mrf.mxu0
  %v5277 = vadd.f32 0.0, %v5276
  %v5278 = vpop.f32.mrf.mxu0
  %5279 = vdwg.mxu0
  %5280 = vmatprep.subr.bf16.mxu0 0
  %5281 = vmatpush1.bf16.msra.mxu0 %v2342
  %5282 = vmatprep.subr.bf16.mxu0 0
  %5283 = vmatpush1.bf16.msra.mxu0 %v2341
  %5284 = vmatprep.subr.bf16.mxu0 0
  %5285 = vmatpush1.bf16.msra.mxu0 %v2340
  %5286 = vmatprep.subr.bf16.mxu0 0
  %5287 = vmatpush1.bf16.msra.mxu0 %v2339
  %5288 = vmatprep.subr.bf16.mxu0 0
  %5289 = vmatpush1.bf16.msra.mxu0 %v2338
  %5290 = vmatprep.subr.bf16.mxu0 0
  %5291 = vmatpush1.bf16.msra.mxu0 %v2337
  %5292 = vmatprep.subr.bf16.mxu0 0
  %5293 = vmatpush1.bf16.msra.mxu0 %v2336
  %5294 = vmatprep.subr.bf16.mxu0 0
  %5295 = vmatpush1.bf16.msra.mxu0 %v2335
  %5296 = vmatprep.subr.bf16.mxu0 0
  %5297 = vmatpush2.bf16.msra.mxu0 %v2350
  %5298 = vmatprep.subr.bf16.mxu0 0
  %5299 = vmatpush2.bf16.msra.mxu0 %v2349
  %5300 = vmatprep.subr.bf16.mxu0 0
  %5301 = vmatpush2.bf16.msra.mxu0 %v2348
  %5302 = vmatprep.subr.bf16.mxu0 0
  %5303 = vmatpush2.bf16.msra.mxu0 %v2347
  %5304 = vmatprep.subr.bf16.mxu0 0
  %5305 = vmatpush2.bf16.msra.mxu0 %v2346
  %5306 = vmatprep.subr.bf16.mxu0 0
  %5307 = vmatpush2.bf16.msra.mxu0 %v2345
  %5308 = vmatprep.subr.bf16.mxu0 0
  %5309 = vmatpush2.bf16.msra.mxu0 %v2344
  %5310 = vmatprep.subr.bf16.mxu0 0
  %5311 = vmatpush2.bf16.msra.mxu0 %v2343
  %5312 = vmatprep.mubr.bf16.mxu0 %v4194
  %5313 = vmatmul.mubr.bf16.gmra.mxu0 %v4193
  %v5314 = vpop.f32.mrf.mxu0
  %v5315 = vadd.f32 %v5090, %v5314
  %v5316 = vpop.f32.mrf.mxu0
  %v5317 = vpop.f32.mrf.mxu0
  %v5318 = vadd.f32 %v5093, %v5317
  %v5319 = vpop.f32.mrf.mxu0
  %5320 = vmatprep.mubr.bf16.mxu0 %v4212
  %5321 = vmatmul.mubr.bf16.gmra.mxu0 %v4211
  %v5322 = vpop.f32.mrf.mxu0
  %v5323 = vadd.f32 %v5098, %v5322
  %v5324 = vpop.f32.mrf.mxu0
  %v5325 = vpop.f32.mrf.mxu0
  %v5326 = vadd.f32 %v5101, %v5325
  %v5327 = vpop.f32.mrf.mxu0
  %5328 = vmatprep.mubr.bf16.mxu0 %v4230
  %5329 = vmatmul.mubr.bf16.gmra.mxu0 %v4229
  %v5330 = vpop.f32.mrf.mxu0
  %v5331 = vadd.f32 %v5106, %v5330
  %v5332 = vpop.f32.mrf.mxu0
  %v5333 = vpop.f32.mrf.mxu0
  %v5334 = vadd.f32 %v5109, %v5333
  %v5335 = vpop.f32.mrf.mxu0
  %5336 = vmatprep.mubr.bf16.mxu0 %v4248
  %5337 = vmatmul.mubr.bf16.gmra.mxu0 %v4247
  %v5338 = vpop.f32.mrf.mxu0
  %v5339 = vadd.f32 %v5114, %v5338
  %v5340 = vpop.f32.mrf.mxu0
  %v5341 = vpop.f32.mrf.mxu0
  %v5342 = vadd.f32 %v5117, %v5341
  %v5343 = vpop.f32.mrf.mxu0
  %5344 = vmatprep.mubr.bf16.mxu0 %v4266
  %5345 = vmatmul.mubr.bf16.gmra.mxu0 %v4265
  %v5346 = vpop.f32.mrf.mxu0
  %v5347 = vadd.f32 %v5122, %v5346
  %v5348 = vpop.f32.mrf.mxu0
  %v5349 = vpop.f32.mrf.mxu0
  %v5350 = vadd.f32 %v5125, %v5349
  %v5351 = vpop.f32.mrf.mxu0
  %5352 = vmatprep.mubr.bf16.mxu0 %v4284
  %5353 = vmatmul.mubr.bf16.gmra.mxu0 %v4283
  %v5354 = vpop.f32.mrf.mxu0
  %v5355 = vadd.f32 %v5130, %v5354
  %v5356 = vpop.f32.mrf.mxu0
  %v5357 = vpop.f32.mrf.mxu0
  %v5358 = vadd.f32 %v5133, %v5357
  %v5359 = vpop.f32.mrf.mxu0
  %5360 = vmatprep.mubr.bf16.mxu0 %v4302
  %5361 = vmatmul.mubr.bf16.gmra.mxu0 %v4301
  %v5362 = vpop.f32.mrf.mxu0
  %v5363 = vadd.f32 %v5138, %v5362
  %v5364 = vpop.f32.mrf.mxu0
  %v5365 = vpop.f32.mrf.mxu0
  %v5366 = vadd.f32 %v5141, %v5365
  %v5367 = vpop.f32.mrf.mxu0
  %5368 = vmatprep.mubr.bf16.mxu0 %v4320
  %5369 = vmatmul.mubr.bf16.gmra.mxu0 %v4319
  %v5370 = vpop.f32.mrf.mxu0
  %v5371 = vadd.f32 %v5146, %v5370
  %v5372 = vpop.f32.mrf.mxu0
  %v5373 = vpop.f32.mrf.mxu0
  %v5374 = vadd.f32 %v5149, %v5373
  %v5375 = vpop.f32.mrf.mxu0
  %5376 = vmatprep.mubr.bf16.mxu0 %v4338
  %5377 = vmatmul.mubr.bf16.gmra.mxu0 %v4337
  %v5378 = vpop.f32.mrf.mxu0
  %v5379 = vadd.f32 %v5154, %v5378
  %v5380 = vpop.f32.mrf.mxu0
  %v5381 = vpop.f32.mrf.mxu0
  %v5382 = vadd.f32 %v5157, %v5381
  %v5383 = vpop.f32.mrf.mxu0
  %5384 = vmatprep.mubr.bf16.mxu0 %v4356
  %5385 = vmatmul.mubr.bf16.gmra.mxu0 %v4355
  %v5386 = vpop.f32.mrf.mxu0
  %v5387 = vadd.f32 %v5162, %v5386
  %v5388 = vpop.f32.mrf.mxu0
  %v5389 = vpop.f32.mrf.mxu0
  %v5390 = vadd.f32 %v5165, %v5389
  %v5391 = vpop.f32.mrf.mxu0
  %5392 = vmatprep.mubr.bf16.mxu0 %v4374
  %5393 = vmatmul.mubr.bf16.gmra.mxu0 %v4373
  %v5394 = vpop.f32.mrf.mxu0
  %v5395 = vadd.f32 %v5170, %v5394
  %v5396 = vpop.f32.mrf.mxu0
  %v5397 = vpop.f32.mrf.mxu0
  %v5398 = vadd.f32 %v5173, %v5397
  %v5399 = vpop.f32.mrf.mxu0
  %5400 = vmatprep.mubr.bf16.mxu0 %v4392
  %5401 = vmatmul.mubr.bf16.gmra.mxu0 %v4391
  %v5402 = vpop.f32.mrf.mxu0
  %v5403 = vadd.f32 %v5178, %v5402
  %v5404 = vpop.f32.mrf.mxu0
  %v5405 = vpop.f32.mrf.mxu0
  %v5406 = vadd.f32 %v5181, %v5405
  %v5407 = vpop.f32.mrf.mxu0
  %5408 = vmatprep.mubr.bf16.mxu0 %v4410
  %5409 = vmatmul.mubr.bf16.gmra.mxu0 %v4409
  %v5410 = vpop.f32.mrf.mxu0
  %v5411 = vadd.f32 %v5186, %v5410
  %v5412 = vpop.f32.mrf.mxu0
  %v5413 = vpop.f32.mrf.mxu0
  %v5414 = vadd.f32 %v5189, %v5413
  %v5415 = vpop.f32.mrf.mxu0
  %5416 = vmatprep.mubr.bf16.mxu0 %v4428
  %5417 = vmatmul.mubr.bf16.gmra.mxu0 %v4427
  %v5418 = vpop.f32.mrf.mxu0
  %v5419 = vadd.f32 %v5194, %v5418
  %v5420 = vpop.f32.mrf.mxu0
  %v5421 = vpop.f32.mrf.mxu0
  %v5422 = vadd.f32 %v5197, %v5421
  %v5423 = vpop.f32.mrf.mxu0
  %5424 = vmatprep.mubr.bf16.mxu0 %v4446
  %5425 = vmatmul.mubr.bf16.gmra.mxu0 %v4445
  %v5426 = vpop.f32.mrf.mxu0
  %v5427 = vadd.f32 %v5202, %v5426
  %v5428 = vpop.f32.mrf.mxu0
  %v5429 = vpop.f32.mrf.mxu0
  %v5430 = vadd.f32 %v5205, %v5429
  %v5431 = vpop.f32.mrf.mxu0
  %5432 = vmatprep.mubr.bf16.mxu0 %v4464
  %5433 = vmatmul.mubr.bf16.gmra.mxu0 %v4463
  %v5434 = vpop.f32.mrf.mxu0
  %v5435 = vadd.f32 %v5210, %v5434
  %v5436 = vpop.f32.mrf.mxu0
  %v5437 = vpop.f32.mrf.mxu0
  %v5438 = vadd.f32 %v5213, %v5437
  %v5439 = vpop.f32.mrf.mxu0
  %5440 = vmatprep.mubr.bf16.mxu0 %v4482
  %5441 = vmatmul.mubr.bf16.gmra.mxu0 %v4481
  %v5442 = vpop.f32.mrf.mxu0
  %v5443 = vadd.f32 %v5218, %v5442
  %v5444 = vpop.f32.mrf.mxu0
  %v5445 = vpop.f32.mrf.mxu0
  %v5446 = vadd.f32 %v5221, %v5445
  %v5447 = vpop.f32.mrf.mxu0
  %5448 = vmatprep.mubr.bf16.mxu0 %v4500
  %5449 = vmatmul.mubr.bf16.gmra.mxu0 %v4499
  %v5450 = vpop.f32.mrf.mxu0
  %v5451 = vadd.f32 %v5226, %v5450
  %v5452 = vpop.f32.mrf.mxu0
  %v5453 = vpop.f32.mrf.mxu0
  %v5454 = vadd.f32 %v5229, %v5453
  %v5455 = vpop.f32.mrf.mxu0
  %5456 = vmatprep.mubr.bf16.mxu0 %v4518
  %5457 = vmatmul.mubr.bf16.gmra.mxu0 %v4517
  %v5458 = vpop.f32.mrf.mxu0
  %v5459 = vadd.f32 %v5234, %v5458
  %v5460 = vpop.f32.mrf.mxu0
  %v5461 = vpop.f32.mrf.mxu0
  %v5462 = vadd.f32 %v5237, %v5461
  %v5463 = vpop.f32.mrf.mxu0
  %5464 = vmatprep.mubr.bf16.mxu0 %v4536
  %5465 = vmatmul.mubr.bf16.gmra.mxu0 %v4535
  %v5466 = vpop.f32.mrf.mxu0
  %v5467 = vadd.f32 %v5242, %v5466
  %v5468 = vpop.f32.mrf.mxu0
  %v5469 = vpop.f32.mrf.mxu0
  %v5470 = vadd.f32 %v5245, %v5469
  %v5471 = vpop.f32.mrf.mxu0
  %5472 = vmatprep.mubr.bf16.mxu0 %v4554
  %5473 = vmatmul.mubr.bf16.gmra.mxu0 %v4553
  %v5474 = vpop.f32.mrf.mxu0
  %v5475 = vadd.f32 %v5250, %v5474
  %v5476 = vpop.f32.mrf.mxu0
  %v5477 = vpop.f32.mrf.mxu0
  %v5478 = vadd.f32 %v5253, %v5477
  %v5479 = vpop.f32.mrf.mxu0
  %5480 = vmatprep.mubr.bf16.mxu0 %v4572
  %5481 = vmatmul.mubr.bf16.gmra.mxu0 %v4571
  %v5482 = vpop.f32.mrf.mxu0
  %v5483 = vadd.f32 %v5258, %v5482
  %v5484 = vpop.f32.mrf.mxu0
  %v5485 = vpop.f32.mrf.mxu0
  %v5486 = vadd.f32 %v5261, %v5485
  %v5487 = vpop.f32.mrf.mxu0
  %5488 = vmatprep.mubr.bf16.mxu0 %v4590
  %5489 = vmatmul.mubr.bf16.gmra.mxu0 %v4589
  %v5490 = vpop.f32.mrf.mxu0
  %v5491 = vadd.f32 %v5266, %v5490
  %v5492 = vpop.f32.mrf.mxu0
  %v5493 = vpop.f32.mrf.mxu0
  %v5494 = vadd.f32 %v5269, %v5493
  %v5495 = vpop.f32.mrf.mxu0
  %5496 = vmatprep.mubr.bf16.mxu0 %v4608
  %5497 = vmatmul.mubr.bf16.gmra.mxu0 %v4607
  %v5498 = vpop.f32.mrf.mxu0
  %v5499 = vadd.f32 %v5274, %v5498
  %v5500 = vpop.f32.mrf.mxu0
  %v5501 = vpop.f32.mrf.mxu0
  %v5502 = vadd.f32 %v5277, %v5501
  %v5503 = vpop.f32.mrf.mxu0
  %5504 = vdwg.mxu0
  %5505 = vmatprep.subr.bf16.mxu0 0
  %5506 = vmatpush1.bf16.msra.mxu0 %v2358
  %5507 = vmatprep.subr.bf16.mxu0 0
  %5508 = vmatpush1.bf16.msra.mxu0 %v2357
  %5509 = vmatprep.subr.bf16.mxu0 0
  %5510 = vmatpush1.bf16.msra.mxu0 %v2356
  %5511 = vmatprep.subr.bf16.mxu0 0
  %5512 = vmatpush1.bf16.msra.mxu0 %v2355
  %5513 = vmatprep.subr.bf16.mxu0 0
  %5514 = vmatpush1.bf16.msra.mxu0 %v2354
  %5515 = vmatprep.subr.bf16.mxu0 0
  %5516 = vmatpush1.bf16.msra.mxu0 %v2353
  %5517 = vmatprep.subr.bf16.mxu0 0
  %5518 = vmatpush1.bf16.msra.mxu0 %v2352
  %5519 = vmatprep.subr.bf16.mxu0 0
  %5520 = vmatpush1.bf16.msra.mxu0 %v2351
  %5521 = vmatprep.subr.bf16.mxu0 0
  %5522 = vmatpush2.bf16.msra.mxu0 %v2366
  %5523 = vmatprep.subr.bf16.mxu0 0
  %5524 = vmatpush2.bf16.msra.mxu0 %v2365
  %5525 = vmatprep.subr.bf16.mxu0 0
  %5526 = vmatpush2.bf16.msra.mxu0 %v2364
  %5527 = vmatprep.subr.bf16.mxu0 0
  %5528 = vmatpush2.bf16.msra.mxu0 %v2363
  %5529 = vmatprep.subr.bf16.mxu0 0
  %5530 = vmatpush2.bf16.msra.mxu0 %v2362
  %5531 = vmatprep.subr.bf16.mxu0 0
  %5532 = vmatpush2.bf16.msra.mxu0 %v2361
  %5533 = vmatprep.subr.bf16.mxu0 0
  %5534 = vmatpush2.bf16.msra.mxu0 %v2360
  %5535 = vmatprep.subr.bf16.mxu0 0
  %5536 = vmatpush2.bf16.msra.mxu0 %v2359
  %5537 = vmatprep.mubr.bf16.mxu0 %v4196
  %5538 = vmatmul.mubr.bf16.gmra.mxu0 %v4195
  %v5539 = vpop.f32.mrf.mxu0
  %v5540 = vadd.f32 %v5315, %v5539
  %v5541 = vpop.f32.mrf.mxu0
  %v5542 = vpop.f32.mrf.mxu0
  %v5543 = vadd.f32 %v5318, %v5542
  %v5544 = vpop.f32.mrf.mxu0
  %5545 = vmatprep.mubr.bf16.mxu0 %v4214
  %5546 = vmatmul.mubr.bf16.gmra.mxu0 %v4213
  %v5547 = vpop.f32.mrf.mxu0
  %v5548 = vadd.f32 %v5323, %v5547
  %v5549 = vpop.f32.mrf.mxu0
  %v5550 = vpop.f32.mrf.mxu0
  %v5551 = vadd.f32 %v5326, %v5550
  %v5552 = vpop.f32.mrf.mxu0
  %5553 = vmatprep.mubr.bf16.mxu0 %v4232
  %5554 = vmatmul.mubr.bf16.gmra.mxu0 %v4231
  %v5555 = vpop.f32.mrf.mxu0
  %v5556 = vadd.f32 %v5331, %v5555
  %v5557 = vpop.f32.mrf.mxu0
  %v5558 = vpop.f32.mrf.mxu0
  %v5559 = vadd.f32 %v5334, %v5558
  %v5560 = vpop.f32.mrf.mxu0
  %5561 = vmatprep.mubr.bf16.mxu0 %v4250
  %5562 = vmatmul.mubr.bf16.gmra.mxu0 %v4249
  %v5563 = vpop.f32.mrf.mxu0
  %v5564 = vadd.f32 %v5339, %v5563
  %v5565 = vpop.f32.mrf.mxu0
  %v5566 = vpop.f32.mrf.mxu0
  %v5567 = vadd.f32 %v5342, %v5566
  %v5568 = vpop.f32.mrf.mxu0
  %5569 = vmatprep.mubr.bf16.mxu0 %v4268
  %5570 = vmatmul.mubr.bf16.gmra.mxu0 %v4267
  %v5571 = vpop.f32.mrf.mxu0
  %v5572 = vadd.f32 %v5347, %v5571
  %v5573 = vpop.f32.mrf.mxu0
  %v5574 = vpop.f32.mrf.mxu0
  %v5575 = vadd.f32 %v5350, %v5574
  %v5576 = vpop.f32.mrf.mxu0
  %5577 = vmatprep.mubr.bf16.mxu0 %v4286
  %5578 = vmatmul.mubr.bf16.gmra.mxu0 %v4285
  %v5579 = vpop.f32.mrf.mxu0
  %v5580 = vadd.f32 %v5355, %v5579
  %v5581 = vpop.f32.mrf.mxu0
  %v5582 = vpop.f32.mrf.mxu0
  %v5583 = vadd.f32 %v5358, %v5582
  %v5584 = vpop.f32.mrf.mxu0
  %5585 = vmatprep.mubr.bf16.mxu0 %v4304
  %5586 = vmatmul.mubr.bf16.gmra.mxu0 %v4303
  %v5587 = vpop.f32.mrf.mxu0
  %v5588 = vadd.f32 %v5363, %v5587
  %v5589 = vpop.f32.mrf.mxu0
  %v5590 = vpop.f32.mrf.mxu0
  %v5591 = vadd.f32 %v5366, %v5590
  %v5592 = vpop.f32.mrf.mxu0
  %5593 = vmatprep.mubr.bf16.mxu0 %v4322
  %5594 = vmatmul.mubr.bf16.gmra.mxu0 %v4321
  %v5595 = vpop.f32.mrf.mxu0
  %v5596 = vadd.f32 %v5371, %v5595
  %v5597 = vpop.f32.mrf.mxu0
  %v5598 = vpop.f32.mrf.mxu0
  %v5599 = vadd.f32 %v5374, %v5598
  %v5600 = vpop.f32.mrf.mxu0
  %5601 = vmatprep.mubr.bf16.mxu0 %v4340
  %5602 = vmatmul.mubr.bf16.gmra.mxu0 %v4339
  %v5603 = vpop.f32.mrf.mxu0
  %v5604 = vadd.f32 %v5379, %v5603
  %v5605 = vpop.f32.mrf.mxu0
  %v5606 = vpop.f32.mrf.mxu0
  %v5607 = vadd.f32 %v5382, %v5606
  %v5608 = vpop.f32.mrf.mxu0
  %5609 = vmatprep.mubr.bf16.mxu0 %v4358
  %5610 = vmatmul.mubr.bf16.gmra.mxu0 %v4357
  %v5611 = vpop.f32.mrf.mxu0
  %v5612 = vadd.f32 %v5387, %v5611
  %v5613 = vpop.f32.mrf.mxu0
  %v5614 = vpop.f32.mrf.mxu0
  %v5615 = vadd.f32 %v5390, %v5614
  %v5616 = vpop.f32.mrf.mxu0
  %5617 = vmatprep.mubr.bf16.mxu0 %v4376
  %5618 = vmatmul.mubr.bf16.gmra.mxu0 %v4375
  %v5619 = vpop.f32.mrf.mxu0
  %v5620 = vadd.f32 %v5395, %v5619
  %v5621 = vpop.f32.mrf.mxu0
  %v5622 = vpop.f32.mrf.mxu0
  %v5623 = vadd.f32 %v5398, %v5622
  %v5624 = vpop.f32.mrf.mxu0
  %5625 = vmatprep.mubr.bf16.mxu0 %v4394
  %5626 = vmatmul.mubr.bf16.gmra.mxu0 %v4393
  %v5627 = vpop.f32.mrf.mxu0
  %v5628 = vadd.f32 %v5403, %v5627
  %v5629 = vpop.f32.mrf.mxu0
  %v5630 = vpop.f32.mrf.mxu0
  %v5631 = vadd.f32 %v5406, %v5630
  %v5632 = vpop.f32.mrf.mxu0
  %5633 = vmatprep.mubr.bf16.mxu0 %v4412
  %5634 = vmatmul.mubr.bf16.gmra.mxu0 %v4411
  %v5635 = vpop.f32.mrf.mxu0
  %v5636 = vadd.f32 %v5411, %v5635
  %v5637 = vpop.f32.mrf.mxu0
  %v5638 = vpop.f32.mrf.mxu0
  %v5639 = vadd.f32 %v5414, %v5638
  %v5640 = vpop.f32.mrf.mxu0
  %5641 = vmatprep.mubr.bf16.mxu0 %v4430
  %5642 = vmatmul.mubr.bf16.gmra.mxu0 %v4429
  %v5643 = vpop.f32.mrf.mxu0
  %v5644 = vadd.f32 %v5419, %v5643
  %v5645 = vpop.f32.mrf.mxu0
  %v5646 = vpop.f32.mrf.mxu0
  %v5647 = vadd.f32 %v5422, %v5646
  %v5648 = vpop.f32.mrf.mxu0
  %5649 = vmatprep.mubr.bf16.mxu0 %v4448
  %5650 = vmatmul.mubr.bf16.gmra.mxu0 %v4447
  %v5651 = vpop.f32.mrf.mxu0
  %v5652 = vadd.f32 %v5427, %v5651
  %v5653 = vpop.f32.mrf.mxu0
  %v5654 = vpop.f32.mrf.mxu0
  %v5655 = vadd.f32 %v5430, %v5654
  %v5656 = vpop.f32.mrf.mxu0
  %5657 = vmatprep.mubr.bf16.mxu0 %v4466
  %5658 = vmatmul.mubr.bf16.gmra.mxu0 %v4465
  %v5659 = vpop.f32.mrf.mxu0
  %v5660 = vadd.f32 %v5435, %v5659
  %v5661 = vpop.f32.mrf.mxu0
  %v5662 = vpop.f32.mrf.mxu0
  %v5663 = vadd.f32 %v5438, %v5662
  %v5664 = vpop.f32.mrf.mxu0
  %5665 = vmatprep.mubr.bf16.mxu0 %v4484
  %5666 = vmatmul.mubr.bf16.gmra.mxu0 %v4483
  %v5667 = vpop.f32.mrf.mxu0
  %v5668 = vadd.f32 %v5443, %v5667
  %v5669 = vpop.f32.mrf.mxu0
  %v5670 = vpop.f32.mrf.mxu0
  %v5671 = vadd.f32 %v5446, %v5670
  %v5672 = vpop.f32.mrf.mxu0
  %5673 = vmatprep.mubr.bf16.mxu0 %v4502
  %5674 = vmatmul.mubr.bf16.gmra.mxu0 %v4501
  %v5675 = vpop.f32.mrf.mxu0
  %v5676 = vadd.f32 %v5451, %v5675
  %v5677 = vpop.f32.mrf.mxu0
  %v5678 = vpop.f32.mrf.mxu0
  %v5679 = vadd.f32 %v5454, %v5678
  %v5680 = vpop.f32.mrf.mxu0
  %5681 = vmatprep.mubr.bf16.mxu0 %v4520
  %5682 = vmatmul.mubr.bf16.gmra.mxu0 %v4519
  %v5683 = vpop.f32.mrf.mxu0
  %v5684 = vadd.f32 %v5459, %v5683
  %v5685 = vpop.f32.mrf.mxu0
  %v5686 = vpop.f32.mrf.mxu0
  %v5687 = vadd.f32 %v5462, %v5686
  %v5688 = vpop.f32.mrf.mxu0
  %5689 = vmatprep.mubr.bf16.mxu0 %v4538
  %5690 = vmatmul.mubr.bf16.gmra.mxu0 %v4537
  %v5691 = vpop.f32.mrf.mxu0
  %v5692 = vadd.f32 %v5467, %v5691
  %v5693 = vpop.f32.mrf.mxu0
  %v5694 = vpop.f32.mrf.mxu0
  %v5695 = vadd.f32 %v5470, %v5694
  %v5696 = vpop.f32.mrf.mxu0
  %5697 = vmatprep.mubr.bf16.mxu0 %v4556
  %5698 = vmatmul.mubr.bf16.gmra.mxu0 %v4555
  %v5699 = vpop.f32.mrf.mxu0
  %v5700 = vadd.f32 %v5475, %v5699
  %v5701 = vpop.f32.mrf.mxu0
  %v5702 = vpop.f32.mrf.mxu0
  %v5703 = vadd.f32 %v5478, %v5702
  %v5704 = vpop.f32.mrf.mxu0
  %5705 = vmatprep.mubr.bf16.mxu0 %v4574
  %5706 = vmatmul.mubr.bf16.gmra.mxu0 %v4573
  %v5707 = vpop.f32.mrf.mxu0
  %v5708 = vadd.f32 %v5483, %v5707
  %v5709 = vpop.f32.mrf.mxu0
  %v5710 = vpop.f32.mrf.mxu0
  %v5711 = vadd.f32 %v5486, %v5710
  %v5712 = vpop.f32.mrf.mxu0
  %5713 = vmatprep.mubr.bf16.mxu0 %v4592
  %5714 = vmatmul.mubr.bf16.gmra.mxu0 %v4591
  %v5715 = vpop.f32.mrf.mxu0
  %v5716 = vadd.f32 %v5491, %v5715
  %v5717 = vpop.f32.mrf.mxu0
  %v5718 = vpop.f32.mrf.mxu0
  %v5719 = vadd.f32 %v5494, %v5718
  %v5720 = vpop.f32.mrf.mxu0
  %5721 = vmatprep.mubr.bf16.mxu0 %v4610
  %5722 = vmatmul.mubr.bf16.gmra.mxu0 %v4609
  %v5723 = vpop.f32.mrf.mxu0
  %v5724 = vadd.f32 %v5499, %v5723
  %v5725 = vpop.f32.mrf.mxu0
  %v5726 = vpop.f32.mrf.mxu0
  %v5727 = vadd.f32 %v5502, %v5726
  %v5728 = vpop.f32.mrf.mxu0
  %5729 = vdwg.mxu0
  %5730 = vmatprep.subr.bf16.mxu0 0
  %5731 = vmatpush1.bf16.msra.mxu0 %v2374
  %5732 = vmatprep.subr.bf16.mxu0 0
  %5733 = vmatpush1.bf16.msra.mxu0 %v2373
  %5734 = vmatprep.subr.bf16.mxu0 0
  %5735 = vmatpush1.bf16.msra.mxu0 %v2372
  %5736 = vmatprep.subr.bf16.mxu0 0
  %5737 = vmatpush1.bf16.msra.mxu0 %v2371
  %5738 = vmatprep.subr.bf16.mxu0 0
  %5739 = vmatpush1.bf16.msra.mxu0 %v2370
  %5740 = vmatprep.subr.bf16.mxu0 0
  %5741 = vmatpush1.bf16.msra.mxu0 %v2369
  %5742 = vmatprep.subr.bf16.mxu0 0
  %5743 = vmatpush1.bf16.msra.mxu0 %v2368
  %5744 = vmatprep.subr.bf16.mxu0 0
  %5745 = vmatpush1.bf16.msra.mxu0 %v2367
  %5746 = vmatprep.subr.bf16.mxu0 0
  %5747 = vmatpush2.bf16.msra.mxu0 %v2382
  %5748 = vmatprep.subr.bf16.mxu0 0
  %5749 = vmatpush2.bf16.msra.mxu0 %v2381
  %5750 = vmatprep.subr.bf16.mxu0 0
  %5751 = vmatpush2.bf16.msra.mxu0 %v2380
  %5752 = vmatprep.subr.bf16.mxu0 0
  %5753 = vmatpush2.bf16.msra.mxu0 %v2379
  %5754 = vmatprep.subr.bf16.mxu0 0
  %5755 = vmatpush2.bf16.msra.mxu0 %v2378
  %5756 = vmatprep.subr.bf16.mxu0 0
  %5757 = vmatpush2.bf16.msra.mxu0 %v2377
  %5758 = vmatprep.subr.bf16.mxu0 0
  %5759 = vmatpush2.bf16.msra.mxu0 %v2376
  %5760 = vmatprep.subr.bf16.mxu0 0
  %5761 = vmatpush2.bf16.msra.mxu0 %v2375
  %5762 = vmatprep.mubr.bf16.mxu0 %v4198
  %5763 = vmatmul.mubr.bf16.gmra.mxu0 %v4197
  %v5764 = vpop.f32.mrf.mxu0
  %v5765 = vadd.f32 %v5540, %v5764
  %v5766 = vpop.f32.mrf.mxu0
  %v5767 = vpop.f32.mrf.mxu0
  %v5768 = vadd.f32 %v5543, %v5767
  %v5769 = vpop.f32.mrf.mxu0
  %5770 = vmatprep.mubr.bf16.mxu0 %v4216
  %5771 = vmatmul.mubr.bf16.gmra.mxu0 %v4215
  %v5772 = vpop.f32.mrf.mxu0
  %v5773 = vadd.f32 %v5548, %v5772
  %v5774 = vpop.f32.mrf.mxu0
  %v5775 = vpop.f32.mrf.mxu0
  %v5776 = vadd.f32 %v5551, %v5775
  %v5777 = vpop.f32.mrf.mxu0
  %5778 = vmatprep.mubr.bf16.mxu0 %v4234
  %5779 = vmatmul.mubr.bf16.gmra.mxu0 %v4233
  %v5780 = vpop.f32.mrf.mxu0
  %v5781 = vadd.f32 %v5556, %v5780
  %v5782 = vpop.f32.mrf.mxu0
  %v5783 = vpop.f32.mrf.mxu0
  %v5784 = vadd.f32 %v5559, %v5783
  %v5785 = vpop.f32.mrf.mxu0
  %5786 = vmatprep.mubr.bf16.mxu0 %v4252
  %5787 = vmatmul.mubr.bf16.gmra.mxu0 %v4251
  %v5788 = vpop.f32.mrf.mxu0
  %v5789 = vadd.f32 %v5564, %v5788
  %v5790 = vpop.f32.mrf.mxu0
  %v5791 = vpop.f32.mrf.mxu0
  %v5792 = vadd.f32 %v5567, %v5791
  %v5793 = vpop.f32.mrf.mxu0
  %5794 = vmatprep.mubr.bf16.mxu0 %v4270
  %5795 = vmatmul.mubr.bf16.gmra.mxu0 %v4269
  %v5796 = vpop.f32.mrf.mxu0
  %v5797 = vadd.f32 %v5572, %v5796
  %v5798 = vpop.f32.mrf.mxu0
  %v5799 = vpop.f32.mrf.mxu0
  %v5800 = vadd.f32 %v5575, %v5799
  %v5801 = vpop.f32.mrf.mxu0
  %5802 = vmatprep.mubr.bf16.mxu0 %v4288
  %5803 = vmatmul.mubr.bf16.gmra.mxu0 %v4287
  %v5804 = vpop.f32.mrf.mxu0
  %v5805 = vadd.f32 %v5580, %v5804
  %v5806 = vpop.f32.mrf.mxu0
  %v5807 = vpop.f32.mrf.mxu0
  %v5808 = vadd.f32 %v5583, %v5807
  %v5809 = vpop.f32.mrf.mxu0
  %5810 = vmatprep.mubr.bf16.mxu0 %v4306
  %5811 = vmatmul.mubr.bf16.gmra.mxu0 %v4305
  %v5812 = vpop.f32.mrf.mxu0
  %v5813 = vadd.f32 %v5588, %v5812
  %v5814 = vpop.f32.mrf.mxu0
  %v5815 = vpop.f32.mrf.mxu0
  %v5816 = vadd.f32 %v5591, %v5815
  %v5817 = vpop.f32.mrf.mxu0
  %5818 = vmatprep.mubr.bf16.mxu0 %v4324
  %5819 = vmatmul.mubr.bf16.gmra.mxu0 %v4323
  %v5820 = vpop.f32.mrf.mxu0
  %v5821 = vadd.f32 %v5596, %v5820
  %v5822 = vpop.f32.mrf.mxu0
  %v5823 = vpop.f32.mrf.mxu0
  %v5824 = vadd.f32 %v5599, %v5823
  %v5825 = vpop.f32.mrf.mxu0
  %5826 = vmatprep.mubr.bf16.mxu0 %v4342
  %5827 = vmatmul.mubr.bf16.gmra.mxu0 %v4341
  %v5828 = vpop.f32.mrf.mxu0
  %v5829 = vadd.f32 %v5604, %v5828
  %v5830 = vpop.f32.mrf.mxu0
  %v5831 = vpop.f32.mrf.mxu0
  %v5832 = vadd.f32 %v5607, %v5831
  %v5833 = vpop.f32.mrf.mxu0
  %5834 = vmatprep.mubr.bf16.mxu0 %v4360
  %5835 = vmatmul.mubr.bf16.gmra.mxu0 %v4359
  %v5836 = vpop.f32.mrf.mxu0
  %v5837 = vadd.f32 %v5612, %v5836
  %v5838 = vpop.f32.mrf.mxu0
  %v5839 = vpop.f32.mrf.mxu0
  %v5840 = vadd.f32 %v5615, %v5839
  %v5841 = vpop.f32.mrf.mxu0
  %5842 = vmatprep.mubr.bf16.mxu0 %v4378
  %5843 = vmatmul.mubr.bf16.gmra.mxu0 %v4377
  %v5844 = vpop.f32.mrf.mxu0
  %v5845 = vadd.f32 %v5620, %v5844
  %v5846 = vpop.f32.mrf.mxu0
  %v5847 = vpop.f32.mrf.mxu0
  %v5848 = vadd.f32 %v5623, %v5847
  %v5849 = vpop.f32.mrf.mxu0
  %5850 = vmatprep.mubr.bf16.mxu0 %v4396
  %5851 = vmatmul.mubr.bf16.gmra.mxu0 %v4395
  %v5852 = vpop.f32.mrf.mxu0
  %v5853 = vadd.f32 %v5628, %v5852
  %v5854 = vpop.f32.mrf.mxu0
  %v5855 = vpop.f32.mrf.mxu0
  %v5856 = vadd.f32 %v5631, %v5855
  %v5857 = vpop.f32.mrf.mxu0
  %5858 = vmatprep.mubr.bf16.mxu0 %v4414
  %5859 = vmatmul.mubr.bf16.gmra.mxu0 %v4413
  %v5860 = vpop.f32.mrf.mxu0
  %v5861 = vadd.f32 %v5636, %v5860
  %v5862 = vpop.f32.mrf.mxu0
  %v5863 = vpop.f32.mrf.mxu0
  %v5864 = vadd.f32 %v5639, %v5863
  %v5865 = vpop.f32.mrf.mxu0
  %5866 = vmatprep.mubr.bf16.mxu0 %v4432
  %5867 = vmatmul.mubr.bf16.gmra.mxu0 %v4431
  %v5868 = vpop.f32.mrf.mxu0
  %v5869 = vadd.f32 %v5644, %v5868
  %v5870 = vpop.f32.mrf.mxu0
  %v5871 = vpop.f32.mrf.mxu0
  %v5872 = vadd.f32 %v5647, %v5871
  %v5873 = vpop.f32.mrf.mxu0
  %5874 = vmatprep.mubr.bf16.mxu0 %v4450
  %5875 = vmatmul.mubr.bf16.gmra.mxu0 %v4449
  %v5876 = vpop.f32.mrf.mxu0
  %v5877 = vadd.f32 %v5652, %v5876
  %v5878 = vpop.f32.mrf.mxu0
  %v5879 = vpop.f32.mrf.mxu0
  %v5880 = vadd.f32 %v5655, %v5879
  %v5881 = vpop.f32.mrf.mxu0
  %5882 = vmatprep.mubr.bf16.mxu0 %v4468
  %5883 = vmatmul.mubr.bf16.gmra.mxu0 %v4467
  %v5884 = vpop.f32.mrf.mxu0
  %v5885 = vadd.f32 %v5660, %v5884
  %v5886 = vpop.f32.mrf.mxu0
  %v5887 = vpop.f32.mrf.mxu0
  %v5888 = vadd.f32 %v5663, %v5887
  %v5889 = vpop.f32.mrf.mxu0
  %5890 = vmatprep.mubr.bf16.mxu0 %v4486
  %5891 = vmatmul.mubr.bf16.gmra.mxu0 %v4485
  %v5892 = vpop.f32.mrf.mxu0
  %v5893 = vadd.f32 %v5668, %v5892
  %v5894 = vpop.f32.mrf.mxu0
  %v5895 = vpop.f32.mrf.mxu0
  %v5896 = vadd.f32 %v5671, %v5895
  %v5897 = vpop.f32.mrf.mxu0
  %5898 = vmatprep.mubr.bf16.mxu0 %v4504
  %5899 = vmatmul.mubr.bf16.gmra.mxu0 %v4503
  %v5900 = vpop.f32.mrf.mxu0
  %v5901 = vadd.f32 %v5676, %v5900
  %v5902 = vpop.f32.mrf.mxu0
  %v5903 = vpop.f32.mrf.mxu0
  %v5904 = vadd.f32 %v5679, %v5903
  %v5905 = vpop.f32.mrf.mxu0
  %5906 = vmatprep.mubr.bf16.mxu0 %v4522
  %5907 = vmatmul.mubr.bf16.gmra.mxu0 %v4521
  %v5908 = vpop.f32.mrf.mxu0
  %v5909 = vadd.f32 %v5684, %v5908
  %v5910 = vpop.f32.mrf.mxu0
  %v5911 = vpop.f32.mrf.mxu0
  %v5912 = vadd.f32 %v5687, %v5911
  %v5913 = vpop.f32.mrf.mxu0
  %5914 = vmatprep.mubr.bf16.mxu0 %v4540
  %5915 = vmatmul.mubr.bf16.gmra.mxu0 %v4539
  %v5916 = vpop.f32.mrf.mxu0
  %v5917 = vadd.f32 %v5692, %v5916
  %v5918 = vpop.f32.mrf.mxu0
  %v5919 = vpop.f32.mrf.mxu0
  %v5920 = vadd.f32 %v5695, %v5919
  %v5921 = vpop.f32.mrf.mxu0
  %5922 = vmatprep.mubr.bf16.mxu0 %v4558
  %5923 = vmatmul.mubr.bf16.gmra.mxu0 %v4557
  %v5924 = vpop.f32.mrf.mxu0
  %v5925 = vadd.f32 %v5700, %v5924
  %v5926 = vpop.f32.mrf.mxu0
  %v5927 = vpop.f32.mrf.mxu0
  %v5928 = vadd.f32 %v5703, %v5927
  %v5929 = vpop.f32.mrf.mxu0
  %5930 = vmatprep.mubr.bf16.mxu0 %v4576
  %5931 = vmatmul.mubr.bf16.gmra.mxu0 %v4575
  %v5932 = vpop.f32.mrf.mxu0
  %v5933 = vadd.f32 %v5708, %v5932
  %v5934 = vpop.f32.mrf.mxu0
  %v5935 = vpop.f32.mrf.mxu0
  %v5936 = vadd.f32 %v5711, %v5935
  %v5937 = vpop.f32.mrf.mxu0
  %5938 = vmatprep.mubr.bf16.mxu0 %v4594
  %5939 = vmatmul.mubr.bf16.gmra.mxu0 %v4593
  %v5940 = vpop.f32.mrf.mxu0
  %v5941 = vadd.f32 %v5716, %v5940
  %v5942 = vpop.f32.mrf.mxu0
  %v5943 = vpop.f32.mrf.mxu0
  %v5944 = vadd.f32 %v5719, %v5943
  %v5945 = vpop.f32.mrf.mxu0
  %5946 = vmatprep.mubr.bf16.mxu0 %v4612
  %5947 = vmatmul.mubr.bf16.gmra.mxu0 %v4611
  %v5948 = vpop.f32.mrf.mxu0
  %v5949 = vadd.f32 %v5724, %v5948
  %v5950 = vpop.f32.mrf.mxu0
  %v5951 = vpop.f32.mrf.mxu0
  %v5952 = vadd.f32 %v5727, %v5951
  %v5953 = vpop.f32.mrf.mxu0
  %5954 = vdwg.mxu0
  %5955 = vmatprep.subr.bf16.mxu0 0
  %5956 = vmatpush1.bf16.msra.mxu0 %v2390
  %5957 = vmatprep.subr.bf16.mxu0 0
  %5958 = vmatpush1.bf16.msra.mxu0 %v2389
  %5959 = vmatprep.subr.bf16.mxu0 0
  %5960 = vmatpush1.bf16.msra.mxu0 %v2388
  %5961 = vmatprep.subr.bf16.mxu0 0
  %5962 = vmatpush1.bf16.msra.mxu0 %v2387
  %5963 = vmatprep.subr.bf16.mxu0 0
  %5964 = vmatpush1.bf16.msra.mxu0 %v2386
  %5965 = vmatprep.subr.bf16.mxu0 0
  %5966 = vmatpush1.bf16.msra.mxu0 %v2385
  %5967 = vmatprep.subr.bf16.mxu0 0
  %5968 = vmatpush1.bf16.msra.mxu0 %v2384
  %5969 = vmatprep.subr.bf16.mxu0 0
  %5970 = vmatpush1.bf16.msra.mxu0 %v2383
  %5971 = vmatprep.subr.bf16.mxu0 0
  %5972 = vmatpush2.bf16.msra.mxu0 %v2398
  %5973 = vmatprep.subr.bf16.mxu0 0
  %5974 = vmatpush2.bf16.msra.mxu0 %v2397
  %5975 = vmatprep.subr.bf16.mxu0 0
  %5976 = vmatpush2.bf16.msra.mxu0 %v2396
  %5977 = vmatprep.subr.bf16.mxu0 0
  %5978 = vmatpush2.bf16.msra.mxu0 %v2395
  %5979 = vmatprep.subr.bf16.mxu0 0
  %5980 = vmatpush2.bf16.msra.mxu0 %v2394
  %5981 = vmatprep.subr.bf16.mxu0 0
  %5982 = vmatpush2.bf16.msra.mxu0 %v2393
  %5983 = vmatprep.subr.bf16.mxu0 0
  %5984 = vmatpush2.bf16.msra.mxu0 %v2392
  %5985 = vmatprep.subr.bf16.mxu0 0
  %5986 = vmatpush2.bf16.msra.mxu0 %v2391
  %5987 = vmatprep.mubr.bf16.mxu0 %v4200
  %5988 = vmatmul.mubr.bf16.gmra.mxu0 %v4199
  %v5989 = vpop.f32.mrf.mxu0
  %v5990 = vadd.f32 %v5765, %v5989
  %v5991 = vpop.f32.mrf.mxu0
  %v5992 = vpop.f32.mrf.mxu0
  %v5993 = vadd.f32 %v5768, %v5992
  %v5994 = vpop.f32.mrf.mxu0
  %5995 = vmatprep.mubr.bf16.mxu0 %v4218
  %5996 = vmatmul.mubr.bf16.gmra.mxu0 %v4217
  %v5997 = vpop.f32.mrf.mxu0
  %v5998 = vadd.f32 %v5773, %v5997
  %v5999 = vpop.f32.mrf.mxu0
  %v6000 = vpop.f32.mrf.mxu0
  %v6001 = vadd.f32 %v5776, %v6000
  %v6002 = vpop.f32.mrf.mxu0
  %6003 = vmatprep.mubr.bf16.mxu0 %v4236
  %6004 = vmatmul.mubr.bf16.gmra.mxu0 %v4235
  %v6005 = vpop.f32.mrf.mxu0
  %v6006 = vadd.f32 %v5781, %v6005
  %v6007 = vpop.f32.mrf.mxu0
  %v6008 = vpop.f32.mrf.mxu0
  %v6009 = vadd.f32 %v5784, %v6008
  %v6010 = vpop.f32.mrf.mxu0
  %6011 = vmatprep.mubr.bf16.mxu0 %v4254
  %6012 = vmatmul.mubr.bf16.gmra.mxu0 %v4253
  %v6013 = vpop.f32.mrf.mxu0
  %v6014 = vadd.f32 %v5789, %v6013
  %v6015 = vpop.f32.mrf.mxu0
  %v6016 = vpop.f32.mrf.mxu0
  %v6017 = vadd.f32 %v5792, %v6016
  %v6018 = vpop.f32.mrf.mxu0
  %6019 = vmatprep.mubr.bf16.mxu0 %v4272
  %6020 = vmatmul.mubr.bf16.gmra.mxu0 %v4271
  %v6021 = vpop.f32.mrf.mxu0
  %v6022 = vadd.f32 %v5797, %v6021
  %v6023 = vpop.f32.mrf.mxu0
  %v6024 = vpop.f32.mrf.mxu0
  %v6025 = vadd.f32 %v5800, %v6024
  %v6026 = vpop.f32.mrf.mxu0
  %6027 = vmatprep.mubr.bf16.mxu0 %v4290
  %6028 = vmatmul.mubr.bf16.gmra.mxu0 %v4289
  %v6029 = vpop.f32.mrf.mxu0
  %v6030 = vadd.f32 %v5805, %v6029
  %v6031 = vpop.f32.mrf.mxu0
  %v6032 = vpop.f32.mrf.mxu0
  %v6033 = vadd.f32 %v5808, %v6032
  %v6034 = vpop.f32.mrf.mxu0
  %6035 = vmatprep.mubr.bf16.mxu0 %v4308
  %6036 = vmatmul.mubr.bf16.gmra.mxu0 %v4307
  %v6037 = vpop.f32.mrf.mxu0
  %v6038 = vadd.f32 %v5813, %v6037
  %v6039 = vpop.f32.mrf.mxu0
  %v6040 = vpop.f32.mrf.mxu0
  %v6041 = vadd.f32 %v5816, %v6040
  %v6042 = vpop.f32.mrf.mxu0
  %6043 = vmatprep.mubr.bf16.mxu0 %v4326
  %6044 = vmatmul.mubr.bf16.gmra.mxu0 %v4325
  %v6045 = vpop.f32.mrf.mxu0
  %v6046 = vadd.f32 %v5821, %v6045
  %v6047 = vpop.f32.mrf.mxu0
  %v6048 = vpop.f32.mrf.mxu0
  %v6049 = vadd.f32 %v5824, %v6048
  %v6050 = vpop.f32.mrf.mxu0
  %6051 = vmatprep.mubr.bf16.mxu0 %v4344
  %6052 = vmatmul.mubr.bf16.gmra.mxu0 %v4343
  %v6053 = vpop.f32.mrf.mxu0
  %v6054 = vadd.f32 %v5829, %v6053
  %v6055 = vpop.f32.mrf.mxu0
  %v6056 = vpop.f32.mrf.mxu0
  %v6057 = vadd.f32 %v5832, %v6056
  %v6058 = vpop.f32.mrf.mxu0
  %6059 = vmatprep.mubr.bf16.mxu0 %v4362
  %6060 = vmatmul.mubr.bf16.gmra.mxu0 %v4361
  %v6061 = vpop.f32.mrf.mxu0
  %v6062 = vadd.f32 %v5837, %v6061
  %v6063 = vpop.f32.mrf.mxu0
  %v6064 = vpop.f32.mrf.mxu0
  %v6065 = vadd.f32 %v5840, %v6064
  %v6066 = vpop.f32.mrf.mxu0
  %6067 = vmatprep.mubr.bf16.mxu0 %v4380
  %6068 = vmatmul.mubr.bf16.gmra.mxu0 %v4379
  %v6069 = vpop.f32.mrf.mxu0
  %v6070 = vadd.f32 %v5845, %v6069
  %v6071 = vpop.f32.mrf.mxu0
  %v6072 = vpop.f32.mrf.mxu0
  %v6073 = vadd.f32 %v5848, %v6072
  %v6074 = vpop.f32.mrf.mxu0
  %6075 = vmatprep.mubr.bf16.mxu0 %v4398
  %6076 = vmatmul.mubr.bf16.gmra.mxu0 %v4397
  %v6077 = vpop.f32.mrf.mxu0
  %v6078 = vadd.f32 %v5853, %v6077
  %v6079 = vpop.f32.mrf.mxu0
  %v6080 = vpop.f32.mrf.mxu0
  %v6081 = vadd.f32 %v5856, %v6080
  %v6082 = vpop.f32.mrf.mxu0
  %6083 = vmatprep.mubr.bf16.mxu0 %v4416
  %6084 = vmatmul.mubr.bf16.gmra.mxu0 %v4415
  %v6085 = vpop.f32.mrf.mxu0
  %v6086 = vadd.f32 %v5861, %v6085
  %v6087 = vpop.f32.mrf.mxu0
  %v6088 = vpop.f32.mrf.mxu0
  %v6089 = vadd.f32 %v5864, %v6088
  %v6090 = vpop.f32.mrf.mxu0
  %6091 = vmatprep.mubr.bf16.mxu0 %v4434
  %6092 = vmatmul.mubr.bf16.gmra.mxu0 %v4433
  %v6093 = vpop.f32.mrf.mxu0
  %v6094 = vadd.f32 %v5869, %v6093
  %v6095 = vpop.f32.mrf.mxu0
  %v6096 = vpop.f32.mrf.mxu0
  %v6097 = vadd.f32 %v5872, %v6096
  %v6098 = vpop.f32.mrf.mxu0
  %6099 = vmatprep.mubr.bf16.mxu0 %v4452
  %6100 = vmatmul.mubr.bf16.gmra.mxu0 %v4451
  %v6101 = vpop.f32.mrf.mxu0
  %v6102 = vadd.f32 %v5877, %v6101
  %v6103 = vpop.f32.mrf.mxu0
  %v6104 = vpop.f32.mrf.mxu0
  %v6105 = vadd.f32 %v5880, %v6104
  %v6106 = vpop.f32.mrf.mxu0
  %6107 = vmatprep.mubr.bf16.mxu0 %v4470
  %6108 = vmatmul.mubr.bf16.gmra.mxu0 %v4469
  %v6109 = vpop.f32.mrf.mxu0
  %v6110 = vadd.f32 %v5885, %v6109
  %v6111 = vpop.f32.mrf.mxu0
  %v6112 = vpop.f32.mrf.mxu0
  %v6113 = vadd.f32 %v5888, %v6112
  %v6114 = vpop.f32.mrf.mxu0
  %6115 = vmatprep.mubr.bf16.mxu0 %v4488
  %6116 = vmatmul.mubr.bf16.gmra.mxu0 %v4487
  %v6117 = vpop.f32.mrf.mxu0
  %v6118 = vadd.f32 %v5893, %v6117
  %v6119 = vpop.f32.mrf.mxu0
  %v6120 = vpop.f32.mrf.mxu0
  %v6121 = vadd.f32 %v5896, %v6120
  %v6122 = vpop.f32.mrf.mxu0
  %6123 = vmatprep.mubr.bf16.mxu0 %v4506
  %6124 = vmatmul.mubr.bf16.gmra.mxu0 %v4505
  %v6125 = vpop.f32.mrf.mxu0
  %v6126 = vadd.f32 %v5901, %v6125
  %v6127 = vpop.f32.mrf.mxu0
  %v6128 = vpop.f32.mrf.mxu0
  %v6129 = vadd.f32 %v5904, %v6128
  %v6130 = vpop.f32.mrf.mxu0
  %6131 = vmatprep.mubr.bf16.mxu0 %v4524
  %6132 = vmatmul.mubr.bf16.gmra.mxu0 %v4523
  %v6133 = vpop.f32.mrf.mxu0
  %v6134 = vadd.f32 %v5909, %v6133
  %v6135 = vpop.f32.mrf.mxu0
  %v6136 = vpop.f32.mrf.mxu0
  %v6137 = vadd.f32 %v5912, %v6136
  %v6138 = vpop.f32.mrf.mxu0
  %6139 = vmatprep.mubr.bf16.mxu0 %v4542
  %6140 = vmatmul.mubr.bf16.gmra.mxu0 %v4541
  %v6141 = vpop.f32.mrf.mxu0
  %v6142 = vadd.f32 %v5917, %v6141
  %v6143 = vpop.f32.mrf.mxu0
  %v6144 = vpop.f32.mrf.mxu0
  %v6145 = vadd.f32 %v5920, %v6144
  %v6146 = vpop.f32.mrf.mxu0
  %6147 = vmatprep.mubr.bf16.mxu0 %v4560
  %6148 = vmatmul.mubr.bf16.gmra.mxu0 %v4559
  %v6149 = vpop.f32.mrf.mxu0
  %v6150 = vadd.f32 %v5925, %v6149
  %v6151 = vpop.f32.mrf.mxu0
  %v6152 = vpop.f32.mrf.mxu0
  %v6153 = vadd.f32 %v5928, %v6152
  %v6154 = vpop.f32.mrf.mxu0
  %6155 = vmatprep.mubr.bf16.mxu0 %v4578
  %6156 = vmatmul.mubr.bf16.gmra.mxu0 %v4577
  %v6157 = vpop.f32.mrf.mxu0
  %v6158 = vadd.f32 %v5933, %v6157
  %v6159 = vpop.f32.mrf.mxu0
  %v6160 = vpop.f32.mrf.mxu0
  %v6161 = vadd.f32 %v5936, %v6160
  %v6162 = vpop.f32.mrf.mxu0
  %6163 = vmatprep.mubr.bf16.mxu0 %v4596
  %6164 = vmatmul.mubr.bf16.gmra.mxu0 %v4595
  %v6165 = vpop.f32.mrf.mxu0
  %v6166 = vadd.f32 %v5941, %v6165
  %v6167 = vpop.f32.mrf.mxu0
  %v6168 = vpop.f32.mrf.mxu0
  %v6169 = vadd.f32 %v5944, %v6168
  %v6170 = vpop.f32.mrf.mxu0
  %6171 = vmatprep.mubr.bf16.mxu0 %v4614
  %6172 = vmatmul.mubr.bf16.gmra.mxu0 %v4613
  %v6173 = vpop.f32.mrf.mxu0
  %v6174 = vadd.f32 %v5949, %v6173
  %v6175 = vpop.f32.mrf.mxu0
  %v6176 = vpop.f32.mrf.mxu0
  %v6177 = vadd.f32 %v5952, %v6176
  %v6178 = vpop.f32.mrf.mxu0
  %6179 = vdwg.mxu0
  %6180 = vmatprep.subr.bf16.mxu0 0
  %6181 = vmatpush1.bf16.msra.mxu0 %v2406
  %6182 = vmatprep.subr.bf16.mxu0 0
  %6183 = vmatpush1.bf16.msra.mxu0 %v2405
  %6184 = vmatprep.subr.bf16.mxu0 0
  %6185 = vmatpush1.bf16.msra.mxu0 %v2404
  %6186 = vmatprep.subr.bf16.mxu0 0
  %6187 = vmatpush1.bf16.msra.mxu0 %v2403
  %6188 = vmatprep.subr.bf16.mxu0 0
  %6189 = vmatpush1.bf16.msra.mxu0 %v2402
  %6190 = vmatprep.subr.bf16.mxu0 0
  %6191 = vmatpush1.bf16.msra.mxu0 %v2401
  %6192 = vmatprep.subr.bf16.mxu0 0
  %6193 = vmatpush1.bf16.msra.mxu0 %v2400
  %6194 = vmatprep.subr.bf16.mxu0 0
  %6195 = vmatpush1.bf16.msra.mxu0 %v2399
  %6196 = vmatprep.subr.bf16.mxu0 0
  %6197 = vmatpush2.bf16.msra.mxu0 %v2414
  %6198 = vmatprep.subr.bf16.mxu0 0
  %6199 = vmatpush2.bf16.msra.mxu0 %v2413
  %6200 = vmatprep.subr.bf16.mxu0 0
  %6201 = vmatpush2.bf16.msra.mxu0 %v2412
  %6202 = vmatprep.subr.bf16.mxu0 0
  %6203 = vmatpush2.bf16.msra.mxu0 %v2411
  %6204 = vmatprep.subr.bf16.mxu0 0
  %6205 = vmatpush2.bf16.msra.mxu0 %v2410
  %6206 = vmatprep.subr.bf16.mxu0 0
  %6207 = vmatpush2.bf16.msra.mxu0 %v2409
  %6208 = vmatprep.subr.bf16.mxu0 0
  %6209 = vmatpush2.bf16.msra.mxu0 %v2408
  %6210 = vmatprep.subr.bf16.mxu0 0
  %6211 = vmatpush2.bf16.msra.mxu0 %v2407
  %6212 = vmatprep.mubr.bf16.mxu0 %v4202
  %6213 = vmatmul.mubr.bf16.gmra.mxu0 %v4201
  %v6214 = vpop.f32.mrf.mxu0
  %v6215 = vadd.f32 %v5990, %v6214
  %v6216 = vpop.f32.mrf.mxu0
  %v6217 = vpop.f32.mrf.mxu0
  %v6218 = vadd.f32 %v5993, %v6217
  %v6219 = vpop.f32.mrf.mxu0
  %6220 = vmatprep.mubr.bf16.mxu0 %v4220
  %6221 = vmatmul.mubr.bf16.gmra.mxu0 %v4219
  %v6222 = vpop.f32.mrf.mxu0
  %v6223 = vadd.f32 %v5998, %v6222
  %v6224 = vpop.f32.mrf.mxu0
  %v6225 = vpop.f32.mrf.mxu0
  %v6226 = vadd.f32 %v6001, %v6225
  %v6227 = vpop.f32.mrf.mxu0
  %6228 = vmatprep.mubr.bf16.mxu0 %v4238
  %6229 = vmatmul.mubr.bf16.gmra.mxu0 %v4237
  %v6230 = vpop.f32.mrf.mxu0
  %v6231 = vadd.f32 %v6006, %v6230
  %v6232 = vpop.f32.mrf.mxu0
  %v6233 = vpop.f32.mrf.mxu0
  %v6234 = vadd.f32 %v6009, %v6233
  %v6235 = vpop.f32.mrf.mxu0
  %6236 = vmatprep.mubr.bf16.mxu0 %v4256
  %6237 = vmatmul.mubr.bf16.gmra.mxu0 %v4255
  %v6238 = vpop.f32.mrf.mxu0
  %v6239 = vadd.f32 %v6014, %v6238
  %v6240 = vpop.f32.mrf.mxu0
  %v6241 = vpop.f32.mrf.mxu0
  %v6242 = vadd.f32 %v6017, %v6241
  %v6243 = vpop.f32.mrf.mxu0
  %6244 = vmatprep.mubr.bf16.mxu0 %v4274
  %6245 = vmatmul.mubr.bf16.gmra.mxu0 %v4273
  %v6246 = vpop.f32.mrf.mxu0
  %v6247 = vadd.f32 %v6022, %v6246
  %v6248 = vpop.f32.mrf.mxu0
  %v6249 = vpop.f32.mrf.mxu0
  %v6250 = vadd.f32 %v6025, %v6249
  %v6251 = vpop.f32.mrf.mxu0
  %6252 = vmatprep.mubr.bf16.mxu0 %v4292
  %6253 = vmatmul.mubr.bf16.gmra.mxu0 %v4291
  %v6254 = vpop.f32.mrf.mxu0
  %v6255 = vadd.f32 %v6030, %v6254
  %v6256 = vpop.f32.mrf.mxu0
  %v6257 = vpop.f32.mrf.mxu0
  %v6258 = vadd.f32 %v6033, %v6257
  %v6259 = vpop.f32.mrf.mxu0
  %6260 = vmatprep.mubr.bf16.mxu0 %v4310
  %6261 = vmatmul.mubr.bf16.gmra.mxu0 %v4309
  %v6262 = vpop.f32.mrf.mxu0
  %v6263 = vadd.f32 %v6038, %v6262
  %v6264 = vpop.f32.mrf.mxu0
  %v6265 = vpop.f32.mrf.mxu0
  %v6266 = vadd.f32 %v6041, %v6265
  %v6267 = vpop.f32.mrf.mxu0
  %6268 = vmatprep.mubr.bf16.mxu0 %v4328
  %6269 = vmatmul.mubr.bf16.gmra.mxu0 %v4327
  %v6270 = vpop.f32.mrf.mxu0
  %v6271 = vadd.f32 %v6046, %v6270
  %v6272 = vpop.f32.mrf.mxu0
  %v6273 = vpop.f32.mrf.mxu0
  %v6274 = vadd.f32 %v6049, %v6273
  %v6275 = vpop.f32.mrf.mxu0
  %6276 = vmatprep.mubr.bf16.mxu0 %v4346
  %6277 = vmatmul.mubr.bf16.gmra.mxu0 %v4345
  %v6278 = vpop.f32.mrf.mxu0
  %v6279 = vadd.f32 %v6054, %v6278
  %v6280 = vpop.f32.mrf.mxu0
  %v6281 = vpop.f32.mrf.mxu0
  %v6282 = vadd.f32 %v6057, %v6281
  %v6283 = vpop.f32.mrf.mxu0
  %6284 = vmatprep.mubr.bf16.mxu0 %v4364
  %6285 = vmatmul.mubr.bf16.gmra.mxu0 %v4363
  %v6286 = vpop.f32.mrf.mxu0
  %v6287 = vadd.f32 %v6062, %v6286
  %v6288 = vpop.f32.mrf.mxu0
  %v6289 = vpop.f32.mrf.mxu0
  %v6290 = vadd.f32 %v6065, %v6289
  %v6291 = vpop.f32.mrf.mxu0
  %6292 = vmatprep.mubr.bf16.mxu0 %v4382
  %6293 = vmatmul.mubr.bf16.gmra.mxu0 %v4381
  %v6294 = vpop.f32.mrf.mxu0
  %v6295 = vadd.f32 %v6070, %v6294
  %v6296 = vpop.f32.mrf.mxu0
  %v6297 = vpop.f32.mrf.mxu0
  %v6298 = vadd.f32 %v6073, %v6297
  %v6299 = vpop.f32.mrf.mxu0
  %6300 = vmatprep.mubr.bf16.mxu0 %v4400
  %6301 = vmatmul.mubr.bf16.gmra.mxu0 %v4399
  %v6302 = vpop.f32.mrf.mxu0
  %v6303 = vadd.f32 %v6078, %v6302
  %v6304 = vpop.f32.mrf.mxu0
  %v6305 = vpop.f32.mrf.mxu0
  %v6306 = vadd.f32 %v6081, %v6305
  %v6307 = vpop.f32.mrf.mxu0
  %6308 = vmatprep.mubr.bf16.mxu0 %v4418
  %6309 = vmatmul.mubr.bf16.gmra.mxu0 %v4417
  %v6310 = vpop.f32.mrf.mxu0
  %v6311 = vadd.f32 %v6086, %v6310
  %v6312 = vpop.f32.mrf.mxu0
  %v6313 = vpop.f32.mrf.mxu0
  %v6314 = vadd.f32 %v6089, %v6313
  %v6315 = vpop.f32.mrf.mxu0
  %6316 = vmatprep.mubr.bf16.mxu0 %v4436
  %6317 = vmatmul.mubr.bf16.gmra.mxu0 %v4435
  %v6318 = vpop.f32.mrf.mxu0
  %v6319 = vadd.f32 %v6094, %v6318
  %v6320 = vpop.f32.mrf.mxu0
  %v6321 = vpop.f32.mrf.mxu0
  %v6322 = vadd.f32 %v6097, %v6321
  %v6323 = vpop.f32.mrf.mxu0
  %6324 = vmatprep.mubr.bf16.mxu0 %v4454
  %6325 = vmatmul.mubr.bf16.gmra.mxu0 %v4453
  %v6326 = vpop.f32.mrf.mxu0
  %v6327 = vadd.f32 %v6102, %v6326
  %v6328 = vpop.f32.mrf.mxu0
  %v6329 = vpop.f32.mrf.mxu0
  %v6330 = vadd.f32 %v6105, %v6329
  %v6331 = vpop.f32.mrf.mxu0
  %6332 = vmatprep.mubr.bf16.mxu0 %v4472
  %6333 = vmatmul.mubr.bf16.gmra.mxu0 %v4471
  %v6334 = vpop.f32.mrf.mxu0
  %v6335 = vadd.f32 %v6110, %v6334
  %v6336 = vpop.f32.mrf.mxu0
  %v6337 = vpop.f32.mrf.mxu0
  %v6338 = vadd.f32 %v6113, %v6337
  %v6339 = vpop.f32.mrf.mxu0
  %6340 = vmatprep.mubr.bf16.mxu0 %v4490
  %6341 = vmatmul.mubr.bf16.gmra.mxu0 %v4489
  %v6342 = vpop.f32.mrf.mxu0
  %v6343 = vadd.f32 %v6118, %v6342
  %v6344 = vpop.f32.mrf.mxu0
  %v6345 = vpop.f32.mrf.mxu0
  %v6346 = vadd.f32 %v6121, %v6345
  %v6347 = vpop.f32.mrf.mxu0
  %6348 = vmatprep.mubr.bf16.mxu0 %v4508
  %6349 = vmatmul.mubr.bf16.gmra.mxu0 %v4507
  %v6350 = vpop.f32.mrf.mxu0
  %v6351 = vadd.f32 %v6126, %v6350
  %v6352 = vpop.f32.mrf.mxu0
  %v6353 = vpop.f32.mrf.mxu0
  %v6354 = vadd.f32 %v6129, %v6353
  %v6355 = vpop.f32.mrf.mxu0
  %6356 = vmatprep.mubr.bf16.mxu0 %v4526
  %6357 = vmatmul.mubr.bf16.gmra.mxu0 %v4525
  %v6358 = vpop.f32.mrf.mxu0
  %v6359 = vadd.f32 %v6134, %v6358
  %v6360 = vpop.f32.mrf.mxu0
  %v6361 = vpop.f32.mrf.mxu0
  %v6362 = vadd.f32 %v6137, %v6361
  %v6363 = vpop.f32.mrf.mxu0
  %6364 = vmatprep.mubr.bf16.mxu0 %v4544
  %6365 = vmatmul.mubr.bf16.gmra.mxu0 %v4543
  %v6366 = vpop.f32.mrf.mxu0
  %v6367 = vadd.f32 %v6142, %v6366
  %v6368 = vpop.f32.mrf.mxu0
  %v6369 = vpop.f32.mrf.mxu0
  %v6370 = vadd.f32 %v6145, %v6369
  %v6371 = vpop.f32.mrf.mxu0
  %6372 = vmatprep.mubr.bf16.mxu0 %v4562
  %6373 = vmatmul.mubr.bf16.gmra.mxu0 %v4561
  %v6374 = vpop.f32.mrf.mxu0
  %v6375 = vadd.f32 %v6150, %v6374
  %v6376 = vpop.f32.mrf.mxu0
  %v6377 = vpop.f32.mrf.mxu0
  %v6378 = vadd.f32 %v6153, %v6377
  %v6379 = vpop.f32.mrf.mxu0
  %6380 = vmatprep.mubr.bf16.mxu0 %v4580
  %6381 = vmatmul.mubr.bf16.gmra.mxu0 %v4579
  %v6382 = vpop.f32.mrf.mxu0
  %v6383 = vadd.f32 %v6158, %v6382
  %v6384 = vpop.f32.mrf.mxu0
  %v6385 = vpop.f32.mrf.mxu0
  %v6386 = vadd.f32 %v6161, %v6385
  %v6387 = vpop.f32.mrf.mxu0
  %6388 = vmatprep.mubr.bf16.mxu0 %v4598
  %6389 = vmatmul.mubr.bf16.gmra.mxu0 %v4597
  %v6390 = vpop.f32.mrf.mxu0
  %v6391 = vadd.f32 %v6166, %v6390
  %v6392 = vpop.f32.mrf.mxu0
  %v6393 = vpop.f32.mrf.mxu0
  %v6394 = vadd.f32 %v6169, %v6393
  %v6395 = vpop.f32.mrf.mxu0
  %6396 = vmatprep.mubr.bf16.mxu0 %v4616
  %6397 = vmatmul.mubr.bf16.gmra.mxu0 %v4615
  %v6398 = vpop.f32.mrf.mxu0
  %v6399 = vadd.f32 %v6174, %v6398
  %v6400 = vpop.f32.mrf.mxu0
  %v6401 = vpop.f32.mrf.mxu0
  %v6402 = vadd.f32 %v6177, %v6401
  %v6403 = vpop.f32.mrf.mxu0
  %6404 = vdwg.mxu0
  %6405 = vmatprep.subr.bf16.mxu0 0
  %6406 = vmatpush1.bf16.msra.mxu0 %v2422
  %6407 = vmatprep.subr.bf16.mxu0 0
  %6408 = vmatpush1.bf16.msra.mxu0 %v2421
  %6409 = vmatprep.subr.bf16.mxu0 0
  %6410 = vmatpush1.bf16.msra.mxu0 %v2420
  %6411 = vmatprep.subr.bf16.mxu0 0
  %6412 = vmatpush1.bf16.msra.mxu0 %v2419
  %6413 = vmatprep.subr.bf16.mxu0 0
  %6414 = vmatpush1.bf16.msra.mxu0 %v2418
  %6415 = vmatprep.subr.bf16.mxu0 0
  %6416 = vmatpush1.bf16.msra.mxu0 %v2417
  %6417 = vmatprep.subr.bf16.mxu0 0
  %6418 = vmatpush1.bf16.msra.mxu0 %v2416
  %6419 = vmatprep.subr.bf16.mxu0 0
  %6420 = vmatpush1.bf16.msra.mxu0 %v2415
  %6421 = vmatprep.subr.bf16.mxu0 0
  %6422 = vmatpush2.bf16.msra.mxu0 %v2430
  %6423 = vmatprep.subr.bf16.mxu0 0
  %6424 = vmatpush2.bf16.msra.mxu0 %v2429
  %6425 = vmatprep.subr.bf16.mxu0 0
  %6426 = vmatpush2.bf16.msra.mxu0 %v2428
  %6427 = vmatprep.subr.bf16.mxu0 0
  %6428 = vmatpush2.bf16.msra.mxu0 %v2427
  %6429 = vmatprep.subr.bf16.mxu0 0
  %6430 = vmatpush2.bf16.msra.mxu0 %v2426
  %6431 = vmatprep.subr.bf16.mxu0 0
  %6432 = vmatpush2.bf16.msra.mxu0 %v2425
  %6433 = vmatprep.subr.bf16.mxu0 0
  %6434 = vmatpush2.bf16.msra.mxu0 %v2424
  %6435 = vmatprep.subr.bf16.mxu0 0
  %6436 = vmatpush2.bf16.msra.mxu0 %v2423
  %6437 = vmatprep.mubr.bf16.mxu0 %v4204
  %6438 = vmatmul.mubr.bf16.gmra.mxu0 %v4203
  %v6439 = vpop.f32.mrf.mxu0
  %v6440 = vadd.f32 %v6215, %v6439
  %v6441 = vpop.f32.mrf.mxu0
  %v6442 = vpop.f32.mrf.mxu0
  %v6443 = vadd.f32 %v6218, %v6442
  %v6444 = vpop.f32.mrf.mxu0
  %6445 = vmatprep.mubr.bf16.mxu0 %v4222
  %6446 = vmatmul.mubr.bf16.gmra.mxu0 %v4221
  %v6447 = vpop.f32.mrf.mxu0
  %v6448 = vadd.f32 %v6223, %v6447
  %v6449 = vpop.f32.mrf.mxu0
  %v6450 = vpop.f32.mrf.mxu0
  %v6451 = vadd.f32 %v6226, %v6450
  %v6452 = vpop.f32.mrf.mxu0
  %6453 = vmatprep.mubr.bf16.mxu0 %v4240
  %6454 = vmatmul.mubr.bf16.gmra.mxu0 %v4239
  %v6455 = vpop.f32.mrf.mxu0
  %v6456 = vadd.f32 %v6231, %v6455
  %v6457 = vpop.f32.mrf.mxu0
  %v6458 = vpop.f32.mrf.mxu0
  %v6459 = vadd.f32 %v6234, %v6458
  %v6460 = vpop.f32.mrf.mxu0
  %6461 = vmatprep.mubr.bf16.mxu0 %v4258
  %6462 = vmatmul.mubr.bf16.gmra.mxu0 %v4257
  %v6463 = vpop.f32.mrf.mxu0
  %v6464 = vadd.f32 %v6239, %v6463
  %v6465 = vpop.f32.mrf.mxu0
  %v6466 = vpop.f32.mrf.mxu0
  %v6467 = vadd.f32 %v6242, %v6466
  %v6468 = vpop.f32.mrf.mxu0
  %6469 = vmatprep.mubr.bf16.mxu0 %v4276
  %6470 = vmatmul.mubr.bf16.gmra.mxu0 %v4275
  %v6471 = vpop.f32.mrf.mxu0
  %v6472 = vadd.f32 %v6247, %v6471
  %v6473 = vpop.f32.mrf.mxu0
  %v6474 = vpop.f32.mrf.mxu0
  %v6475 = vadd.f32 %v6250, %v6474
  %v6476 = vpop.f32.mrf.mxu0
  %6477 = vmatprep.mubr.bf16.mxu0 %v4294
  %6478 = vmatmul.mubr.bf16.gmra.mxu0 %v4293
  %v6479 = vpop.f32.mrf.mxu0
  %v6480 = vadd.f32 %v6255, %v6479
  %v6481 = vpop.f32.mrf.mxu0
  %v6482 = vpop.f32.mrf.mxu0
  %v6483 = vadd.f32 %v6258, %v6482
  %v6484 = vpop.f32.mrf.mxu0
  %6485 = vmatprep.mubr.bf16.mxu0 %v4312
  %6486 = vmatmul.mubr.bf16.gmra.mxu0 %v4311
  %v6487 = vpop.f32.mrf.mxu0
  %v6488 = vadd.f32 %v6263, %v6487
  %v6489 = vpop.f32.mrf.mxu0
  %v6490 = vpop.f32.mrf.mxu0
  %v6491 = vadd.f32 %v6266, %v6490
  %v6492 = vpop.f32.mrf.mxu0
  %6493 = vmatprep.mubr.bf16.mxu0 %v4330
  %6494 = vmatmul.mubr.bf16.gmra.mxu0 %v4329
  %v6495 = vpop.f32.mrf.mxu0
  %v6496 = vadd.f32 %v6271, %v6495
  %v6497 = vpop.f32.mrf.mxu0
  %v6498 = vpop.f32.mrf.mxu0
  %v6499 = vadd.f32 %v6274, %v6498
  %v6500 = vpop.f32.mrf.mxu0
  %6501 = vmatprep.mubr.bf16.mxu0 %v4348
  %6502 = vmatmul.mubr.bf16.gmra.mxu0 %v4347
  %v6503 = vpop.f32.mrf.mxu0
  %v6504 = vadd.f32 %v6279, %v6503
  %v6505 = vpop.f32.mrf.mxu0
  %v6506 = vpop.f32.mrf.mxu0
  %v6507 = vadd.f32 %v6282, %v6506
  %v6508 = vpop.f32.mrf.mxu0
  %6509 = vmatprep.mubr.bf16.mxu0 %v4366
  %6510 = vmatmul.mubr.bf16.gmra.mxu0 %v4365
  %v6511 = vpop.f32.mrf.mxu0
  %v6512 = vadd.f32 %v6287, %v6511
  %v6513 = vpop.f32.mrf.mxu0
  %v6514 = vpop.f32.mrf.mxu0
  %v6515 = vadd.f32 %v6290, %v6514
  %v6516 = vpop.f32.mrf.mxu0
  %6517 = vmatprep.mubr.bf16.mxu0 %v4384
  %6518 = vmatmul.mubr.bf16.gmra.mxu0 %v4383
  %v6519 = vpop.f32.mrf.mxu0
  %v6520 = vadd.f32 %v6295, %v6519
  %v6521 = vpop.f32.mrf.mxu0
  %v6522 = vpop.f32.mrf.mxu0
  %v6523 = vadd.f32 %v6298, %v6522
  %v6524 = vpop.f32.mrf.mxu0
  %6525 = vmatprep.mubr.bf16.mxu0 %v4402
  %6526 = vmatmul.mubr.bf16.gmra.mxu0 %v4401
  %v6527 = vpop.f32.mrf.mxu0
  %v6528 = vadd.f32 %v6303, %v6527
  %v6529 = vpop.f32.mrf.mxu0
  %v6530 = vpop.f32.mrf.mxu0
  %v6531 = vadd.f32 %v6306, %v6530
  %v6532 = vpop.f32.mrf.mxu0
  %6533 = vmatprep.mubr.bf16.mxu0 %v4420
  %6534 = vmatmul.mubr.bf16.gmra.mxu0 %v4419
  %v6535 = vpop.f32.mrf.mxu0
  %v6536 = vadd.f32 %v6311, %v6535
  %v6537 = vpop.f32.mrf.mxu0
  %v6538 = vpop.f32.mrf.mxu0
  %v6539 = vadd.f32 %v6314, %v6538
  %v6540 = vpop.f32.mrf.mxu0
  %6541 = vmatprep.mubr.bf16.mxu0 %v4438
  %6542 = vmatmul.mubr.bf16.gmra.mxu0 %v4437
  %v6543 = vpop.f32.mrf.mxu0
  %v6544 = vadd.f32 %v6319, %v6543
  %v6545 = vpop.f32.mrf.mxu0
  %v6546 = vpop.f32.mrf.mxu0
  %v6547 = vadd.f32 %v6322, %v6546
  %v6548 = vpop.f32.mrf.mxu0
  %6549 = vmatprep.mubr.bf16.mxu0 %v4456
  %6550 = vmatmul.mubr.bf16.gmra.mxu0 %v4455
  %v6551 = vpop.f32.mrf.mxu0
  %v6552 = vadd.f32 %v6327, %v6551
  %v6553 = vpop.f32.mrf.mxu0
  %v6554 = vpop.f32.mrf.mxu0
  %v6555 = vadd.f32 %v6330, %v6554
  %v6556 = vpop.f32.mrf.mxu0
  %6557 = vmatprep.mubr.bf16.mxu0 %v4474
  %6558 = vmatmul.mubr.bf16.gmra.mxu0 %v4473
  %v6559 = vpop.f32.mrf.mxu0
  %v6560 = vadd.f32 %v6335, %v6559
  %v6561 = vpop.f32.mrf.mxu0
  %v6562 = vpop.f32.mrf.mxu0
  %v6563 = vadd.f32 %v6338, %v6562
  %v6564 = vpop.f32.mrf.mxu0
  %6565 = vmatprep.mubr.bf16.mxu0 %v4492
  %6566 = vmatmul.mubr.bf16.gmra.mxu0 %v4491
  %v6567 = vpop.f32.mrf.mxu0
  %v6568 = vadd.f32 %v6343, %v6567
  %v6569 = vpop.f32.mrf.mxu0
  %v6570 = vpop.f32.mrf.mxu0
  %v6571 = vadd.f32 %v6346, %v6570
  %v6572 = vpop.f32.mrf.mxu0
  %6573 = vmatprep.mubr.bf16.mxu0 %v4510
  %6574 = vmatmul.mubr.bf16.gmra.mxu0 %v4509
  %v6575 = vpop.f32.mrf.mxu0
  %v6576 = vadd.f32 %v6351, %v6575
  %v6577 = vpop.f32.mrf.mxu0
  %v6578 = vpop.f32.mrf.mxu0
  %v6579 = vadd.f32 %v6354, %v6578
  %v6580 = vpop.f32.mrf.mxu0
  %6581 = vmatprep.mubr.bf16.mxu0 %v4528
  %6582 = vmatmul.mubr.bf16.gmra.mxu0 %v4527
  %v6583 = vpop.f32.mrf.mxu0
  %v6584 = vadd.f32 %v6359, %v6583
  %v6585 = vpop.f32.mrf.mxu0
  %v6586 = vpop.f32.mrf.mxu0
  %v6587 = vadd.f32 %v6362, %v6586
  %v6588 = vpop.f32.mrf.mxu0
  %6589 = vmatprep.mubr.bf16.mxu0 %v4546
  %6590 = vmatmul.mubr.bf16.gmra.mxu0 %v4545
  %v6591 = vpop.f32.mrf.mxu0
  %v6592 = vadd.f32 %v6367, %v6591
  %v6593 = vpop.f32.mrf.mxu0
  %v6594 = vpop.f32.mrf.mxu0
  %v6595 = vadd.f32 %v6370, %v6594
  %v6596 = vpop.f32.mrf.mxu0
  %6597 = vmatprep.mubr.bf16.mxu0 %v4564
  %6598 = vmatmul.mubr.bf16.gmra.mxu0 %v4563
  %v6599 = vpop.f32.mrf.mxu0
  %v6600 = vadd.f32 %v6375, %v6599
  %v6601 = vpop.f32.mrf.mxu0
  %v6602 = vpop.f32.mrf.mxu0
  %v6603 = vadd.f32 %v6378, %v6602
  %v6604 = vpop.f32.mrf.mxu0
  %6605 = vmatprep.mubr.bf16.mxu0 %v4582
  %6606 = vmatmul.mubr.bf16.gmra.mxu0 %v4581
  %v6607 = vpop.f32.mrf.mxu0
  %v6608 = vadd.f32 %v6383, %v6607
  %v6609 = vpop.f32.mrf.mxu0
  %v6610 = vpop.f32.mrf.mxu0
  %v6611 = vadd.f32 %v6386, %v6610
  %v6612 = vpop.f32.mrf.mxu0
  %6613 = vmatprep.mubr.bf16.mxu0 %v4600
  %6614 = vmatmul.mubr.bf16.gmra.mxu0 %v4599
  %v6615 = vpop.f32.mrf.mxu0
  %v6616 = vadd.f32 %v6391, %v6615
  %v6617 = vpop.f32.mrf.mxu0
  %v6618 = vpop.f32.mrf.mxu0
  %v6619 = vadd.f32 %v6394, %v6618
  %v6620 = vpop.f32.mrf.mxu0
  %6621 = vmatprep.mubr.bf16.mxu0 %v4618
  %6622 = vmatmul.mubr.bf16.gmra.mxu0 %v4617
  %v6623 = vpop.f32.mrf.mxu0
  %v6624 = vadd.f32 %v6399, %v6623
  %v6625 = vpop.f32.mrf.mxu0
  %v6626 = vpop.f32.mrf.mxu0
  %v6627 = vadd.f32 %v6402, %v6626
  %v6628 = vpop.f32.mrf.mxu0
  %6629 = vdwg.mxu0
  %6630 = vmatprep.subr.bf16.mxu0 0
  %6631 = vmatpush1.bf16.msra.mxu0 %v2438
  %6632 = vmatprep.subr.bf16.mxu0 0
  %6633 = vmatpush1.bf16.msra.mxu0 %v2437
  %6634 = vmatprep.subr.bf16.mxu0 0
  %6635 = vmatpush1.bf16.msra.mxu0 %v2436
  %6636 = vmatprep.subr.bf16.mxu0 0
  %6637 = vmatpush1.bf16.msra.mxu0 %v2435
  %6638 = vmatprep.subr.bf16.mxu0 0
  %6639 = vmatpush1.bf16.msra.mxu0 %v2434
  %6640 = vmatprep.subr.bf16.mxu0 0
  %6641 = vmatpush1.bf16.msra.mxu0 %v2433
  %6642 = vmatprep.subr.bf16.mxu0 0
  %6643 = vmatpush1.bf16.msra.mxu0 %v2432
  %6644 = vmatprep.subr.bf16.mxu0 0
  %6645 = vmatpush1.bf16.msra.mxu0 %v2431
  %6646 = vmatprep.subr.bf16.mxu0 0
  %6647 = vmatpush2.bf16.msra.mxu0 %v2446
  %6648 = vmatprep.subr.bf16.mxu0 0
  %6649 = vmatpush2.bf16.msra.mxu0 %v2445
  %6650 = vmatprep.subr.bf16.mxu0 0
  %6651 = vmatpush2.bf16.msra.mxu0 %v2444
  %6652 = vmatprep.subr.bf16.mxu0 0
  %6653 = vmatpush2.bf16.msra.mxu0 %v2443
  %6654 = vmatprep.subr.bf16.mxu0 0
  %6655 = vmatpush2.bf16.msra.mxu0 %v2442
  %6656 = vmatprep.subr.bf16.mxu0 0
  %6657 = vmatpush2.bf16.msra.mxu0 %v2441
  %6658 = vmatprep.subr.bf16.mxu0 0
  %6659 = vmatpush2.bf16.msra.mxu0 %v2440
  %6660 = vmatprep.subr.bf16.mxu0 0
  %6661 = vmatpush2.bf16.msra.mxu0 %v2439
  %6662 = vmatprep.mubr.bf16.mxu0 %v4206
  %6663 = vmatmul.mubr.bf16.gmra.mxu0 %v4205
  %v6664 = vpop.f32.mrf.mxu0
  %v6665 = vadd.f32 %v6440, %v6664
  %v6666 = vpop.f32.mrf.mxu0
  %v6667 = vpop.f32.mrf.mxu0
  %v6668 = vadd.f32 %v6443, %v6667
  %v6669 = vpop.f32.mrf.mxu0
  %6670 = vmatprep.mubr.bf16.mxu0 %v4224
  %6671 = vmatmul.mubr.bf16.gmra.mxu0 %v4223
  %v6672 = vpop.f32.mrf.mxu0
  %v6673 = vadd.f32 %v6448, %v6672
  %v6674 = vpop.f32.mrf.mxu0
  %v6675 = vpop.f32.mrf.mxu0
  %v6676 = vadd.f32 %v6451, %v6675
  %v6677 = vpop.f32.mrf.mxu0
  %6678 = vmatprep.mubr.bf16.mxu0 %v4242
  %6679 = vmatmul.mubr.bf16.gmra.mxu0 %v4241
  %v6680 = vpop.f32.mrf.mxu0
  %v6681 = vadd.f32 %v6456, %v6680
  %v6682 = vpop.f32.mrf.mxu0
  %v6683 = vpop.f32.mrf.mxu0
  %v6684 = vadd.f32 %v6459, %v6683
  %v6685 = vpop.f32.mrf.mxu0
  %6686 = vmatprep.mubr.bf16.mxu0 %v4260
  %6687 = vmatmul.mubr.bf16.gmra.mxu0 %v4259
  %v6688 = vpop.f32.mrf.mxu0
  %v6689 = vadd.f32 %v6464, %v6688
  %v6690 = vpop.f32.mrf.mxu0
  %v6691 = vpop.f32.mrf.mxu0
  %v6692 = vadd.f32 %v6467, %v6691
  %v6693 = vpop.f32.mrf.mxu0
  %6694 = vmatprep.mubr.bf16.mxu0 %v4278
  %6695 = vmatmul.mubr.bf16.gmra.mxu0 %v4277
  %v6696 = vpop.f32.mrf.mxu0
  %v6697 = vadd.f32 %v6472, %v6696
  %v6698 = vpop.f32.mrf.mxu0
  %v6699 = vpop.f32.mrf.mxu0
  %v6700 = vadd.f32 %v6475, %v6699
  %v6701 = vpop.f32.mrf.mxu0
  %6702 = vmatprep.mubr.bf16.mxu0 %v4296
  %6703 = vmatmul.mubr.bf16.gmra.mxu0 %v4295
  %v6704 = vpop.f32.mrf.mxu0
  %v6705 = vadd.f32 %v6480, %v6704
  %v6706 = vpop.f32.mrf.mxu0
  %v6707 = vpop.f32.mrf.mxu0
  %v6708 = vadd.f32 %v6483, %v6707
  %v6709 = vpop.f32.mrf.mxu0
  %6710 = vmatprep.mubr.bf16.mxu0 %v4314
  %6711 = vmatmul.mubr.bf16.gmra.mxu0 %v4313
  %v6712 = vpop.f32.mrf.mxu0
  %v6713 = vadd.f32 %v6488, %v6712
  %v6714 = vpop.f32.mrf.mxu0
  %v6715 = vpop.f32.mrf.mxu0
  %v6716 = vadd.f32 %v6491, %v6715
  %v6717 = vpop.f32.mrf.mxu0
  %6718 = vmatprep.mubr.bf16.mxu0 %v4332
  %6719 = vmatmul.mubr.bf16.gmra.mxu0 %v4331
  %v6720 = vpop.f32.mrf.mxu0
  %v6721 = vadd.f32 %v6496, %v6720
  %v6722 = vpop.f32.mrf.mxu0
  %v6723 = vpop.f32.mrf.mxu0
  %v6724 = vadd.f32 %v6499, %v6723
  %v6725 = vpop.f32.mrf.mxu0
  %6726 = vmatprep.mubr.bf16.mxu0 %v4350
  %6727 = vmatmul.mubr.bf16.gmra.mxu0 %v4349
  %v6728 = vpop.f32.mrf.mxu0
  %v6729 = vadd.f32 %v6504, %v6728
  %v6730 = vpop.f32.mrf.mxu0
  %v6731 = vpop.f32.mrf.mxu0
  %v6732 = vadd.f32 %v6507, %v6731
  %v6733 = vpop.f32.mrf.mxu0
  %6734 = vmatprep.mubr.bf16.mxu0 %v4368
  %6735 = vmatmul.mubr.bf16.gmra.mxu0 %v4367
  %v6736 = vpop.f32.mrf.mxu0
  %v6737 = vadd.f32 %v6512, %v6736
  %v6738 = vpop.f32.mrf.mxu0
  %v6739 = vpop.f32.mrf.mxu0
  %v6740 = vadd.f32 %v6515, %v6739
  %v6741 = vpop.f32.mrf.mxu0
  %6742 = vmatprep.mubr.bf16.mxu0 %v4386
  %6743 = vmatmul.mubr.bf16.gmra.mxu0 %v4385
  %v6744 = vpop.f32.mrf.mxu0
  %v6745 = vadd.f32 %v6520, %v6744
  %v6746 = vpop.f32.mrf.mxu0
  %v6747 = vpop.f32.mrf.mxu0
  %v6748 = vadd.f32 %v6523, %v6747
  %v6749 = vpop.f32.mrf.mxu0
  %6750 = vmatprep.mubr.bf16.mxu0 %v4404
  %6751 = vmatmul.mubr.bf16.gmra.mxu0 %v4403
  %v6752 = vpop.f32.mrf.mxu0
  %v6753 = vadd.f32 %v6528, %v6752
  %v6754 = vpop.f32.mrf.mxu0
  %v6755 = vpop.f32.mrf.mxu0
  %v6756 = vadd.f32 %v6531, %v6755
  %v6757 = vpop.f32.mrf.mxu0
  %6758 = vmatprep.mubr.bf16.mxu0 %v4422
  %6759 = vmatmul.mubr.bf16.gmra.mxu0 %v4421
  %v6760 = vpop.f32.mrf.mxu0
  %v6761 = vadd.f32 %v6536, %v6760
  %v6762 = vpop.f32.mrf.mxu0
  %v6763 = vpop.f32.mrf.mxu0
  %v6764 = vadd.f32 %v6539, %v6763
  %v6765 = vpop.f32.mrf.mxu0
  %6766 = vmatprep.mubr.bf16.mxu0 %v4440
  %6767 = vmatmul.mubr.bf16.gmra.mxu0 %v4439
  %v6768 = vpop.f32.mrf.mxu0
  %v6769 = vadd.f32 %v6544, %v6768
  %v6770 = vpop.f32.mrf.mxu0
  %v6771 = vpop.f32.mrf.mxu0
  %v6772 = vadd.f32 %v6547, %v6771
  %v6773 = vpop.f32.mrf.mxu0
  %6774 = vmatprep.mubr.bf16.mxu0 %v4458
  %6775 = vmatmul.mubr.bf16.gmra.mxu0 %v4457
  %v6776 = vpop.f32.mrf.mxu0
  %v6777 = vadd.f32 %v6552, %v6776
  %v6778 = vpop.f32.mrf.mxu0
  %v6779 = vpop.f32.mrf.mxu0
  %v6780 = vadd.f32 %v6555, %v6779
  %v6781 = vpop.f32.mrf.mxu0
  %6782 = vmatprep.mubr.bf16.mxu0 %v4476
  %6783 = vmatmul.mubr.bf16.gmra.mxu0 %v4475
  %v6784 = vpop.f32.mrf.mxu0
  %v6785 = vadd.f32 %v6560, %v6784
  %v6786 = vpop.f32.mrf.mxu0
  %v6787 = vpop.f32.mrf.mxu0
  %v6788 = vadd.f32 %v6563, %v6787
  %v6789 = vpop.f32.mrf.mxu0
  %6790 = vmatprep.mubr.bf16.mxu0 %v4494
  %6791 = vmatmul.mubr.bf16.gmra.mxu0 %v4493
  %v6792 = vpop.f32.mrf.mxu0
  %v6793 = vadd.f32 %v6568, %v6792
  %v6794 = vpop.f32.mrf.mxu0
  %v6795 = vpop.f32.mrf.mxu0
  %v6796 = vadd.f32 %v6571, %v6795
  %v6797 = vpop.f32.mrf.mxu0
  %6798 = vmatprep.mubr.bf16.mxu0 %v4512
  %6799 = vmatmul.mubr.bf16.gmra.mxu0 %v4511
  %v6800 = vpop.f32.mrf.mxu0
  %v6801 = vadd.f32 %v6576, %v6800
  %v6802 = vpop.f32.mrf.mxu0
  %v6803 = vpop.f32.mrf.mxu0
  %v6804 = vadd.f32 %v6579, %v6803
  %v6805 = vpop.f32.mrf.mxu0
  %6806 = vmatprep.mubr.bf16.mxu0 %v4530
  %6807 = vmatmul.mubr.bf16.gmra.mxu0 %v4529
  %v6808 = vpop.f32.mrf.mxu0
  %v6809 = vadd.f32 %v6584, %v6808
  %v6810 = vpop.f32.mrf.mxu0
  %v6811 = vpop.f32.mrf.mxu0
  %v6812 = vadd.f32 %v6587, %v6811
  %v6813 = vpop.f32.mrf.mxu0
  %6814 = vmatprep.mubr.bf16.mxu0 %v4548
  %6815 = vmatmul.mubr.bf16.gmra.mxu0 %v4547
  %v6816 = vpop.f32.mrf.mxu0
  %v6817 = vadd.f32 %v6592, %v6816
  %v6818 = vpop.f32.mrf.mxu0
  %v6819 = vpop.f32.mrf.mxu0
  %v6820 = vadd.f32 %v6595, %v6819
  %v6821 = vpop.f32.mrf.mxu0
  %6822 = vmatprep.mubr.bf16.mxu0 %v4566
  %6823 = vmatmul.mubr.bf16.gmra.mxu0 %v4565
  %v6824 = vpop.f32.mrf.mxu0
  %v6825 = vadd.f32 %v6600, %v6824
  %v6826 = vpop.f32.mrf.mxu0
  %v6827 = vpop.f32.mrf.mxu0
  %v6828 = vadd.f32 %v6603, %v6827
  %v6829 = vpop.f32.mrf.mxu0
  %6830 = vmatprep.mubr.bf16.mxu0 %v4584
  %6831 = vmatmul.mubr.bf16.gmra.mxu0 %v4583
  %v6832 = vpop.f32.mrf.mxu0
  %v6833 = vadd.f32 %v6608, %v6832
  %v6834 = vpop.f32.mrf.mxu0
  %v6835 = vpop.f32.mrf.mxu0
  %v6836 = vadd.f32 %v6611, %v6835
  %v6837 = vpop.f32.mrf.mxu0
  %6838 = vmatprep.mubr.bf16.mxu0 %v4602
  %6839 = vmatmul.mubr.bf16.gmra.mxu0 %v4601
  %v6840 = vpop.f32.mrf.mxu0
  %v6841 = vadd.f32 %v6616, %v6840
  %v6842 = vpop.f32.mrf.mxu0
  %v6843 = vpop.f32.mrf.mxu0
  %v6844 = vadd.f32 %v6619, %v6843
  %v6845 = vpop.f32.mrf.mxu0
  %6846 = vmatprep.mubr.bf16.mxu0 %v4620
  %6847 = vmatmul.mubr.bf16.gmra.mxu0 %v4619
  %v6848 = vpop.f32.mrf.mxu0
  %v6849 = vadd.f32 %v6624, %v6848
  %v6850 = vpop.f32.mrf.mxu0
  %v6851 = vpop.f32.mrf.mxu0
  %v6852 = vadd.f32 %v6627, %v6851
  %v6853 = vpop.f32.mrf.mxu0
  %6854 = vdwg.mxu0
  %6855 = vmatprep.subr.bf16.mxu0 0
  %6856 = vmatpush1.bf16.msra.mxu0 %v2454
  %6857 = vmatprep.subr.bf16.mxu0 0
  %6858 = vmatpush1.bf16.msra.mxu0 %v2453
  %6859 = vmatprep.subr.bf16.mxu0 0
  %6860 = vmatpush1.bf16.msra.mxu0 %v2452
  %6861 = vmatprep.subr.bf16.mxu0 0
  %6862 = vmatpush1.bf16.msra.mxu0 %v2451
  %6863 = vmatprep.subr.bf16.mxu0 0
  %6864 = vmatpush1.bf16.msra.mxu0 %v2450
  %6865 = vmatprep.subr.bf16.mxu0 0
  %6866 = vmatpush1.bf16.msra.mxu0 %v2449
  %6867 = vmatprep.subr.bf16.mxu0 0
  %6868 = vmatpush1.bf16.msra.mxu0 %v2448
  %6869 = vmatprep.subr.bf16.mxu0 0
  %6870 = vmatpush1.bf16.msra.mxu0 %v2447
  %6871 = vmatprep.subr.bf16.mxu0 0
  %6872 = vmatpush2.bf16.msra.mxu0 %v2462
  %6873 = vmatprep.subr.bf16.mxu0 0
  %6874 = vmatpush2.bf16.msra.mxu0 %v2461
  %6875 = vmatprep.subr.bf16.mxu0 0
  %6876 = vmatpush2.bf16.msra.mxu0 %v2460
  %6877 = vmatprep.subr.bf16.mxu0 0
  %6878 = vmatpush2.bf16.msra.mxu0 %v2459
  %6879 = vmatprep.subr.bf16.mxu0 0
  %6880 = vmatpush2.bf16.msra.mxu0 %v2458
  %6881 = vmatprep.subr.bf16.mxu0 0
  %6882 = vmatpush2.bf16.msra.mxu0 %v2457
  %6883 = vmatprep.subr.bf16.mxu0 0
  %6884 = vmatpush2.bf16.msra.mxu0 %v2456
  %6885 = vmatprep.subr.bf16.mxu0 0
  %6886 = vmatpush2.bf16.msra.mxu0 %v2455
  %6887 = vmatprep.mubr.bf16.mxu0 %v4208
  %6888 = vmatmul.mubr.bf16.gmra.mxu0 %v4207
  %v6889 = vpop.f32.mrf.mxu0
  %v6890 = vadd.f32 %v6665, %v6889
  %v6891 = vpop.f32.mrf.mxu0
  %v6892 = vpop.f32.mrf.mxu0
  %v6893 = vadd.f32 %v6668, %v6892
  %v6894 = vpop.f32.mrf.mxu0
  %6895 = vmatprep.mubr.bf16.mxu0 %v4226
  %6896 = vmatmul.mubr.bf16.gmra.mxu0 %v4225
  %v6897 = vpop.f32.mrf.mxu0
  %v6898 = vadd.f32 %v6673, %v6897
  %v6899 = vpop.f32.mrf.mxu0
  %v6900 = vpop.f32.mrf.mxu0
  %v6901 = vadd.f32 %v6676, %v6900
  %v6902 = vpop.f32.mrf.mxu0
  %6903 = vmatprep.mubr.bf16.mxu0 %v4244
  %6904 = vmatmul.mubr.bf16.gmra.mxu0 %v4243
  %v6905 = vpop.f32.mrf.mxu0
  %v6906 = vadd.f32 %v6681, %v6905
  %v6907 = vpop.f32.mrf.mxu0
  %v6908 = vpop.f32.mrf.mxu0
  %v6909 = vadd.f32 %v6684, %v6908
  %v6910 = vpop.f32.mrf.mxu0
  %6911 = vmatprep.mubr.bf16.mxu0 %v4262
  %6912 = vmatmul.mubr.bf16.gmra.mxu0 %v4261
  %v6913 = vpop.f32.mrf.mxu0
  %v6914 = vadd.f32 %v6689, %v6913
  %v6915 = vpop.f32.mrf.mxu0
  %v6916 = vpop.f32.mrf.mxu0
  %v6917 = vadd.f32 %v6692, %v6916
  %v6918 = vpop.f32.mrf.mxu0
  %6919 = vmatprep.mubr.bf16.mxu0 %v4280
  %6920 = vmatmul.mubr.bf16.gmra.mxu0 %v4279
  %v6921 = vpop.f32.mrf.mxu0
  %v6922 = vadd.f32 %v6697, %v6921
  %v6923 = vpop.f32.mrf.mxu0
  %v6924 = vpop.f32.mrf.mxu0
  %v6925 = vadd.f32 %v6700, %v6924
  %v6926 = vpop.f32.mrf.mxu0
  %6927 = vmatprep.mubr.bf16.mxu0 %v4298
  %6928 = vmatmul.mubr.bf16.gmra.mxu0 %v4297
  %v6929 = vpop.f32.mrf.mxu0
  %v6930 = vadd.f32 %v6705, %v6929
  %v6931 = vpop.f32.mrf.mxu0
  %v6932 = vpop.f32.mrf.mxu0
  %v6933 = vadd.f32 %v6708, %v6932
  %v6934 = vpop.f32.mrf.mxu0
  %6935 = vmatprep.mubr.bf16.mxu0 %v4316
  %6936 = vmatmul.mubr.bf16.gmra.mxu0 %v4315
  %v6937 = vpop.f32.mrf.mxu0
  %v6938 = vadd.f32 %v6713, %v6937
  %v6939 = vpop.f32.mrf.mxu0
  %v6940 = vpop.f32.mrf.mxu0
  %v6941 = vadd.f32 %v6716, %v6940
  %v6942 = vpop.f32.mrf.mxu0
  %6943 = vmatprep.mubr.bf16.mxu0 %v4334
  %6944 = vmatmul.mubr.bf16.gmra.mxu0 %v4333
  %v6945 = vpop.f32.mrf.mxu0
  %v6946 = vadd.f32 %v6721, %v6945
  %v6947 = vpop.f32.mrf.mxu0
  %v6948 = vpop.f32.mrf.mxu0
  %v6949 = vadd.f32 %v6724, %v6948
  %v6950 = vpop.f32.mrf.mxu0
  %6951 = vmatprep.mubr.bf16.mxu0 %v4352
  %6952 = vmatmul.mubr.bf16.gmra.mxu0 %v4351
  %v6953 = vpop.f32.mrf.mxu0
  %v6954 = vadd.f32 %v6729, %v6953
  %v6955 = vpop.f32.mrf.mxu0
  %v6956 = vpop.f32.mrf.mxu0
  %v6957 = vadd.f32 %v6732, %v6956
  %v6958 = vpop.f32.mrf.mxu0
  %6959 = vmatprep.mubr.bf16.mxu0 %v4370
  %6960 = vmatmul.mubr.bf16.gmra.mxu0 %v4369
  %v6961 = vpop.f32.mrf.mxu0
  %v6962 = vadd.f32 %v6737, %v6961
  %v6963 = vpop.f32.mrf.mxu0
  %v6964 = vpop.f32.mrf.mxu0
  %v6965 = vadd.f32 %v6740, %v6964
  %v6966 = vpop.f32.mrf.mxu0
  %6967 = vmatprep.mubr.bf16.mxu0 %v4388
  %6968 = vmatmul.mubr.bf16.gmra.mxu0 %v4387
  %v6969 = vpop.f32.mrf.mxu0
  %v6970 = vadd.f32 %v6745, %v6969
  %v6971 = vpop.f32.mrf.mxu0
  %v6972 = vpop.f32.mrf.mxu0
  %v6973 = vadd.f32 %v6748, %v6972
  %v6974 = vpop.f32.mrf.mxu0
  %6975 = vmatprep.mubr.bf16.mxu0 %v4406
  %6976 = vmatmul.mubr.bf16.gmra.mxu0 %v4405
  %v6977 = vpop.f32.mrf.mxu0
  %v6978 = vadd.f32 %v6753, %v6977
  %v6979 = vpop.f32.mrf.mxu0
  %v6980 = vpop.f32.mrf.mxu0
  %v6981 = vadd.f32 %v6756, %v6980
  %v6982 = vpop.f32.mrf.mxu0
  %6983 = vmatprep.mubr.bf16.mxu0 %v4424
  %6984 = vmatmul.mubr.bf16.gmra.mxu0 %v4423
  %v6985 = vpop.f32.mrf.mxu0
  %v6986 = vadd.f32 %v6761, %v6985
  %v6987 = vpop.f32.mrf.mxu0
  %v6988 = vpop.f32.mrf.mxu0
  %v6989 = vadd.f32 %v6764, %v6988
  %v6990 = vpop.f32.mrf.mxu0
  %6991 = vmatprep.mubr.bf16.mxu0 %v4442
  %6992 = vmatmul.mubr.bf16.gmra.mxu0 %v4441
  %v6993 = vpop.f32.mrf.mxu0
  %v6994 = vadd.f32 %v6769, %v6993
  %v6995 = vpop.f32.mrf.mxu0
  %v6996 = vpop.f32.mrf.mxu0
  %v6997 = vadd.f32 %v6772, %v6996
  %v6998 = vpop.f32.mrf.mxu0
  %6999 = vmatprep.mubr.bf16.mxu0 %v4460
  %7000 = vmatmul.mubr.bf16.gmra.mxu0 %v4459
  %v7001 = vpop.f32.mrf.mxu0
  %v7002 = vadd.f32 %v6777, %v7001
  %v7003 = vpop.f32.mrf.mxu0
  %v7004 = vpop.f32.mrf.mxu0
  %v7005 = vadd.f32 %v6780, %v7004
  %v7006 = vpop.f32.mrf.mxu0
  %7007 = vmatprep.mubr.bf16.mxu0 %v4478
  %7008 = vmatmul.mubr.bf16.gmra.mxu0 %v4477
  %v7009 = vpop.f32.mrf.mxu0
  %v7010 = vadd.f32 %v6785, %v7009
  %v7011 = vpop.f32.mrf.mxu0
  %v7012 = vpop.f32.mrf.mxu0
  %v7013 = vadd.f32 %v6788, %v7012
  %v7014 = vpop.f32.mrf.mxu0
  %7015 = vmatprep.mubr.bf16.mxu0 %v4496
  %7016 = vmatmul.mubr.bf16.gmra.mxu0 %v4495
  %v7017 = vpop.f32.mrf.mxu0
  %v7018 = vadd.f32 %v6793, %v7017
  %v7019 = vpop.f32.mrf.mxu0
  %v7020 = vpop.f32.mrf.mxu0
  %v7021 = vadd.f32 %v6796, %v7020
  %v7022 = vpop.f32.mrf.mxu0
  %7023 = vmatprep.mubr.bf16.mxu0 %v4514
  %7024 = vmatmul.mubr.bf16.gmra.mxu0 %v4513
  %v7025 = vpop.f32.mrf.mxu0
  %v7026 = vadd.f32 %v6801, %v7025
  %v7027 = vpop.f32.mrf.mxu0
  %v7028 = vpop.f32.mrf.mxu0
  %v7029 = vadd.f32 %v6804, %v7028
  %v7030 = vpop.f32.mrf.mxu0
  %7031 = vmatprep.mubr.bf16.mxu0 %v4532
  %7032 = vmatmul.mubr.bf16.gmra.mxu0 %v4531
  %v7033 = vpop.f32.mrf.mxu0
  %v7034 = vadd.f32 %v6809, %v7033
  %v7035 = vpop.f32.mrf.mxu0
  %v7036 = vpop.f32.mrf.mxu0
  %v7037 = vadd.f32 %v6812, %v7036
  %v7038 = vpop.f32.mrf.mxu0
  %7039 = vmatprep.mubr.bf16.mxu0 %v4550
  %7040 = vmatmul.mubr.bf16.gmra.mxu0 %v4549
  %v7041 = vpop.f32.mrf.mxu0
  %v7042 = vadd.f32 %v6817, %v7041
  %v7043 = vpop.f32.mrf.mxu0
  %v7044 = vpop.f32.mrf.mxu0
  %v7045 = vadd.f32 %v6820, %v7044
  %v7046 = vpop.f32.mrf.mxu0
  %7047 = vmatprep.mubr.bf16.mxu0 %v4568
  %7048 = vmatmul.mubr.bf16.gmra.mxu0 %v4567
  %v7049 = vpop.f32.mrf.mxu0
  %v7050 = vadd.f32 %v6825, %v7049
  %v7051 = vpop.f32.mrf.mxu0
  %v7052 = vpop.f32.mrf.mxu0
  %v7053 = vadd.f32 %v6828, %v7052
  %v7054 = vpop.f32.mrf.mxu0
  %7055 = vmatprep.mubr.bf16.mxu0 %v4586
  %7056 = vmatmul.mubr.bf16.gmra.mxu0 %v4585
  %v7057 = vpop.f32.mrf.mxu0
  %v7058 = vadd.f32 %v6833, %v7057
  %v7059 = vpop.f32.mrf.mxu0
  %v7060 = vpop.f32.mrf.mxu0
  %v7061 = vadd.f32 %v6836, %v7060
  %v7062 = vpop.f32.mrf.mxu0
  %7063 = vmatprep.mubr.bf16.mxu0 %v4604
  %7064 = vmatmul.mubr.bf16.gmra.mxu0 %v4603
  %v7065 = vpop.f32.mrf.mxu0
  %v7066 = vadd.f32 %v6841, %v7065
  %v7067 = vpop.f32.mrf.mxu0
  %v7068 = vpop.f32.mrf.mxu0
  %v7069 = vadd.f32 %v6844, %v7068
  %v7070 = vpop.f32.mrf.mxu0
  %7071 = vmatprep.mubr.bf16.mxu0 %v4622
  %7072 = vmatmul.mubr.bf16.gmra.mxu0 %v4621
  %v7073 = vpop.f32.mrf.mxu0
  %v7074 = vadd.f32 %v6849, %v7073
  %v7075 = vpop.f32.mrf.mxu0
  %v7076 = vpop.f32.mrf.mxu0
  %v7077 = vadd.f32 %v6852, %v7076
  %v7078 = vpop.f32.mrf.mxu0
  %7079 = vdwg.mxu0
  %vm7080 = vcmask 400384
  %7081 = vst.msk [vmem:[%s3] sm:$0xff] %vm7080, %v6890
  %7082 = vst.msk [vmem:[%s3 + $0x8] sm:$0xff] %vm7080, %v6893
  %7083 = vst.msk [vmem:[%s3 + $0x10] sm:$0xff] %vm7080, %v6898
  %7084 = vst.msk [vmem:[%s3 + $0x18] sm:$0xff] %vm7080, %v6901
  %7085 = vst.msk [vmem:[%s3 + $0x20] sm:$0xff] %vm7080, %v6906
  %7086 = vst.msk [vmem:[%s3 + $0x28] sm:$0xff] %vm7080, %v6909
  %7087 = vst.msk [vmem:[%s3 + $0x30] sm:$0xff] %vm7080, %v6914
  %7088 = vst.msk [vmem:[%s3 + $0x38] sm:$0xff] %vm7080, %v6917
  %7089 = vst.msk [vmem:[%s3 + $0x40] sm:$0xff] %vm7080, %v6922
  %7090 = vst.msk [vmem:[%s3 + $0x48] sm:$0xff] %vm7080, %v6925
  %7091 = vst.msk [vmem:[%s3 + $0x50] sm:$0xff] %vm7080, %v6930
  %7092 = vst.msk [vmem:[%s3 + $0x58] sm:$0xff] %vm7080, %v6933
  %7093 = vst.msk [vmem:[%s3 + $0x60] sm:$0xff] %vm7080, %v6938
  %7094 = vst.msk [vmem:[%s3 + $0x68] sm:$0xff] %vm7080, %v6941
  %7095 = vst.msk [vmem:[%s3 + $0x70] sm:$0xff] %vm7080, %v6946
  %7096 = vst.msk [vmem:[%s3 + $0x78] sm:$0xff] %vm7080, %v6949
  %7097 = vst.msk [vmem:[%s3 + $0x80] sm:$0xff] %vm7080, %v6954
  %7098 = vst.msk [vmem:[%s3 + $0x88] sm:$0xff] %vm7080, %v6957
  %7099 = vst.msk [vmem:[%s3 + $0x90] sm:$0xff] %vm7080, %v6962
  %7100 = vst.msk [vmem:[%s3 + $0x98] sm:$0xff] %vm7080, %v6965
  %7101 = vst.msk [vmem:[%s3 + $0xa0] sm:$0xff] %vm7080, %v6970
  %7102 = vst.msk [vmem:[%s3 + $0xa8] sm:$0xff] %vm7080, %v6973
  %7103 = vst.msk [vmem:[%s3 + $0xb0] sm:$0xff] %vm7080, %v6978
  %7104 = vst.msk [vmem:[%s3 + $0xb8] sm:$0xff] %vm7080, %v6981
  %7105 = vst.msk [vmem:[%s3 + $0xc0] sm:$0xff] %vm7080, %v6986
  %7106 = vst.msk [vmem:[%s3 + $0xc8] sm:$0xff] %vm7080, %v6989
  %7107 = vst.msk [vmem:[%s3 + $0xd0] sm:$0xff] %vm7080, %v6994
  %7108 = vst.msk [vmem:[%s3 + $0xd8] sm:$0xff] %vm7080, %v6997
  %7109 = vst.msk [vmem:[%s3 + $0xe0] sm:$0xff] %vm7080, %v7002
  %7110 = vst.msk [vmem:[%s3 + $0xe8] sm:$0xff] %vm7080, %v7005
  %7111 = vst.msk [vmem:[%s3 + $0xf0] sm:$0xff] %vm7080, %v7010
  %7112 = vst.msk [vmem:[%s3 + $0xf8] sm:$0xff] %vm7080, %v7013
  %7113 = vst.msk [vmem:[%s3 + $0x100] sm:$0xff] %vm7080, %v7018
  %7114 = vst.msk [vmem:[%s3 + $0x108] sm:$0xff] %vm7080, %v7021
  %7115 = vst.msk [vmem:[%s3 + $0x110] sm:$0xff] %vm7080, %v7026
  %7116 = vst.msk [vmem:[%s3 + $0x118] sm:$0xff] %vm7080, %v7029
  %7117 = vst.msk [vmem:[%s3 + $0x120] sm:$0xff] %vm7080, %v7034
  %7118 = vst.msk [vmem:[%s3 + $0x128] sm:$0xff] %vm7080, %v7037
  %7119 = vst.msk [vmem:[%s3 + $0x130] sm:$0xff] %vm7080, %v7042
  %7120 = vst.msk [vmem:[%s3 + $0x138] sm:$0xff] %vm7080, %v7045
  %7121 = vst.msk [vmem:[%s3 + $0x140] sm:$0xff] %vm7080, %v7050
  %7122 = vst.msk [vmem:[%s3 + $0x148] sm:$0xff] %vm7080, %v7053
  %7123 = vst.msk [vmem:[%s3 + $0x150] sm:$0xff] %vm7080, %v7058
  %7124 = vst.msk [vmem:[%s3 + $0x158] sm:$0xff] %vm7080, %v7061
  %7125 = vst.msk [vmem:[%s3 + $0x160] sm:$0xff] %vm7080, %v7066
  %7126 = vst.msk [vmem:[%s3 + $0x168] sm:$0xff] %vm7080, %v7069
  %7127 = vst.msk [vmem:[%s3 + $0x170] sm:$0xff] %vm7080, %v7074
  %7128 = vst.msk [vmem:[%s3 + $0x178] sm:$0xff] %vm7080, %v7077
  // Predicated region
  $region14: #{mul_conv1x1.1} parent=0 // pred_check
    _
  $region15: #{mul_conv1x1.1} parent=0 // pred_check_branch
    %7130 = sbr.rel (0) target = $region17
  $region16: #{mul_conv1x1.1} parent=0 // pred_region
    _
  $region17: #{mul_conv1x1.1} parent=0 // pred_fallthru
    _
  // Predicated region
  $region18: #{mul_conv1x1.1} parent=0 // pred_check
    _
  $region19: #{mul_conv1x1.1} parent=0 // pred_check_branch
    %7132 = sbr.rel (0) target = $region21
  $region20: #{mul_conv1x1.1} parent=0 // pred_region
    _
  $region21: #{mul_conv1x1.1} parent=0 // pred_fallthru
    _

</llo_original>
